<compile_context>
chip_gen: v7x
topology: tpu7x:2x2x1
jax: 0.10.0
libtpu: 0.0.40
codegen_flags: <defaults>
</compile_context>

<pallas_src>
import functools

import jax
import jax.numpy as jnp
from jax.experimental import pallas as pl
from jax.experimental.pallas import tpu as pltpu

EPS = 1e-5          # nn.BatchNorm2d default eps
CP = 128            # lane-padded channel width used for all activation slabs


def _vmem_limit_bytes():
    """Generation-aware VMEM budget: ~100 MiB on v5e/v6e, ~48 MiB on v7x."""
    cap = 64 << 20
    try:
        cap = int(pltpu.get_tpu_info().vmem_capacity_bytes)
    except Exception:
        pass
    return int(min(max(cap - (16 << 20), 32 << 20), 100 << 20))


VMEM_LIMIT_BYTES = _vmem_limit_bytes()


def _round_up(x, m):
    return (x + m - 1) // m * m


def _pad_last(a, target):
    pad = target - a.shape[-1]
    if pad > 0:
        a = jnp.pad(a, [(0, 0)] * (a.ndim - 1) + [(0, pad)])
    return a


def _pick_tm(r):
    """Rows per matmul tile: aim for >=512 rows (amortise MXU fill + per-step
    overhead) while keeping a few grid steps when r is large."""
    for tm in (512, 1024, 2048, 256, 128, 64, 32, 16, 8):
        if r % tm == 0:
            return tm
    return r           # full extent (allowed: block == array dim)


# ----------------------------------------------------------------------------
# Pallas kernels
# ----------------------------------------------------------------------------
def _conv_kernel(p_ref, w_ref, b_ref, *out_refs, relu, with_stats):
    """One packed-patch matmul:  y = patches @ W + b  (+ optional ReLU).

    p_ref : (TM, L)   bf16  im2col patches, lanes = (ky, kx, cin) zero-padded
    w_ref : (L, CP)   bf16  packed weights (zero rows/cols on padding)
    b_ref : (1, CP)   f32   bias row
    out_refs[0]        : (TM, CP) bf16  y (or relu(y))
    out_refs[1] (opt)  : (8, CP)  f32   per-tile BN partials (row0=sum, row1=sumsq)
    """
    y = jnp.dot(p_ref[...], w_ref[...], preferred_element_type=jnp.float32)
    y = y + b_ref[...]

    if with_stats:
        stats_ref = out_refs[1]
        s = jnp.sum(y, axis=0, keepdims=True)
        sq = jnp.sum(y * y, axis=0, keepdims=True)
        stats_ref[...] = jnp.concatenate(
            [s, sq, jnp.zeros((6, y.shape[-1]), jnp.float32)], axis=0)

    if relu:
        y = jnp.maximum(y, 0.0)
    out_refs[0][...] = y.astype(out_refs[0].dtype)


def _gate_kernel(*refs, with_residual, emit_mask):
    """conv2[i][1:] + gating, with the previous layer's BN fused as prologue.

    inputs : patches (TM,L) bf16, w (L,CP) bf16 (1 col broadcast to all lanes),
             bias (1,CP) f32, y_prev (TM,CP) bf16, scale/shift (1,CP) f32,
             [res (TM,CP) bf16]
    outputs: u  = x1 * (1 + sigmoid(conv(patches)))     (TM,CP) bf16
             x1 = relu(y_prev*scale + shift [+ res])    (TM,CP) bf16
             [m = sigmoid(...) broadcast over lanes     (TM,CP) bf16]
    """
    idx = 0
    p_ref = refs[idx]; idx += 1
    w_ref = refs[idx]; idx += 1
    b_ref = refs[idx]; idx += 1
    y_ref = refs[idx]; idx += 1
    sc_ref = refs[idx]; idx += 1
    sh_ref = refs[idx]; idx += 1
    res_ref = None
    if with_residual:
        res_ref = refs[idx]; idx += 1
    u_ref = refs[idx]; idx += 1
    x1_ref = refs[idx]; idx += 1
    m_ref = refs[idx] if emit_mask else None

    # Fused BN-apply (+ residual) + ReLU of the previous conv's raw output.
    x1 = y_ref[...].astype(jnp.float32) * sc_ref[...] + sh_ref[...]
    if res_ref is not None:
        x1 = x1 + res_ref[...].astype(jnp.float32)
    x1 = jnp.maximum(x1, 0.0)

    # 5x5 conv to a single channel, broadcast over all 128 lanes -> gating is
    # a pure lane-wise multiply.
    logit = jnp.dot(p_ref[...], w_ref[...], preferred_element_type=jnp.float32)
    m = jax.nn.sigmoid(logit + b_ref[...])

    u_ref[...] = (x1 * (1.0 + m)).astype(u_ref.dtype)
    x1_ref[...] = x1.astype(x1_ref.dtype)
    if m_ref is not None:
        m_ref[...] = m.astype(m_ref.dtype)


# ----------------------------------------------------------------------------
# pallas_call wrappers
# ----------------------------------------------------------------------------
def _conv(patches, w_packed, b_row, *, relu=False, with_stats=True,
          real_cin_kk, real_cout):
    R, L = patches.shape
    TM = _pick_tm(R)
    T = R // TM

    in_specs = [
        pl.BlockSpec((TM, L), lambda i: (i, 0)),
        pl.BlockSpec((L, CP), lambda i: (0, 0)),     # grid-invariant weights
        pl.BlockSpec((1, CP), lambda i: (0, 0)),
    ]
    out_specs = [pl.BlockSpec((TM, CP), lambda i: (i, 0))]
    out_shapes = [jax.ShapeDtypeStruct((R, CP), jnp.bfloat16)]
    if with_stats:
        out_specs.append(pl.BlockSpec((None, 8, CP), lambda i: (i, 0, 0)))
        out_shapes.append(jax.ShapeDtypeStruct((T, 8, CP), jnp.float32))

    bytes_accessed = int(patches.size * 2 + w_packed.size * 2 + CP * 4
                         + R * CP * 2
                         + (T * 8 * CP * 4 if with_stats else 0))
    cost = pl.CostEstimate(flops=2 * R * real_cin_kk * real_cout,
                           transcendentals=0,
                           bytes_accessed=bytes_accessed)

    outs = pl.pallas_call(
        functools.partial(_conv_kernel, relu=relu, with_stats=with_stats),
        grid=(T,),
        in_specs=in_specs,
        out_specs=out_specs,
        out_shape=out_shapes,
        compiler_params=pltpu.CompilerParams(
            dimension_semantics=("parallel",),
            vmem_limit_bytes=VMEM_LIMIT_BYTES),
        cost_estimate=cost,
    )(patches, w_packed, b_row)
    if not isinstance(outs, (list, tuple)):
        outs = (outs,)
    return tuple(outs)


def _gate(patches, w_packed, b_row, y_prev, scale, shift, res, *, emit_mask,
          real_cin_kk):
    R, L = patches.shape
    TM = _pick_tm(R)
    T = R // TM
    with_residual = res is not None

    row_spec = pl.BlockSpec((TM, CP), lambda i: (i, 0))
    vec_spec = pl.BlockSpec((1, CP), lambda i: (0, 0))
    in_specs = [pl.BlockSpec((TM, L), lambda i: (i, 0)),
                pl.BlockSpec((L, CP), lambda i: (0, 0)),
                vec_spec, row_spec, vec_spec, vec_spec]
    args = [patches, w_packed, b_row, y_prev, scale, shift]
    if with_residual:
        in_specs.append(row_spec)
        args.append(res)

    out_specs = [row_spec, row_spec]
    out_shapes = [jax.ShapeDtypeStruct((R, CP), jnp.bfloat16),
                  jax.ShapeDtypeStruct((R, CP), jnp.bfloat16)]
    if emit_mask:
        out_specs.append(row_spec)
        out_shapes.append(jax.ShapeDtypeStruct((R, CP), jnp.bfloat16))

    row_reads = 1 + (1 if with_residual else 0)
    bytes_accessed = int(patches.size * 2 + w_packed.size * 2 + 3 * CP * 4
                         + row_reads * R * CP * 2
                         + len(out_shapes) * R * CP * 2)
    cost = pl.CostEstimate(flops=2 * R * real_cin_kk + 8 * R * CP,
                           transcendentals=R * CP,
                           bytes_accessed=bytes_accessed)

    outs = pl.pallas_call(
        functools.partial(_gate_kernel, with_residual=with_residual,
                          emit_mask=emit_mask),
        grid=(T,),
        in_specs=in_specs,
        out_specs=out_specs,
        out_shape=out_shapes,
        compiler_params=pltpu.CompilerParams(
            dimension_semantics=("parallel",),
            vmem_limit_bytes=VMEM_LIMIT_BYTES),
        cost_estimate=cost,
    )(*args)
    if not isinstance(outs, (list, tuple)):
        outs = (outs,)
    return tuple(outs)


# ----------------------------------------------------------------------------
# Layout glue (pure element gathers / tiny reductions, fused by XLA)
# ----------------------------------------------------------------------------
def _im2col(x_nhwc, K):
    """(N,H,W,Cin) -> (N*H*W, round_up(K*K*Cin,128)) bf16 patch slab.

    Lane order is (ky, kx, cin) to match `_pack_w`; padded lanes are zero."""
    N, H, W, Cin = x_nhwc.shape
    p = K // 2
    xp = jnp.pad(x_nhwc, ((0, 0), (p, p), (p, p), (0, 0)))
    cols = [xp[:, dy:dy + H, dx:dx + W, :]
            for dy in range(K) for dx in range(K)]
    pat = jnp.concatenate(cols, axis=-1).reshape(N * H * W, K * K * Cin)
    L = _round_up(K * K * Cin, CP)
    return _pad_last(pat, L).astype(jnp.bfloat16)


def _bn_scale_shift(stats, gamma_row, beta_row, count):
    """Finish training-mode BN from per-tile partial sums (biased variance).

    NOTE: E[x^2]-E[x]^2 in f32; adequate here, see header caveat."""
    ssum = jnp.sum(stats[:, 0, :], axis=0, keepdims=True)
    ssq = jnp.sum(stats[:, 1, :], axis=0, keepdims=True)
    mean = ssum / count
    var = jnp.maximum(ssq / count - mean * mean, 0.0)
    scale = gamma_row * jax.lax.rsqrt(var + EPS)
    shift = beta_row - mean * scale
    return scale, shift


def _x1_channels(y_slab, scale, shift, res_slab, lo, hi):
    """relu(bn(y) [+ res]) for channel range [lo, hi); (R, hi-lo) f32."""
    v = y_slab[:, lo:hi].astype(jnp.float32) * scale[0, lo:hi] + shift[0, lo:hi]
    if res_slab is not None:
        v = v + res_slab[:, lo:hi].astype(jnp.float32)
    return jnp.maximum(v, 0.0)


def _upsample_bilinear_x2(x):
    """nn.Upsample(scale_factor=2, mode='bilinear', align_corners=False), NHWC."""
    def up_axis(a, axis):
        n = a.shape[axis]
        idx = jnp.arange(n)
        lo = jnp.take(a, jnp.clip(idx - 1, 0, n - 1), axis=axis)
        hi = jnp.take(a, jnp.clip(idx + 1, 0, n - 1), axis=axis)
        even = 0.75 * a + 0.25 * lo
        odd = 0.75 * a + 0.25 * hi
        out = jnp.stack([even, odd], axis=axis + 1)
        new_shape = list(a.shape)
        new_shape[axis] = 2 * n
        return out.reshape(new_shape)
    return up_axis(up_axis(x, 1), 2)


# ----------------------------------------------------------------------------
# Parameter packing: PyTorch conv weights -> (Cin*K*K, 128) bf16 tap matrices
# ----------------------------------------------------------------------------
def _pack_w(w, broadcast_out=False):
    """(Cout, Cin, K, K) -> (round_up(K*K*Cin,128), CP) bf16.

    Row order is (ky, kx, cin) to match `_im2col`; with broadcast_out the
    single output column is replicated across all 128 lanes (for conv2b)."""
    cout, cin, K, _ = w.shape
    rows = K * K * cin
    wt = jnp.transpose(w, (2, 3, 1, 0)).reshape(rows, cout)
    L = _round_up(rows, CP)
    full = jnp.zeros((L, CP), jnp.float32)
    if broadcast_out:
        assert cout == 1
        full = full.at[:rows, :].set(jnp.broadcast_to(wt, (rows, CP)))
    else:
        full = full.at[:rows, :cout].set(wt)
    return full.astype(jnp.bfloat16)


def _bias_row(b, broadcast_out=False):
    if broadcast_out:
        return jnp.broadcast_to(b.reshape(1, 1), (1, CP)).astype(jnp.float32)
    return _pad_last(b.reshape(1, -1).astype(jnp.float32), CP)


def init_params(key, in_channels, out_channels, blocks, concat=True):
    C = out_channels
    keys = iter(jax.random.split(key, 4 + 6 * blocks))

    def conv_wb(cout, cin, K):
        fan_in = cin * K * K
        bound = 1.0 / (fan_in ** 0.5)
        w = jax.random.uniform(next(keys), (cout, cin, K, K), jnp.float32,
                               -bound, bound)
        b = jax.random.uniform(next(keys), (cout,), jnp.float32, -bound, bound)
        return w, b

    ones_row = _pad_last(jnp.ones((1, C), jnp.float32), CP)
    zeros_row = jnp.zeros((1, CP), jnp.float32)

    p = {}
    w, b = conv_wb(C, in_channels, 3)                     # up_conv's conv3x3
    p["w_up"], p["b_up"] = _pack_w(w), _bias_row(b)
    p["g0"], p["be0"] = ones_row, zeros_row

    conv1_in = 2 * C if concat else C
    w, b = conv_wb(C, conv1_in, 3)                        # conv1
    p["w1"], p["b1"] = _pack_w(w), _bias_row(b)
    p["g1"], p["be1"] = ones_row, zeros_row

    for name in ("w2a", "b2a", "w2b", "b2b", "w3", "b3", "g3", "be3"):
        p[name] = []
    for _ in range(blocks):
        w, b = conv_wb(C // 4, C // 2 + 1, 5)             # conv2[i][0]
        p["w2a"].append(_pack_w(w)); p["b2a"].append(_bias_row(b))
        w, b = conv_wb(1, C // 4, 5)                      # conv2[i][2]
        p["w2b"].append(_pack_w(w, broadcast_out=True))
        p["b2b"].append(_bias_row(b, broadcast_out=True))
        w, b = conv_wb(C, C // 2, 3)                      # conv3[i]
        p["w3"].append(_pack_w(w)); p["b3"].append(_bias_row(b))
        p["g3"].append(ones_row); p["be3"].append(zeros_row)
    return p


# ----------------------------------------------------------------------------
# MBEBlock.forward
# ----------------------------------------------------------------------------
def mbe_block_forward(from_up, from_down, mask, params, *, out_channels,
                      blocks=1, residual=True, concat=True):
    C = out_channels
    half = C // 2

    fu = jnp.transpose(from_up, (0, 2, 3, 1)).astype(jnp.float32)
    fd = (jnp.transpose(from_down, (0, 2, 3, 1)).astype(jnp.float32)
          if from_down is not None else None)
    mk = jnp.transpose(mask, (0, 2, 3, 1)).astype(jnp.float32)    # (N,H,W,1)

    # from_up = relu(norm0(conv3x3(upsample_x2(from_up))))
    fu = _upsample_bilinear_x2(fu)
    N, H, W, _ = fu.shape
    R = N * H * W
    y0, st0 = _conv(_im2col(fu, 3), params["w_up"], params["b_up"],
                    with_stats=True, real_cin_kk=fu.shape[-1] * 9, real_cout=C)
    sc0, sh0 = _bn_scale_shift(st0, params["g0"], params["be0"], R)

    # x1 = relu(norm1(conv1(cat(from_up, from_down) | from_up + from_down)))
    # BN0-apply + ReLU is fused into the conv1 patch gather (no extra pass).
    fu_act = _x1_channels(y0, sc0, sh0, None, 0, C).reshape(N, H, W, C)
    if concat:
        x1_in = jnp.concatenate([fu_act, fd], axis=-1)
    elif fd is not None:
        x1_in = fu_act + fd
    else:
        x1_in = fu_act
    y1, st1 = _conv(_im2col(x1_in, 3), params["w1"], params["b1"],
                    with_stats=True,
                    real_cin_kk=x1_in.shape[-1] * 9, real_cout=C)
    sc1, sh1 = _bn_scale_shift(st1, params["g1"], params["be1"], R)

    # x1 is carried lazily as (raw conv output, BN scale/shift, residual); its
    # BN-apply + residual + ReLU is fused into the consumers.
    y_prev, sc_p, sh_p, res = y1, sc1, sh1, None
    for i in range(blocks):
        # mask = sigmoid(conv5x5(relu(conv5x5(cat(x1[:, :C/2], mask)))))
        x1_lo = _x1_channels(y_prev, sc_p, sh_p, res, 0, half)
        m_in = jnp.concatenate([x1_lo.reshape(N, H, W, half), mk], axis=-1)
        (h,) = _conv(_im2col(m_in, 5), params["w2a"][i], params["b2a"][i],
                     relu=True, with_stats=False,
                     real_cin_kk=(half + 1) * 25, real_cout=C // 4)

        h_nhwc = h.reshape(N, H, W, CP)[..., :C // 4]
        emit_mask = (i + 1) < blocks          # skip mask write when unused
        gouts = _gate(_im2col(h_nhwc, 5), params["w2b"][i], params["b2b"][i],
                      y_prev, sc_p, sh_p, res, emit_mask=emit_mask,
                      real_cin_kk=(C // 4) * 25)
        u, x1 = gouts[0], gouts[1]
        if emit_mask:
            mk = gouts[2].reshape(N, H, W, CP)[..., :1].astype(jnp.float32)

        # x2 = relu(bn(conv3(x1[:, C/2:] + x1[:, C/2:]*mask)) [+ x1])
        u_up = u.reshape(N, H, W, CP)[..., half:C]
        y2, st2 = _conv(_im2col(u_up, 3), params["w3"][i], params["b3"][i],
                        with_stats=True, real_cin_kk=half * 9, real_cout=C)
        sc2, sh2 = _bn_scale_shift(st2, params["g3"][i], params["be3"][i], R)

        y_prev, sc_p, sh_p = y2, sc2, sh2
        res = x1 if residual else None

    # Final BN-apply + residual + ReLU, fused with the output slice/transpose.
    out = _x1_channels(y_prev, sc_p, sh_p, res, 0, C).reshape(N, H, W, C)
    return jnp.transpose(out, (0, 3, 1, 2))               # back to NCHW


# ----------------------------------------------------------------------------
if __name__ == "__main__":
    N, C_IN, C_OUT, H0, W0, BLOCKS = 2, 8, 8, 8, 8, 1

    key = jax.random.PRNGKey(0)
    k1, k2, k3, kp = jax.random.split(key, 4)
    from_up = jax.random.normal(k1, (N, C_IN, H0, W0), jnp.float32)
    from_down = jax.random.normal(k2, (N, C_OUT, 2 * H0, 2 * W0), jnp.float32)
    mask = jax.nn.sigmoid(
        jax.random.normal(k3, (N, 1, 2 * H0, 2 * W0), jnp.float32))
    params = init_params(kp, C_IN, C_OUT, BLOCKS, concat=True)

    fwd = jax.jit(functools.partial(mbe_block_forward, out_channels=C_OUT,
                                    blocks=BLOCKS, residual=True, concat=True))
    out = fwd(from_up, from_down, mask, params)
    jax.block_until_ready(out)

    assert out.shape == (N, C_OUT, 2 * H0, 2 * W0), out.shape
    assert bool(jnp.all(jnp.isfinite(out)))

    print("KERNEL_OK")
</pallas_src>

<mosaic_0001>
module attributes {stable_mosaic.version = 11 : i64} {
  func.func @_conv_kernel(%arg0: i32, %arg1: memref<512x128xbf16, #tpu.memory_space<vmem>>, %arg2: memref<128x128xbf16, #tpu.memory_space<vmem>>, %arg3: memref<1x128xf32, #tpu.memory_space<vmem>>, %arg4: memref<512x128xbf16, #tpu.memory_space<vmem>>, %arg5: memref<1x8x128xf32, #tpu.memory_space<vmem>>) attributes {dimension_semantics = [#tpu.dimension_semantics<parallel>], iteration_bounds = array<i64: 1>, scalar_prefetch = 0 : i64, scratch_operands = 0 : i64, tpu.core_type = #tpu.core_type<tc>, window_params = [{transform_indices = @transform_0, window_bounds = array<i64: 512, 128>}, {pipeline_mode = #tpu.pipeline_mode<synchronous>, transform_indices = @transform_1, window_bounds = array<i64: 128, 128>}, {pipeline_mode = #tpu.pipeline_mode<synchronous>, transform_indices = @transform_2, window_bounds = array<i64: 1, 128>}, {transform_indices = @transform_3, window_bounds = array<i64: 512, 128>}, {transform_indices = @transform_4, window_bounds = array<i64: 1, 8, 128>}]} {
    %c0 = arith.constant 0 : index
    %c0_0 = arith.constant 0 : index
    %0 = vector.load %arg1[%c0, %c0_0] : memref<512x128xbf16, #tpu.memory_space<vmem>>, vector<512x128xbf16>
    %c0_1 = arith.constant 0 : index
    %c0_2 = arith.constant 0 : index
    %1 = vector.load %arg2[%c0_1, %c0_2] : memref<128x128xbf16, #tpu.memory_space<vmem>>, vector<128x128xbf16>
    %cst = arith.constant dense<0.000000e+00> : vector<512x128xf32>
    %2 = tpu.matmul %0, %1, %cst {dimension_numbers = #tpu.dot_dimension_numbers<[1], [0], [0], [1], [0, 0, 1, 1], [], []>} : vector<512x128xbf16>, vector<128x128xbf16>, vector<512x128xf32> -> vector<512x128xf32>
    %c0_3 = arith.constant 0 : index
    %c0_4 = arith.constant 0 : index
    %3 = vector.load %arg3[%c0_3, %c0_4] : memref<1x128xf32, #tpu.memory_space<vmem>>, vector<1x128xf32>
    %4 = vector.broadcast %3 : vector<1x128xf32> to vector<512x128xf32>
    %5 = arith.addf %2, %4 : vector<512x128xf32>
    %cst_5 = arith.constant dense<0.000000e+00> : vector<128xf32>
    %6 = vector.multi_reduction <add>, %5, %cst_5 [0] : vector<512x128xf32> to vector<128xf32>
    %7 = vector.shape_cast %6 : vector<128xf32> to vector<1x128xf32>
    %8 = arith.mulf %5, %5 : vector<512x128xf32>
    %cst_6 = arith.constant dense<0.000000e+00> : vector<128xf32>
    %9 = vector.multi_reduction <add>, %8, %cst_6 [0] : vector<512x128xf32> to vector<128xf32>
    %10 = vector.shape_cast %9 : vector<128xf32> to vector<1x128xf32>
    %cst_7 = arith.constant 0.000000e+00 : f32
    %11 = vector.broadcast %cst_7 : f32 to vector<6x128xf32>
    %12 = tpu.concatenate %7, %10, %11 in 0 : vector<1x128xf32>, vector<1x128xf32>, vector<6x128xf32> -> vector<8x128xf32>
    %c0_8 = arith.constant 0 : index
    %c0_9 = arith.constant 0 : index
    %c0_10 = arith.constant 0 : index
    %13 = vector.load %arg5[%c0_8, %c0_9, %c0_10] : memref<1x8x128xf32, #tpu.memory_space<vmem>>, vector<1x8x128xf32>
    %14 = vector.shape_cast %13 : vector<1x8x128xf32> to vector<8x128xf32>
    %15 = vector.shape_cast %12 : vector<8x128xf32> to vector<1x8x128xf32>
    tpu.vector_store %arg5[%c0_8, %c0_9, %c0_10], %15 {strides = array<i32>} : memref<1x8x128xf32, #tpu.memory_space<vmem>>, vector<1x8x128xf32>,
    %16 = arith.truncf %5 : vector<512x128xf32> to vector<512x128xbf16>
    %c0_11 = arith.constant 0 : index
    %c0_12 = arith.constant 0 : index
    %17 = vector.load %arg4[%c0_11, %c0_12] : memref<512x128xbf16, #tpu.memory_space<vmem>>, vector<512x128xbf16>
    tpu.vector_store %arg4[%c0_11, %c0_12], %16 {strides = array<i32>} : memref<512x128xbf16, #tpu.memory_space<vmem>>, vector<512x128xbf16>,
    return
  }
  func.func @transform_0(%arg0: i32) -> (i32, i32) {
    %c0_i32 = arith.constant 0 : i32
    %c0_i32_0 = arith.constant 0 : i32
    return %arg0, %c0_i32 : i32, i32
  }
  func.func @transform_1(%arg0: i32) -> (i32, i32) {
    %c0_i32 = arith.constant 0 : i32
    %c0_i32_0 = arith.constant 0 : i32
    %c0_i32_1 = arith.constant 0 : i32
    return %c0_i32, %c0_i32_0 : i32, i32
  }
  func.func @transform_2(%arg0: i32) -> (i32, i32) {
    %c0_i32 = arith.constant 0 : i32
    %c0_i32_0 = arith.constant 0 : i32
    %c0_i32_1 = arith.constant 0 : i32
    return %c0_i32, %c0_i32_0 : i32, i32
  }
  func.func @transform_3(%arg0: i32) -> (i32, i32) {
    %c0_i32 = arith.constant 0 : i32
    %c0_i32_0 = arith.constant 0 : i32
    return %arg0, %c0_i32 : i32, i32
  }
  func.func @transform_4(%arg0: i32) -> (i32, i32, i32) {
    %c0_i32 = arith.constant 0 : i32
    %c0_i32_0 = arith.constant 0 : i32
    %c0_i32_1 = arith.constant 0 : i32
    return %arg0, %c0_i32, %c0_i32_0 : i32, i32, i32
  }
}

module attributes {stable_mosaic.version = 11 : i64} {
  func.func @_conv_kernel(%arg0: i32, %arg1: memref<512x256xbf16, #tpu.memory_space<vmem>>, %arg2: memref<256x128xbf16, #tpu.memory_space<vmem>>, %arg3: memref<1x128xf32, #tpu.memory_space<vmem>>, %arg4: memref<512x128xbf16, #tpu.memory_space<vmem>>, %arg5: memref<1x8x128xf32, #tpu.memory_space<vmem>>) attributes {dimension_semantics = [#tpu.dimension_semantics<parallel>], iteration_bounds = array<i64: 1>, scalar_prefetch = 0 : i64, scratch_operands = 0 : i64, tpu.core_type = #tpu.core_type<tc>, window_params = [{transform_indices = @transform_0, window_bounds = array<i64: 512, 256>}, {pipeline_mode = #tpu.pipeline_mode<synchronous>, transform_indices = @transform_1, window_bounds = array<i64: 256, 128>}, {pipeline_mode = #tpu.pipeline_mode<synchronous>, transform_indices = @transform_2, window_bounds = array<i64: 1, 128>}, {transform_indices = @transform_3, window_bounds = array<i64: 512, 128>}, {transform_indices = @transform_4, window_bounds = array<i64: 1, 8, 128>}]} {
    %c0 = arith.constant 0 : index
    %c0_0 = arith.constant 0 : index
    %0 = vector.load %arg1[%c0, %c0_0] : memref<512x256xbf16, #tpu.memory_space<vmem>>, vector<512x256xbf16>
    %c0_1 = arith.constant 0 : index
    %c0_2 = arith.constant 0 : index
    %1 = vector.load %arg2[%c0_1, %c0_2] : memref<256x128xbf16, #tpu.memory_space<vmem>>, vector<256x128xbf16>
    %cst = arith.constant dense<0.000000e+00> : vector<512x128xf32>
    %2 = tpu.matmul %0, %1, %cst {dimension_numbers = #tpu.dot_dimension_numbers<[1], [0], [0], [1], [0, 0, 1, 1], [], []>} : vector<512x256xbf16>, vector<256x128xbf16>, vector<512x128xf32> -> vector<512x128xf32>
    %c0_3 = arith.constant 0 : index
    %c0_4 = arith.constant 0 : index
    %3 = vector.load %arg3[%c0_3, %c0_4] : memref<1x128xf32, #tpu.memory_space<vmem>>, vector<1x128xf32>
    %4 = vector.broadcast %3 : vector<1x128xf32> to vector<512x128xf32>
    %5 = arith.addf %2, %4 : vector<512x128xf32>
    %cst_5 = arith.constant dense<0.000000e+00> : vector<128xf32>
    %6 = vector.multi_reduction <add>, %5, %cst_5 [0] : vector<512x128xf32> to vector<128xf32>
    %7 = vector.shape_cast %6 : vector<128xf32> to vector<1x128xf32>
    %8 = arith.mulf %5, %5 : vector<512x128xf32>
    %cst_6 = arith.constant dense<0.000000e+00> : vector<128xf32>
    %9 = vector.multi_reduction <add>, %8, %cst_6 [0] : vector<512x128xf32> to vector<128xf32>
    %10 = vector.shape_cast %9 : vector<128xf32> to vector<1x128xf32>
    %cst_7 = arith.constant 0.000000e+00 : f32
    %11 = vector.broadcast %cst_7 : f32 to vector<6x128xf32>
    %12 = tpu.concatenate %7, %10, %11 in 0 : vector<1x128xf32>, vector<1x128xf32>, vector<6x128xf32> -> vector<8x128xf32>
    %c0_8 = arith.constant 0 : index
    %c0_9 = arith.constant 0 : index
    %c0_10 = arith.constant 0 : index
    %13 = vector.load %arg5[%c0_8, %c0_9, %c0_10] : memref<1x8x128xf32, #tpu.memory_space<vmem>>, vector<1x8x128xf32>
    %14 = vector.shape_cast %13 : vector<1x8x128xf32> to vector<8x128xf32>
    %15 = vector.shape_cast %12 : vector<8x128xf32> to vector<1x8x128xf32>
    tpu.vector_store %arg5[%c0_8, %c0_9, %c0_10], %15 {strides = array<i32>} : memref<1x8x128xf32, #tpu.memory_space<vmem>>, vector<1x8x128xf32>,
    %16 = arith.truncf %5 : vector<512x128xf32> to vector<512x128xbf16>
    %c0_11 = arith.constant 0 : index
    %c0_12 = arith.constant 0 : index
    %17 = vector.load %arg4[%c0_11, %c0_12] : memref<512x128xbf16, #tpu.memory_space<vmem>>, vector<512x128xbf16>
    tpu.vector_store %arg4[%c0_11, %c0_12], %16 {strides = array<i32>} : memref<512x128xbf16, #tpu.memory_space<vmem>>, vector<512x128xbf16>,
    return
  }
  func.func @transform_0(%arg0: i32) -> (i32, i32) {
    %c0_i32 = arith.constant 0 : i32
    %c0_i32_0 = arith.constant 0 : i32
    return %arg0, %c0_i32 : i32, i32
  }
  func.func @transform_1(%arg0: i32) -> (i32, i32) {
    %c0_i32 = arith.constant 0 : i32
    %c0_i32_0 = arith.constant 0 : i32
    %c0_i32_1 = arith.constant 0 : i32
    return %c0_i32, %c0_i32_0 : i32, i32
  }
  func.func @transform_2(%arg0: i32) -> (i32, i32) {
    %c0_i32 = arith.constant 0 : i32
    %c0_i32_0 = arith.constant 0 : i32
    %c0_i32_1 = arith.constant 0 : i32
    return %c0_i32, %c0_i32_0 : i32, i32
  }
  func.func @transform_3(%arg0: i32) -> (i32, i32) {
    %c0_i32 = arith.constant 0 : i32
    %c0_i32_0 = arith.constant 0 : i32
    return %arg0, %c0_i32 : i32, i32
  }
  func.func @transform_4(%arg0: i32) -> (i32, i32, i32) {
    %c0_i32 = arith.constant 0 : i32
    %c0_i32_0 = arith.constant 0 : i32
    %c0_i32_1 = arith.constant 0 : i32
    return %arg0, %c0_i32, %c0_i32_0 : i32, i32, i32
  }
}

module attributes {stable_mosaic.version = 11 : i64} {
  func.func @_conv_kernel(%arg0: i32, %arg1: memref<512x128xbf16, #tpu.memory_space<vmem>>, %arg2: memref<128x128xbf16, #tpu.memory_space<vmem>>, %arg3: memref<1x128xf32, #tpu.memory_space<vmem>>, %arg4: memref<512x128xbf16, #tpu.memory_space<vmem>>) attributes {dimension_semantics = [#tpu.dimension_semantics<parallel>], iteration_bounds = array<i64: 1>, scalar_prefetch = 0 : i64, scratch_operands = 0 : i64, tpu.core_type = #tpu.core_type<tc>, window_params = [{transform_indices = @transform_0, window_bounds = array<i64: 512, 128>}, {pipeline_mode = #tpu.pipeline_mode<synchronous>, transform_indices = @transform_1, window_bounds = array<i64: 128, 128>}, {pipeline_mode = #tpu.pipeline_mode<synchronous>, transform_indices = @transform_2, window_bounds = array<i64: 1, 128>}, {transform_indices = @transform_3, window_bounds = array<i64: 512, 128>}]} {
    %c0 = arith.constant 0 : index
    %c0_0 = arith.constant 0 : index
    %0 = vector.load %arg1[%c0, %c0_0] : memref<512x128xbf16, #tpu.memory_space<vmem>>, vector<512x128xbf16>
    %c0_1 = arith.constant 0 : index
    %c0_2 = arith.constant 0 : index
    %1 = vector.load %arg2[%c0_1, %c0_2] : memref<128x128xbf16, #tpu.memory_space<vmem>>, vector<128x128xbf16>
    %cst = arith.constant dense<0.000000e+00> : vector<512x128xf32>
    %2 = tpu.matmul %0, %1, %cst {dimension_numbers = #tpu.dot_dimension_numbers<[1], [0], [0], [1], [0, 0, 1, 1], [], []>} : vector<512x128xbf16>, vector<128x128xbf16>, vector<512x128xf32> -> vector<512x128xf32>
    %c0_3 = arith.constant 0 : index
    %c0_4 = arith.constant 0 : index
    %3 = vector.load %arg3[%c0_3, %c0_4] : memref<1x128xf32, #tpu.memory_space<vmem>>, vector<1x128xf32>
    %4 = vector.broadcast %3 : vector<1x128xf32> to vector<512x128xf32>
    %5 = arith.addf %2, %4 : vector<512x128xf32>
    %cst_5 = arith.constant 0.000000e+00 : f32
    %6 = vector.broadcast %cst_5 : f32 to vector<512x128xf32>
    %7 = arith.maximumf %5, %6 : vector<512x128xf32>
    %8 = arith.truncf %7 : vector<512x128xf32> to vector<512x128xbf16>
    %c0_6 = arith.constant 0 : index
    %c0_7 = arith.constant 0 : index
    %9 = vector.load %arg4[%c0_6, %c0_7] : memref<512x128xbf16, #tpu.memory_space<vmem>>, vector<512x128xbf16>
    tpu.vector_store %arg4[%c0_6, %c0_7], %8 {strides = array<i32>} : memref<512x128xbf16, #tpu.memory_space<vmem>>, vector<512x128xbf16>,
    return
  }
  func.func @transform_0(%arg0: i32) -> (i32, i32) {
    %c0_i32 = arith.constant 0 : i32
    %c0_i32_0 = arith.constant 0 : i32
    return %arg0, %c0_i32 : i32, i32
  }
  func.func @transform_1(%arg0: i32) -> (i32, i32) {
    %c0_i32 = arith.constant 0 : i32
    %c0_i32_0 = arith.constant 0 : i32
    %c0_i32_1 = arith.constant 0 : i32
    return %c0_i32, %c0_i32_0 : i32, i32
  }
  func.func @transform_2(%arg0: i32) -> (i32, i32) {
    %c0_i32 = arith.constant 0 : i32
    %c0_i32_0 = arith.constant 0 : i32
    %c0_i32_1 = arith.constant 0 : i32
    return %c0_i32, %c0_i32_0 : i32, i32
  }
  func.func @transform_3(%arg0: i32) -> (i32, i32) {
    %c0_i32 = arith.constant 0 : i32
    %c0_i32_0 = arith.constant 0 : i32
    return %arg0, %c0_i32 : i32, i32
  }
}

module attributes {stable_mosaic.version = 11 : i64} {
  func.func @_gate_kernel(%arg0: i32, %arg1: memref<512x128xbf16, #tpu.memory_space<vmem>>, %arg2: memref<128x128xbf16, #tpu.memory_space<vmem>>, %arg3: memref<1x128xf32, #tpu.memory_space<vmem>>, %arg4: memref<512x128xbf16, #tpu.memory_space<vmem>>, %arg5: memref<1x128xf32, #tpu.memory_space<vmem>>, %arg6: memref<1x128xf32, #tpu.memory_space<vmem>>, %arg7: memref<512x128xbf16, #tpu.memory_space<vmem>>, %arg8: memref<512x128xbf16, #tpu.memory_space<vmem>>) attributes {dimension_semantics = [#tpu.dimension_semantics<parallel>], iteration_bounds = array<i64: 1>, scalar_prefetch = 0 : i64, scratch_operands = 0 : i64, tpu.core_type = #tpu.core_type<tc>, window_params = [{transform_indices = @transform_0, window_bounds = array<i64: 512, 128>}, {pipeline_mode = #tpu.pipeline_mode<synchronous>, transform_indices = @transform_1, window_bounds = array<i64: 128, 128>}, {pipeline_mode = #tpu.pipeline_mode<synchronous>, transform_indices = @transform_2, window_bounds = array<i64: 1, 128>}, {transform_indices = @transform_3, window_bounds = array<i64: 512, 128>}, {pipeline_mode = #tpu.pipeline_mode<synchronous>, transform_indices = @transform_4, window_bounds = array<i64: 1, 128>}, {pipeline_mode = #tpu.pipeline_mode<synchronous>, transform_indices = @transform_5, window_bounds = array<i64: 1, 128>}, {transform_indices = @transform_6, window_bounds = array<i64: 512, 128>}, {transform_indices = @transform_7, window_bounds = array<i64: 512, 128>}]} {
    %c0 = arith.constant 0 : index
    %c0_0 = arith.constant 0 : index
    %0 = vector.load %arg4[%c0, %c0_0] : memref<512x128xbf16, #tpu.memory_space<vmem>>, vector<512x128xbf16>
    %1 = arith.extf %0 : vector<512x128xbf16> to vector<512x128xf32>
    %c0_1 = arith.constant 0 : index
    %c0_2 = arith.constant 0 : index
    %2 = vector.load %arg5[%c0_1, %c0_2] : memref<1x128xf32, #tpu.memory_space<vmem>>, vector<1x128xf32>
    %3 = vector.broadcast %2 : vector<1x128xf32> to vector<512x128xf32>
    %4 = arith.mulf %1, %3 : vector<512x128xf32>
    %c0_3 = arith.constant 0 : index
    %c0_4 = arith.constant 0 : index
    %5 = vector.load %arg6[%c0_3, %c0_4] : memref<1x128xf32, #tpu.memory_space<vmem>>, vector<1x128xf32>
    %6 = vector.broadcast %5 : vector<1x128xf32> to vector<512x128xf32>
    %7 = arith.addf %4, %6 : vector<512x128xf32>
    %cst = arith.constant 0.000000e+00 : f32
    %8 = vector.broadcast %cst : f32 to vector<512x128xf32>
    %9 = arith.maximumf %7, %8 : vector<512x128xf32>
    %c0_5 = arith.constant 0 : index
    %c0_6 = arith.constant 0 : index
    %10 = vector.load %arg1[%c0_5, %c0_6] : memref<512x128xbf16, #tpu.memory_space<vmem>>, vector<512x128xbf16>
    %c0_7 = arith.constant 0 : index
    %c0_8 = arith.constant 0 : index
    %11 = vector.load %arg2[%c0_7, %c0_8] : memref<128x128xbf16, #tpu.memory_space<vmem>>, vector<128x128xbf16>
    %cst_9 = arith.constant dense<0.000000e+00> : vector<512x128xf32>
    %12 = tpu.matmul %10, %11, %cst_9 {dimension_numbers = #tpu.dot_dimension_numbers<[1], [0], [0], [1], [0, 0, 1, 1], [], []>} : vector<512x128xbf16>, vector<128x128xbf16>, vector<512x128xf32> -> vector<512x128xf32>
    %c0_10 = arith.constant 0 : index
    %c0_11 = arith.constant 0 : index
    %13 = vector.load %arg3[%c0_10, %c0_11] : memref<1x128xf32, #tpu.memory_space<vmem>>, vector<1x128xf32>
    %14 = vector.broadcast %13 : vector<1x128xf32> to vector<512x128xf32>
    %15 = arith.addf %12, %14 : vector<512x128xf32>
    %16 = arith.negf %15 : vector<512x128xf32>
    %17 = math.exp %16 : vector<512x128xf32>
    %cst_12 = arith.constant 1.000000e+00 : f32
    %18 = vector.broadcast %cst_12 : f32 to vector<512x128xf32>
    %19 = arith.addf %18, %17 : vector<512x128xf32>
    %20 = arith.divf %18, %19 : vector<512x128xf32>
    %cst_13 = arith.constant 1.000000e+00 : f32
    %21 = vector.broadcast %cst_13 : f32 to vector<512x128xf32>
    %22 = arith.addf %21, %20 : vector<512x128xf32>
    %23 = arith.mulf %9, %22 : vector<512x128xf32>
    %24 = arith.truncf %23 : vector<512x128xf32> to vector<512x128xbf16>
    %c0_14 = arith.constant 0 : index
    %c0_15 = arith.constant 0 : index
    %25 = vector.load %arg7[%c0_14, %c0_15] : memref<512x128xbf16, #tpu.memory_space<vmem>>, vector<512x128xbf16>
    tpu.vector_store %arg7[%c0_14, %c0_15], %24 {strides = array<i32>} : memref<512x128xbf16, #tpu.memory_space<vmem>>, vector<512x128xbf16>,
    %26 = arith.truncf %9 : vector<512x128xf32> to vector<512x128xbf16>
    %c0_16 = arith.constant 0 : index
    %c0_17 = arith.constant 0 : index
    %27 = vector.load %arg8[%c0_16, %c0_17] : memref<512x128xbf16, #tpu.memory_space<vmem>>, vector<512x128xbf16>
    tpu.vector_store %arg8[%c0_16, %c0_17], %26 {strides = array<i32>} : memref<512x128xbf16, #tpu.memory_space<vmem>>, vector<512x128xbf16>,
    return
  }
  func.func @transform_0(%arg0: i32) -> (i32, i32) {
    %c0_i32 = arith.constant 0 : i32
    %c0_i32_0 = arith.constant 0 : i32
    return %arg0, %c0_i32 : i32, i32
  }
  func.func @transform_1(%arg0: i32) -> (i32, i32) {
    %c0_i32 = arith.constant 0 : i32
    %c0_i32_0 = arith.constant 0 : i32
    %c0_i32_1 = arith.constant 0 : i32
    return %c0_i32, %c0_i32_0 : i32, i32
  }
  func.func @transform_2(%arg0: i32) -> (i32, i32) {
    %c0_i32 = arith.constant 0 : i32
    %c0_i32_0 = arith.constant 0 : i32
    %c0_i32_1 = arith.constant 0 : i32
    return %c0_i32, %c0_i32_0 : i32, i32
  }
  func.func @transform_3(%arg0: i32) -> (i32, i32) {
    %c0_i32 = arith.constant 0 : i32
    %c0_i32_0 = arith.constant 0 : i32
    return %arg0, %c0_i32 : i32, i32
  }
  func.func @transform_4(%arg0: i32) -> (i32, i32) {
    %c0_i32 = arith.constant 0 : i32
    %c0_i32_0 = arith.constant 0 : i32
    %c0_i32_1 = arith.constant 0 : i32
    return %c0_i32, %c0_i32_0 : i32, i32
  }
  func.func @transform_5(%arg0: i32) -> (i32, i32) {
    %c0_i32 = arith.constant 0 : i32
    %c0_i32_0 = arith.constant 0 : i32
    %c0_i32_1 = arith.constant 0 : i32
    return %c0_i32, %c0_i32_0 : i32, i32
  }
  func.func @transform_6(%arg0: i32) -> (i32, i32) {
    %c0_i32 = arith.constant 0 : i32
    %c0_i32_0 = arith.constant 0 : i32
    return %arg0, %c0_i32 : i32, i32
  }
  func.func @transform_7(%arg0: i32) -> (i32, i32) {
    %c0_i32 = arith.constant 0 : i32
    %c0_i32_0 = arith.constant 0 : i32
    return %arg0, %c0_i32 : i32, i32
  }
}

module attributes {stable_mosaic.version = 11 : i64} {
  func.func @_conv_kernel(%arg0: i32, %arg1: memref<512x128xbf16, #tpu.memory_space<vmem>>, %arg2: memref<128x128xbf16, #tpu.memory_space<vmem>>, %arg3: memref<1x128xf32, #tpu.memory_space<vmem>>, %arg4: memref<512x128xbf16, #tpu.memory_space<vmem>>, %arg5: memref<1x8x128xf32, #tpu.memory_space<vmem>>) attributes {dimension_semantics = [#tpu.dimension_semantics<parallel>], iteration_bounds = array<i64: 1>, scalar_prefetch = 0 : i64, scratch_operands = 0 : i64, tpu.core_type = #tpu.core_type<tc>, window_params = [{transform_indices = @transform_0, window_bounds = array<i64: 512, 128>}, {pipeline_mode = #tpu.pipeline_mode<synchronous>, transform_indices = @transform_1, window_bounds = array<i64: 128, 128>}, {pipeline_mode = #tpu.pipeline_mode<synchronous>, transform_indices = @transform_2, window_bounds = array<i64: 1, 128>}, {transform_indices = @transform_3, window_bounds = array<i64: 512, 128>}, {transform_indices = @transform_4, window_bounds = array<i64: 1, 8, 128>}]} {
    %c0 = arith.constant 0 : index
    %c0_0 = arith.constant 0 : index
    %0 = vector.load %arg1[%c0, %c0_0] : memref<512x128xbf16, #tpu.memory_space<vmem>>, vector<512x128xbf16>
    %c0_1 = arith.constant 0 : index
    %c0_2 = arith.constant 0 : index
    %1 = vector.load %arg2[%c0_1, %c0_2] : memref<128x128xbf16, #tpu.memory_space<vmem>>, vector<128x128xbf16>
    %cst = arith.constant dense<0.000000e+00> : vector<512x128xf32>
    %2 = tpu.matmul %0, %1, %cst {dimension_numbers = #tpu.dot_dimension_numbers<[1], [0], [0], [1], [0, 0, 1, 1], [], []>} : vector<512x128xbf16>, vector<128x128xbf16>, vector<512x128xf32> -> vector<512x128xf32>
    %c0_3 = arith.constant 0 : index
    %c0_4 = arith.constant 0 : index
    %3 = vector.load %arg3[%c0_3, %c0_4] : memref<1x128xf32, #tpu.memory_space<vmem>>, vector<1x128xf32>
    %4 = vector.broadcast %3 : vector<1x128xf32> to vector<512x128xf32>
    %5 = arith.addf %2, %4 : vector<512x128xf32>
    %cst_5 = arith.constant dense<0.000000e+00> : vector<128xf32>
    %6 = vector.multi_reduction <add>, %5, %cst_5 [0] : vector<512x128xf32> to vector<128xf32>
    %7 = vector.shape_cast %6 : vector<128xf32> to vector<1x128xf32>
    %8 = arith.mulf %5, %5 : vector<512x128xf32>
    %cst_6 = arith.constant dense<0.000000e+00> : vector<128xf32>
    %9 = vector.multi_reduction <add>, %8, %cst_6 [0] : vector<512x128xf32> to vector<128xf32>
    %10 = vector.shape_cast %9 : vector<128xf32> to vector<1x128xf32>
    %cst_7 = arith.constant 0.000000e+00 : f32
    %11 = vector.broadcast %cst_7 : f32 to vector<6x128xf32>
    %12 = tpu.concatenate %7, %10, %11 in 0 : vector<1x128xf32>, vector<1x128xf32>, vector<6x128xf32> -> vector<8x128xf32>
    %c0_8 = arith.constant 0 : index
    %c0_9 = arith.constant 0 : index
    %c0_10 = arith.constant 0 : index
    %13 = vector.load %arg5[%c0_8, %c0_9, %c0_10] : memref<1x8x128xf32, #tpu.memory_space<vmem>>, vector<1x8x128xf32>
    %14 = vector.shape_cast %13 : vector<1x8x128xf32> to vector<8x128xf32>
    %15 = vector.shape_cast %12 : vector<8x128xf32> to vector<1x8x128xf32>
    tpu.vector_store %arg5[%c0_8, %c0_9, %c0_10], %15 {strides = array<i32>} : memref<1x8x128xf32, #tpu.memory_space<vmem>>, vector<1x8x128xf32>,
    %16 = arith.truncf %5 : vector<512x128xf32> to vector<512x128xbf16>
    %c0_11 = arith.constant 0 : index
    %c0_12 = arith.constant 0 : index
    %17 = vector.load %arg4[%c0_11, %c0_12] : memref<512x128xbf16, #tpu.memory_space<vmem>>, vector<512x128xbf16>
    tpu.vector_store %arg4[%c0_11, %c0_12], %16 {strides = array<i32>} : memref<512x128xbf16, #tpu.memory_space<vmem>>, vector<512x128xbf16>,
    return
  }
  func.func @transform_0(%arg0: i32) -> (i32, i32) {
    %c0_i32 = arith.constant 0 : i32
    %c0_i32_0 = arith.constant 0 : i32
    return %arg0, %c0_i32 : i32, i32
  }
  func.func @transform_1(%arg0: i32) -> (i32, i32) {
    %c0_i32 = arith.constant 0 : i32
    %c0_i32_0 = arith.constant 0 : i32
    %c0_i32_1 = arith.constant 0 : i32
    return %c0_i32, %c0_i32_0 : i32, i32
  }
  func.func @transform_2(%arg0: i32) -> (i32, i32) {
    %c0_i32 = arith.constant 0 : i32
    %c0_i32_0 = arith.constant 0 : i32
    %c0_i32_1 = arith.constant 0 : i32
    return %c0_i32, %c0_i32_0 : i32, i32
  }
  func.func @transform_3(%arg0: i32) -> (i32, i32) {
    %c0_i32 = arith.constant 0 : i32
    %c0_i32_0 = arith.constant 0 : i32
    return %arg0, %c0_i32 : i32, i32
  }
  func.func @transform_4(%arg0: i32) -> (i32, i32, i32) {
    %c0_i32 = arith.constant 0 : i32
    %c0_i32_0 = arith.constant 0 : i32
    %c0_i32_1 = arith.constant 0 : i32
    return %arg0, %c0_i32, %c0_i32_0 : i32, i32, i32
  }
}

</mosaic_0001>

<llo_original>
// kernel: mbe_block_forward.5
$region0: #{mbe_block_forward.5}
  #allocation0 [shape = 'u32[]', space=smem, size = 0x4, offset = 0x4, fixed_abs, tag = 'smem constant byte address 0x4 - core index']
  #allocation1 [shape = 'u32[144,128]{1,0:T(1,128)}', space=vmem, size = 0x12000, scoped, tag = 'internal scratch']
  %s0 = inlined_call_operand.vmem [shape: bf16[512,128], index: 0, kind: input, shape index: {}]
  %s1 = inlined_call_operand.vmem [shape: bf16[128,128], index: 1, kind: input, shape index: {}]
  %s2 = inlined_call_operand.vmem [shape: f32[1,128], index: 2, kind: input, shape index: {}]
  %s3 = inlined_call_operand.vmem [shape: bf16[512,128], index: 3, kind: output, shape index: {0}]
  %s4 = inlined_call_operand.vmem [shape: f32[1,8,128], index: 4, kind: output, shape index: {1}]
  %5 = xla_tuple %s3, %s4
  %s6 = sld [smem:[#allocation0]]
  $region30: #{mbe_block_forward.5} parent=0
    _
  %s8 = ssub.s32 1, %s6
  %s9 = scalar_select 0, %s8, %s6
  // Predicated region
  $region2: #{mbe_block_forward.5} parent=0 // pred_check
    _
  $region3: #{mbe_block_forward.5} parent=0 // pred_check_branch
    %11 = sbr.rel (0) target = $region5
  $region4: #{mbe_block_forward.5} parent=0 // pred_region
    _
  $region5: #{mbe_block_forward.5} parent=0 // pred_fallthru
    _
  // Predicated region
  $region6: #{mbe_block_forward.5} parent=0 // pred_check
    _
  $region7: #{mbe_block_forward.5} parent=0 // pred_check_branch
    %13 = sbr.rel (0) target = $region9
  $region8: #{mbe_block_forward.5} parent=0 // pred_region
    _
  $region9: #{mbe_block_forward.5} parent=0 // pred_fallthru
    _
  // Predicated region
  $region10: #{mbe_block_forward.5} parent=0 // pred_check
    _
  $region11: #{mbe_block_forward.5} parent=0 // pred_check_branch
    %15 = sbr.rel (0) target = $region13
  $region12: #{mbe_block_forward.5} parent=0 // pred_region
    _
  $region13: #{mbe_block_forward.5} parent=0 // pred_fallthru
    _
  %v17 = vld [vmem:[%s0] sm:$0xf]
  %v18 = vld [vmem:[%s0 + $0x4] sm:$0xf]
  %v19 = vld [vmem:[%s0 + $0x8] sm:$0xf]
  %v20 = vld [vmem:[%s0 + $0xc] sm:$0xf]
  %v21 = vld [vmem:[%s0 + $0x10] sm:$0xf]
  %v22 = vld [vmem:[%s0 + $0x14] sm:$0xf]
  %v23 = vld [vmem:[%s0 + $0x18] sm:$0xf]
  %v24 = vld [vmem:[%s0 + $0x1c] sm:$0xf]
  %v25 = vld [vmem:[%s0 + $0x20] sm:$0xf]
  %v26 = vld [vmem:[%s0 + $0x24] sm:$0xf]
  %v27 = vld [vmem:[%s0 + $0x28] sm:$0xf]
  %v28 = vld [vmem:[%s0 + $0x2c] sm:$0xf]
  %v29 = vld [vmem:[%s0 + $0x30] sm:$0xf]
  %v30 = vld [vmem:[%s0 + $0x34] sm:$0xf]
  %v31 = vld [vmem:[%s0 + $0x38] sm:$0xf]
  %v32 = vld [vmem:[%s0 + $0x3c] sm:$0xf]
  %v33 = vld [vmem:[%s0 + $0x40] sm:$0xf]
  %v34 = vld [vmem:[%s0 + $0x44] sm:$0xf]
  %v35 = vld [vmem:[%s0 + $0x48] sm:$0xf]
  %v36 = vld [vmem:[%s0 + $0x4c] sm:$0xf]
  %v37 = vld [vmem:[%s0 + $0x50] sm:$0xf]
  %v38 = vld [vmem:[%s0 + $0x54] sm:$0xf]
  %v39 = vld [vmem:[%s0 + $0x58] sm:$0xf]
  %v40 = vld [vmem:[%s0 + $0x5c] sm:$0xf]
  %v41 = vld [vmem:[%s0 + $0x60] sm:$0xf]
  %v42 = vld [vmem:[%s0 + $0x64] sm:$0xf]
  %v43 = vld [vmem:[%s0 + $0x68] sm:$0xf]
  %v44 = vld [vmem:[%s0 + $0x6c] sm:$0xf]
  %v45 = vld [vmem:[%s0 + $0x70] sm:$0xf]
  %v46 = vld [vmem:[%s0 + $0x74] sm:$0xf]
  %v47 = vld [vmem:[%s0 + $0x78] sm:$0xf]
  %v48 = vld [vmem:[%s0 + $0x7c] sm:$0xf]
  %v49 = vld [vmem:[%s0 + $0x80] sm:$0xf]
  %v50 = vld [vmem:[%s0 + $0x84] sm:$0xf]
  %v51 = vld [vmem:[%s0 + $0x88] sm:$0xf]
  %v52 = vld [vmem:[%s0 + $0x8c] sm:$0xf]
  %v53 = vld [vmem:[%s0 + $0x90] sm:$0xf]
  %v54 = vld [vmem:[%s0 + $0x94] sm:$0xf]
  %v55 = vld [vmem:[%s0 + $0x98] sm:$0xf]
  %v56 = vld [vmem:[%s0 + $0x9c] sm:$0xf]
  %v57 = vld [vmem:[%s0 + $0xa0] sm:$0xf]
  %v58 = vld [vmem:[%s0 + $0xa4] sm:$0xf]
  %v59 = vld [vmem:[%s0 + $0xa8] sm:$0xf]
  %v60 = vld [vmem:[%s0 + $0xac] sm:$0xf]
  %v61 = vld [vmem:[%s0 + $0xb0] sm:$0xf]
  %v62 = vld [vmem:[%s0 + $0xb4] sm:$0xf]
  %v63 = vld [vmem:[%s0 + $0xb8] sm:$0xf]
  %v64 = vld [vmem:[%s0 + $0xbc] sm:$0xf]
  %v65 = vld [vmem:[%s0 + $0xc0] sm:$0xf]
  %v66 = vld [vmem:[%s0 + $0xc4] sm:$0xf]
  %v67 = vld [vmem:[%s0 + $0xc8] sm:$0xf]
  %v68 = vld [vmem:[%s0 + $0xcc] sm:$0xf]
  %v69 = vld [vmem:[%s0 + $0xd0] sm:$0xf]
  %v70 = vld [vmem:[%s0 + $0xd4] sm:$0xf]
  %v71 = vld [vmem:[%s0 + $0xd8] sm:$0xf]
  %v72 = vld [vmem:[%s0 + $0xdc] sm:$0xf]
  %v73 = vld [vmem:[%s0 + $0xe0] sm:$0xf]
  %v74 = vld [vmem:[%s0 + $0xe4] sm:$0xf]
  %v75 = vld [vmem:[%s0 + $0xe8] sm:$0xf]
  %v76 = vld [vmem:[%s0 + $0xec] sm:$0xf]
  %v77 = vld [vmem:[%s0 + $0xf0] sm:$0xf]
  %v78 = vld [vmem:[%s0 + $0xf4] sm:$0xf]
  %v79 = vld [vmem:[%s0 + $0xf8] sm:$0xf]
  %v80 = vld [vmem:[%s0 + $0xfc] sm:$0xf]
  %v81 = vld [vmem:[%s1] sm:$0xf]
  %v82 = vld [vmem:[%s1 + $0x4] sm:$0xf]
  %v83 = vld [vmem:[%s1 + $0x8] sm:$0xf]
  %v84 = vld [vmem:[%s1 + $0xc] sm:$0xf]
  %v85 = vld [vmem:[%s1 + $0x10] sm:$0xf]
  %v86 = vld [vmem:[%s1 + $0x14] sm:$0xf]
  %v87 = vld [vmem:[%s1 + $0x18] sm:$0xf]
  %v88 = vld [vmem:[%s1 + $0x1c] sm:$0xf]
  %v89 = vld [vmem:[%s1 + $0x20] sm:$0xf]
  %v90 = vld [vmem:[%s1 + $0x24] sm:$0xf]
  %v91 = vld [vmem:[%s1 + $0x28] sm:$0xf]
  %v92 = vld [vmem:[%s1 + $0x2c] sm:$0xf]
  %v93 = vld [vmem:[%s1 + $0x30] sm:$0xf]
  %v94 = vld [vmem:[%s1 + $0x34] sm:$0xf]
  %v95 = vld [vmem:[%s1 + $0x38] sm:$0xf]
  %v96 = vld [vmem:[%s1 + $0x3c] sm:$0xf]
  %v97 = vld [vmem:[%s2] sm:$0x1]
  %v99 = vlaneseq
  %v100 = vshrl.u32 %v99, 7
  %v101 = vsub.s32 0, %v100
  %v102 = vrot.slane %v97, %v101
  %v168 = vunpack.c.l.b16 %v17
  %v169 = vunpack.c.l.b16 %v18
  %v170 = vunpack.c.l.b16 %v19
  %v171 = vunpack.c.l.b16 %v20
  %v172 = vunpack.c.l.b16 %v21
  %v173 = vunpack.c.l.b16 %v22
  %v174 = vunpack.c.l.b16 %v23
  %v175 = vunpack.c.l.b16 %v24
  %v176 = vunpack.c.l.b16 %v25
  %v177 = vunpack.c.l.b16 %v26
  %v178 = vunpack.c.l.b16 %v27
  %v179 = vunpack.c.l.b16 %v28
  %v180 = vunpack.c.l.b16 %v29
  %v181 = vunpack.c.l.b16 %v30
  %v182 = vunpack.c.l.b16 %v31
  %v183 = vunpack.c.l.b16 %v32
  %v184 = vunpack.c.l.b16 %v33
  %v185 = vunpack.c.l.b16 %v34
  %v186 = vunpack.c.l.b16 %v35
  %v187 = vunpack.c.l.b16 %v36
  %v188 = vunpack.c.l.b16 %v37
  %v189 = vunpack.c.l.b16 %v38
  %v190 = vunpack.c.l.b16 %v39
  %v191 = vunpack.c.l.b16 %v40
  %v192 = vunpack.c.l.b16 %v41
  %v193 = vunpack.c.l.b16 %v42
  %v194 = vunpack.c.l.b16 %v43
  %v195 = vunpack.c.l.b16 %v44
  %v196 = vunpack.c.l.b16 %v45
  %v197 = vunpack.c.l.b16 %v46
  %v198 = vunpack.c.l.b16 %v47
  %v199 = vunpack.c.l.b16 %v48
  %v200 = vunpack.c.l.b16 %v49
  %v201 = vunpack.c.l.b16 %v50
  %v202 = vunpack.c.l.b16 %v51
  %v203 = vunpack.c.l.b16 %v52
  %v204 = vunpack.c.l.b16 %v53
  %v205 = vunpack.c.l.b16 %v54
  %v206 = vunpack.c.l.b16 %v55
  %v207 = vunpack.c.l.b16 %v56
  %v208 = vunpack.c.l.b16 %v57
  %v209 = vunpack.c.l.b16 %v58
  %v210 = vunpack.c.l.b16 %v59
  %v211 = vunpack.c.l.b16 %v60
  %v212 = vunpack.c.l.b16 %v61
  %v213 = vunpack.c.l.b16 %v62
  %v214 = vunpack.c.l.b16 %v63
  %v215 = vunpack.c.l.b16 %v64
  %v216 = vunpack.c.l.b16 %v65
  %v217 = vunpack.c.l.b16 %v66
  %v218 = vunpack.c.l.b16 %v67
  %v219 = vunpack.c.l.b16 %v68
  %v220 = vunpack.c.l.b16 %v69
  %v221 = vunpack.c.l.b16 %v70
  %v222 = vunpack.c.l.b16 %v71
  %v223 = vunpack.c.l.b16 %v72
  %v224 = vunpack.c.l.b16 %v73
  %v225 = vunpack.c.l.b16 %v74
  %v226 = vunpack.c.l.b16 %v75
  %v227 = vunpack.c.l.b16 %v76
  %v228 = vunpack.c.l.b16 %v77
  %v229 = vunpack.c.l.b16 %v78
  %v230 = vunpack.c.l.b16 %v79
  %v231 = vunpack.c.l.b16 %v80
  %v232 = vpack.c.b16 %v169, %v168
  %v233 = vpack.c.b16 %v171, %v170
  %v234 = vpack.c.b16 %v173, %v172
  %v235 = vpack.c.b16 %v175, %v174
  %v236 = vpack.c.b16 %v177, %v176
  %v237 = vpack.c.b16 %v179, %v178
  %v238 = vpack.c.b16 %v181, %v180
  %v239 = vpack.c.b16 %v183, %v182
  %v240 = vpack.c.b16 %v185, %v184
  %v241 = vpack.c.b16 %v187, %v186
  %v242 = vpack.c.b16 %v189, %v188
  %v243 = vpack.c.b16 %v191, %v190
  %v244 = vpack.c.b16 %v193, %v192
  %v245 = vpack.c.b16 %v195, %v194
  %v246 = vpack.c.b16 %v197, %v196
  %v247 = vpack.c.b16 %v199, %v198
  %v248 = vpack.c.b16 %v201, %v200
  %v249 = vpack.c.b16 %v203, %v202
  %v250 = vpack.c.b16 %v205, %v204
  %v251 = vpack.c.b16 %v207, %v206
  %v252 = vpack.c.b16 %v209, %v208
  %v253 = vpack.c.b16 %v211, %v210
  %v254 = vpack.c.b16 %v213, %v212
  %v255 = vpack.c.b16 %v215, %v214
  %v256 = vpack.c.b16 %v217, %v216
  %v257 = vpack.c.b16 %v219, %v218
  %v258 = vpack.c.b16 %v221, %v220
  %v259 = vpack.c.b16 %v223, %v222
  %v260 = vpack.c.b16 %v225, %v224
  %v261 = vpack.c.b16 %v227, %v226
  %v262 = vpack.c.b16 %v229, %v228
  %v263 = vpack.c.b16 %v231, %v230
  %v312 = vunpack.c.l.b16 %v81
  %v313 = vunpack.c.l.b16 %v82
  %v314 = vunpack.c.l.b16 %v83
  %v315 = vunpack.c.l.b16 %v84
  %v316 = vunpack.c.l.b16 %v85
  %v317 = vunpack.c.l.b16 %v86
  %v318 = vunpack.c.l.b16 %v87
  %v319 = vunpack.c.l.b16 %v88
  %v320 = vunpack.c.l.b16 %v89
  %v321 = vunpack.c.l.b16 %v90
  %v322 = vunpack.c.l.b16 %v91
  %v323 = vunpack.c.l.b16 %v92
  %v324 = vunpack.c.l.b16 %v93
  %v325 = vunpack.c.l.b16 %v94
  %v326 = vunpack.c.l.b16 %v95
  %v327 = vunpack.c.l.b16 %v96
  %v328 = vpack.c.b16 %v313, %v312
  %v329 = vpack.c.b16 %v315, %v314
  %v330 = vpack.c.b16 %v317, %v316
  %v331 = vpack.c.b16 %v319, %v318
  %v332 = vpack.c.b16 %v321, %v320
  %v333 = vpack.c.b16 %v323, %v322
  %v334 = vpack.c.b16 %v325, %v324
  %v335 = vpack.c.b16 %v327, %v326
  %344 = vmatprep.subr.bf16.mxu0 0
  %345 = vmatpush1.bf16.msra.mxu0 %v328
  %346 = vmatprep.subr.bf16.mxu0 0
  %347 = vmatpush1.bf16.msra.mxu0 %v329
  %348 = vmatprep.subr.bf16.mxu0 0
  %349 = vmatpush1.bf16.msra.mxu0 %v330
  %350 = vmatprep.subr.bf16.mxu0 0
  %351 = vmatpush1.bf16.msra.mxu0 %v331
  %352 = vmatprep.subr.bf16.mxu0 0
  %353 = vmatpush1.bf16.msra.mxu0 %v332
  %354 = vmatprep.subr.bf16.mxu0 0
  %355 = vmatpush1.bf16.msra.mxu0 %v333
  %356 = vmatprep.subr.bf16.mxu0 0
  %357 = vmatpush1.bf16.msra.mxu0 %v334
  %358 = vmatprep.subr.bf16.mxu0 0
  %359 = vmatpush1.bf16.msra.mxu0 %v335
  %360 = vmatprep.subr.bf16.mxu0 0
  %361 = vmatpush1.bf16.msra.mxu0 0
  %362 = vmatprep.subr.bf16.mxu0 0
  %363 = vmatpush1.bf16.msra.mxu0 0
  %364 = vmatprep.subr.bf16.mxu0 0
  %365 = vmatpush1.bf16.msra.mxu0 0
  %366 = vmatprep.subr.bf16.mxu0 0
  %367 = vmatpush1.bf16.msra.mxu0 0
  %368 = vmatprep.subr.bf16.mxu0 0
  %369 = vmatpush1.bf16.msra.mxu0 0
  %370 = vmatprep.subr.bf16.mxu0 0
  %371 = vmatpush1.bf16.msra.mxu0 0
  %372 = vmatprep.subr.bf16.mxu0 0
  %373 = vmatpush1.bf16.msra.mxu0 0
  %374 = vmatprep.subr.bf16.mxu0 0
  %375 = vmatpush1.bf16.msra.mxu0 0
  %376 = vmatprep.mubr.bf16.mxu0 0
  %377 = vmatmul.mubr.bf16.gmra.mrb[0].mxu0 %v232
  %v378 = vpop.f32.mrb[0].mxu0
  %v379 = vadd.f32 %v102, %v378
  %v380 = vpop.f32.mrb[0].mxu0
  %v381 = vpop.f32.mrb[0].mxu0
  %v382 = vadd.f32 %v102, %v381
  %v383 = vpop.f32.mrb[0].mxu0
  %384 = vmatprep.mubr.bf16.mxu0 0
  %385 = vmatmul.mubr.bf16.gmra.mrb[0].mxu0 %v233
  %v386 = vpop.f32.mrb[0].mxu0
  %v387 = vadd.f32 %v102, %v386
  %v388 = vpop.f32.mrb[0].mxu0
  %v389 = vpop.f32.mrb[0].mxu0
  %v390 = vadd.f32 %v102, %v389
  %v391 = vpop.f32.mrb[0].mxu0
  %392 = vmatprep.mubr.bf16.mxu0 0
  %393 = vmatmul.mubr.bf16.gmra.mrb[0].mxu0 %v234
  %v394 = vpop.f32.mrb[0].mxu0
  %v395 = vadd.f32 %v102, %v394
  %v396 = vpop.f32.mrb[0].mxu0
  %v397 = vpop.f32.mrb[0].mxu0
  %v398 = vadd.f32 %v102, %v397
  %v399 = vpop.f32.mrb[0].mxu0
  %400 = vmatprep.mubr.bf16.mxu0 0
  %401 = vmatmul.mubr.bf16.gmra.mrb[0].mxu0 %v235
  %v402 = vpop.f32.mrb[0].mxu0
  %v403 = vadd.f32 %v102, %v402
  %v404 = vpop.f32.mrb[0].mxu0
  %v405 = vpop.f32.mrb[0].mxu0
  %v406 = vadd.f32 %v102, %v405
  %v407 = vpop.f32.mrb[0].mxu0
  %408 = vmatprep.mubr.bf16.mxu0 0
  %409 = vmatmul.mubr.bf16.gmra.mrb[0].mxu0 %v236
  %v410 = vpop.f32.mrb[0].mxu0
  %v411 = vadd.f32 %v102, %v410
  %v412 = vpop.f32.mrb[0].mxu0
  %v413 = vpop.f32.mrb[0].mxu0
  %v414 = vadd.f32 %v102, %v413
  %v415 = vpop.f32.mrb[0].mxu0
  %416 = vmatprep.mubr.bf16.mxu0 0
  %417 = vmatmul.mubr.bf16.gmra.mrb[0].mxu0 %v237
  %v418 = vpop.f32.mrb[0].mxu0
  %v419 = vadd.f32 %v102, %v418
  %v420 = vpop.f32.mrb[0].mxu0
  %v421 = vpop.f32.mrb[0].mxu0
  %v422 = vadd.f32 %v102, %v421
  %v423 = vpop.f32.mrb[0].mxu0
  %424 = vmatprep.mubr.bf16.mxu0 0
  %425 = vmatmul.mubr.bf16.gmra.mrb[0].mxu0 %v238
  %v426 = vpop.f32.mrb[0].mxu0
  %v427 = vadd.f32 %v102, %v426
  %v428 = vpop.f32.mrb[0].mxu0
  %v429 = vpop.f32.mrb[0].mxu0
  %v430 = vadd.f32 %v102, %v429
  %v431 = vpop.f32.mrb[0].mxu0
  %432 = vmatprep.mubr.bf16.mxu0 0
  %433 = vmatmul.mubr.bf16.gmra.mrb[0].mxu0 %v239
  %v434 = vpop.f32.mrb[0].mxu0
  %v435 = vadd.f32 %v102, %v434
  %v436 = vpop.f32.mrb[0].mxu0
  %v437 = vpop.f32.mrb[0].mxu0
  %v438 = vadd.f32 %v102, %v437
  %v439 = vpop.f32.mrb[0].mxu0
  %440 = vmatprep.mubr.bf16.mxu0 0
  %441 = vmatmul.mubr.bf16.gmra.mrb[0].mxu0 %v240
  %v442 = vpop.f32.mrb[0].mxu0
  %v443 = vadd.f32 %v102, %v442
  %v444 = vpop.f32.mrb[0].mxu0
  %v445 = vpop.f32.mrb[0].mxu0
  %v446 = vadd.f32 %v102, %v445
  %v447 = vpop.f32.mrb[0].mxu0
  %448 = vmatprep.mubr.bf16.mxu0 0
  %449 = vmatmul.mubr.bf16.gmra.mrb[0].mxu0 %v241
  %v450 = vpop.f32.mrb[0].mxu0
  %v451 = vadd.f32 %v102, %v450
  %v452 = vpop.f32.mrb[0].mxu0
  %v453 = vpop.f32.mrb[0].mxu0
  %v454 = vadd.f32 %v102, %v453
  %v455 = vpop.f32.mrb[0].mxu0
  %456 = vmatprep.mubr.bf16.mxu0 0
  %457 = vmatmul.mubr.bf16.gmra.mrb[0].mxu0 %v242
  %v458 = vpop.f32.mrb[0].mxu0
  %v459 = vadd.f32 %v102, %v458
  %v460 = vpop.f32.mrb[0].mxu0
  %v461 = vpop.f32.mrb[0].mxu0
  %v462 = vadd.f32 %v102, %v461
  %v463 = vpop.f32.mrb[0].mxu0
  %464 = vmatprep.mubr.bf16.mxu0 0
  %465 = vmatmul.mubr.bf16.gmra.mrb[0].mxu0 %v243
  %v466 = vpop.f32.mrb[0].mxu0
  %v467 = vadd.f32 %v102, %v466
  %v468 = vpop.f32.mrb[0].mxu0
  %v469 = vpop.f32.mrb[0].mxu0
  %v470 = vadd.f32 %v102, %v469
  %v471 = vpop.f32.mrb[0].mxu0
  %472 = vmatprep.mubr.bf16.mxu0 0
  %473 = vmatmul.mubr.bf16.gmra.mrb[0].mxu0 %v244
  %v474 = vpop.f32.mrb[0].mxu0
  %v475 = vadd.f32 %v102, %v474
  %v476 = vpop.f32.mrb[0].mxu0
  %v477 = vpop.f32.mrb[0].mxu0
  %v478 = vadd.f32 %v102, %v477
  %v479 = vpop.f32.mrb[0].mxu0
  %480 = vmatprep.mubr.bf16.mxu0 0
  %481 = vmatmul.mubr.bf16.gmra.mrb[0].mxu0 %v245
  %v482 = vpop.f32.mrb[0].mxu0
  %v483 = vadd.f32 %v102, %v482
  %v484 = vpop.f32.mrb[0].mxu0
  %v485 = vpop.f32.mrb[0].mxu0
  %v486 = vadd.f32 %v102, %v485
  %v487 = vpop.f32.mrb[0].mxu0
  %488 = vmatprep.mubr.bf16.mxu0 0
  %489 = vmatmul.mubr.bf16.gmra.mrb[0].mxu0 %v246
  %v490 = vpop.f32.mrb[0].mxu0
  %v491 = vadd.f32 %v102, %v490
  %v492 = vpop.f32.mrb[0].mxu0
  %v493 = vpop.f32.mrb[0].mxu0
  %v494 = vadd.f32 %v102, %v493
  %v495 = vpop.f32.mrb[0].mxu0
  %496 = vmatprep.mubr.bf16.mxu0 0
  %497 = vmatmul.mubr.bf16.gmra.mrb[0].mxu0 %v247
  %v498 = vpop.f32.mrb[0].mxu0
  %v499 = vadd.f32 %v102, %v498
  %v500 = vpop.f32.mrb[0].mxu0
  %v501 = vpop.f32.mrb[0].mxu0
  %v502 = vadd.f32 %v102, %v501
  %v503 = vpop.f32.mrb[0].mxu0
  %504 = vmatprep.mubr.bf16.mxu0 0
  %505 = vmatmul.mubr.bf16.gmra.mrb[0].mxu0 %v248
  %v506 = vpop.f32.mrb[0].mxu0
  %v507 = vadd.f32 %v102, %v506
  %v508 = vpop.f32.mrb[0].mxu0
  %v509 = vpop.f32.mrb[0].mxu0
  %v510 = vadd.f32 %v102, %v509
  %v511 = vpop.f32.mrb[0].mxu0
  %512 = vmatprep.mubr.bf16.mxu0 0
  %513 = vmatmul.mubr.bf16.gmra.mrb[0].mxu0 %v249
  %v514 = vpop.f32.mrb[0].mxu0
  %v515 = vadd.f32 %v102, %v514
  %v516 = vpop.f32.mrb[0].mxu0
  %v517 = vpop.f32.mrb[0].mxu0
  %v518 = vadd.f32 %v102, %v517
  %v519 = vpop.f32.mrb[0].mxu0
  %520 = vmatprep.mubr.bf16.mxu0 0
  %521 = vmatmul.mubr.bf16.gmra.mrb[0].mxu0 %v250
  %v522 = vpop.f32.mrb[0].mxu0
  %v523 = vadd.f32 %v102, %v522
  %v524 = vpop.f32.mrb[0].mxu0
  %v525 = vpop.f32.mrb[0].mxu0
  %v526 = vadd.f32 %v102, %v525
  %v527 = vpop.f32.mrb[0].mxu0
  %528 = vmatprep.mubr.bf16.mxu0 0
  %529 = vmatmul.mubr.bf16.gmra.mrb[0].mxu0 %v251
  %v530 = vpop.f32.mrb[0].mxu0
  %v531 = vadd.f32 %v102, %v530
  %v532 = vpop.f32.mrb[0].mxu0
  %v533 = vpop.f32.mrb[0].mxu0
  %v534 = vadd.f32 %v102, %v533
  %v535 = vpop.f32.mrb[0].mxu0
  %536 = vmatprep.mubr.bf16.mxu0 0
  %537 = vmatmul.mubr.bf16.gmra.mrb[0].mxu0 %v252
  %v538 = vpop.f32.mrb[0].mxu0
  %v539 = vadd.f32 %v102, %v538
  %v540 = vpop.f32.mrb[0].mxu0
  %v541 = vpop.f32.mrb[0].mxu0
  %v542 = vadd.f32 %v102, %v541
  %v543 = vpop.f32.mrb[0].mxu0
  %544 = vmatprep.mubr.bf16.mxu0 0
  %545 = vmatmul.mubr.bf16.gmra.mrb[0].mxu0 %v253
  %v546 = vpop.f32.mrb[0].mxu0
  %v547 = vadd.f32 %v102, %v546
  %v548 = vpop.f32.mrb[0].mxu0
  %v549 = vpop.f32.mrb[0].mxu0
  %v550 = vadd.f32 %v102, %v549
  %v551 = vpop.f32.mrb[0].mxu0
  %552 = vmatprep.mubr.bf16.mxu0 0
  %553 = vmatmul.mubr.bf16.gmra.mrb[0].mxu0 %v254
  %v554 = vpop.f32.mrb[0].mxu0
  %v555 = vadd.f32 %v102, %v554
  %v556 = vpop.f32.mrb[0].mxu0
  %v557 = vpop.f32.mrb[0].mxu0
  %v558 = vadd.f32 %v102, %v557
  %v559 = vpop.f32.mrb[0].mxu0
  %560 = vmatprep.mubr.bf16.mxu0 0
  %561 = vmatmul.mubr.bf16.gmra.mrb[0].mxu0 %v255
  %v562 = vpop.f32.mrb[0].mxu0
  %v563 = vadd.f32 %v102, %v562
  %v564 = vpop.f32.mrb[0].mxu0
  %v565 = vpop.f32.mrb[0].mxu0
  %v566 = vadd.f32 %v102, %v565
  %v567 = vpop.f32.mrb[0].mxu0
  %568 = vmatprep.mubr.bf16.mxu0 0
  %569 = vmatmul.mubr.bf16.gmra.mrb[0].mxu0 %v256
  %v570 = vpop.f32.mrb[0].mxu0
  %v571 = vadd.f32 %v102, %v570
  %v572 = vpop.f32.mrb[0].mxu0
  %v573 = vpop.f32.mrb[0].mxu0
  %v574 = vadd.f32 %v102, %v573
  %v575 = vpop.f32.mrb[0].mxu0
  %576 = vmatprep.mubr.bf16.mxu0 0
  %577 = vmatmul.mubr.bf16.gmra.mrb[0].mxu0 %v257
  %v578 = vpop.f32.mrb[0].mxu0
  %v579 = vadd.f32 %v102, %v578
  %v580 = vpop.f32.mrb[0].mxu0
  %v581 = vpop.f32.mrb[0].mxu0
  %v582 = vadd.f32 %v102, %v581
  %v583 = vpop.f32.mrb[0].mxu0
  %584 = vmatprep.mubr.bf16.mxu0 0
  %585 = vmatmul.mubr.bf16.gmra.mrb[0].mxu0 %v258
  %v586 = vpop.f32.mrb[0].mxu0
  %v587 = vadd.f32 %v102, %v586
  %v588 = vpop.f32.mrb[0].mxu0
  %v589 = vpop.f32.mrb[0].mxu0
  %v590 = vadd.f32 %v102, %v589
  %v591 = vpop.f32.mrb[0].mxu0
  %592 = vmatprep.mubr.bf16.mxu0 0
  %593 = vmatmul.mubr.bf16.gmra.mrb[0].mxu0 %v259
  %v594 = vpop.f32.mrb[0].mxu0
  %v595 = vadd.f32 %v102, %v594
  %v596 = vpop.f32.mrb[0].mxu0
  %v597 = vpop.f32.mrb[0].mxu0
  %v598 = vadd.f32 %v102, %v597
  %v599 = vpop.f32.mrb[0].mxu0
  %600 = vmatprep.mubr.bf16.mxu0 0
  %601 = vmatmul.mubr.bf16.gmra.mrb[0].mxu0 %v260
  %v602 = vpop.f32.mrb[0].mxu0
  %v603 = vadd.f32 %v102, %v602
  %v604 = vpop.f32.mrb[0].mxu0
  %v605 = vpop.f32.mrb[0].mxu0
  %v606 = vadd.f32 %v102, %v605
  %v607 = vpop.f32.mrb[0].mxu0
  %608 = vmatprep.mubr.bf16.mxu0 0
  %609 = vmatmul.mubr.bf16.gmra.mrb[0].mxu0 %v261
  %v610 = vpop.f32.mrb[0].mxu0
  %v611 = vadd.f32 %v102, %v610
  %v612 = vpop.f32.mrb[0].mxu0
  %v613 = vpop.f32.mrb[0].mxu0
  %v614 = vadd.f32 %v102, %v613
  %v615 = vpop.f32.mrb[0].mxu0
  %616 = vmatprep.mubr.bf16.mxu0 0
  %617 = vmatmul.mubr.bf16.gmra.mrb[0].mxu0 %v262
  %v618 = vpop.f32.mrb[0].mxu0
  %v619 = vadd.f32 %v102, %v618
  %v620 = vpop.f32.mrb[0].mxu0
  %v621 = vpop.f32.mrb[0].mxu0
  %v622 = vadd.f32 %v102, %v621
  %v623 = vpop.f32.mrb[0].mxu0
  %624 = vmatprep.mubr.bf16.mxu0 0
  %625 = vmatmul.mubr.bf16.gmra.mrb[0].mxu0 %v263
  %v626 = vpop.f32.mrb[0].mxu0
  %v627 = vadd.f32 %v102, %v626
  %v628 = vpop.f32.mrb[0].mxu0
  %v629 = vpop.f32.mrb[0].mxu0
  %v630 = vadd.f32 %v102, %v629
  %v631 = vpop.f32.mrb[0].mxu0
  %632 = vdwg.mxu0
  %v633 = vadd.f32 %v379, %v382
  %v634 = vadd.f32 %v633, %v387
  %v635 = vadd.f32 %v634, %v390
  %v636 = vadd.f32 %v635, %v395
  %v637 = vadd.f32 %v636, %v398
  %v638 = vadd.f32 %v637, %v403
  %v639 = vadd.f32 %v638, %v406
  %v640 = vadd.f32 %v639, %v411
  %v641 = vadd.f32 %v640, %v414
  %v642 = vadd.f32 %v641, %v419
  %v643 = vadd.f32 %v642, %v422
  %v644 = vadd.f32 %v643, %v427
  %v645 = vadd.f32 %v644, %v430
  %v646 = vadd.f32 %v645, %v435
  %v647 = vadd.f32 %v646, %v438
  %v648 = vadd.f32 %v647, %v443
  %v649 = vadd.f32 %v648, %v446
  %v650 = vadd.f32 %v649, %v451
  %v651 = vadd.f32 %v650, %v454
  %v652 = vadd.f32 %v651, %v459
  %v653 = vadd.f32 %v652, %v462
  %v654 = vadd.f32 %v653, %v467
  %v655 = vadd.f32 %v654, %v470
  %v656 = vadd.f32 %v655, %v475
  %v657 = vadd.f32 %v656, %v478
  %v658 = vadd.f32 %v657, %v483
  %v659 = vadd.f32 %v658, %v486
  %v660 = vadd.f32 %v659, %v491
  %v661 = vadd.f32 %v660, %v494
  %v662 = vadd.f32 %v661, %v499
  %v663 = vadd.f32 %v662, %v502
  %v664 = vadd.f32 %v663, %v507
  %v665 = vadd.f32 %v664, %v510
  %v666 = vadd.f32 %v665, %v515
  %v667 = vadd.f32 %v666, %v518
  %v668 = vadd.f32 %v667, %v523
  %v669 = vadd.f32 %v668, %v526
  %v670 = vadd.f32 %v669, %v531
  %v671 = vadd.f32 %v670, %v534
  %v672 = vadd.f32 %v671, %v539
  %v673 = vadd.f32 %v672, %v542
  %v674 = vadd.f32 %v673, %v547
  %v675 = vadd.f32 %v674, %v550
  %v676 = vadd.f32 %v675, %v555
  %v677 = vadd.f32 %v676, %v558
  %v678 = vadd.f32 %v677, %v563
  %v679 = vadd.f32 %v678, %v566
  %v680 = vadd.f32 %v679, %v571
  %v681 = vadd.f32 %v680, %v574
  %v682 = vadd.f32 %v681, %v579
  %v683 = vadd.f32 %v682, %v582
  %v684 = vadd.f32 %v683, %v587
  %v685 = vadd.f32 %v684, %v590
  %v686 = vadd.f32 %v685, %v595
  %v687 = vadd.f32 %v686, %v598
  %v688 = vadd.f32 %v687, %v603
  %v689 = vadd.f32 %v688, %v606
  %v690 = vadd.f32 %v689, %v611
  %v691 = vadd.f32 %v690, %v614
  %v692 = vadd.f32 %v691, %v619
  %v693 = vadd.f32 %v692, %v622
  %v694 = vadd.f32 %v693, %v627
  %v695 = vadd.f32 %v694, %v630
  %v696 = vrot.slane %v695, 4
  %v697 = vadd.f32 %v695, %v696
  %v698 = vrot.slane %v697, 2
  %v699 = vadd.f32 %v697, %v698
  %v700 = vrot.slane %v699, 1
  %v701 = vadd.f32 %v699, %v700
  %v702 = vmul.f32 %v379, %v379
  %v703 = vmul.f32 %v382, %v382
  %v704 = vmul.f32 %v387, %v387
  %v705 = vmul.f32 %v390, %v390
  %v706 = vmul.f32 %v395, %v395
  %v707 = vmul.f32 %v398, %v398
  %v708 = vmul.f32 %v403, %v403
  %v709 = vmul.f32 %v406, %v406
  %v710 = vmul.f32 %v411, %v411
  %v711 = vmul.f32 %v414, %v414
  %v712 = vmul.f32 %v419, %v419
  %v713 = vmul.f32 %v422, %v422
  %v714 = vmul.f32 %v427, %v427
  %v715 = vmul.f32 %v430, %v430
  %v716 = vmul.f32 %v435, %v435
  %v717 = vmul.f32 %v438, %v438
  %v718 = vmul.f32 %v443, %v443
  %v719 = vmul.f32 %v446, %v446
  %v720 = vmul.f32 %v451, %v451
  %v721 = vmul.f32 %v454, %v454
  %v722 = vmul.f32 %v459, %v459
  %v723 = vmul.f32 %v462, %v462
  %v724 = vmul.f32 %v467, %v467
  %v725 = vmul.f32 %v470, %v470
  %v726 = vmul.f32 %v475, %v475
  %v727 = vmul.f32 %v478, %v478
  %v728 = vmul.f32 %v483, %v483
  %v729 = vmul.f32 %v486, %v486
  %v730 = vmul.f32 %v491, %v491
  %v731 = vmul.f32 %v494, %v494
  %v732 = vmul.f32 %v499, %v499
  %v733 = vmul.f32 %v502, %v502
  %v734 = vmul.f32 %v507, %v507
  %v735 = vmul.f32 %v510, %v510
  %v736 = vmul.f32 %v515, %v515
  %v737 = vmul.f32 %v518, %v518
  %v738 = vmul.f32 %v523, %v523
  %v739 = vmul.f32 %v526, %v526
  %v740 = vmul.f32 %v531, %v531
  %v741 = vmul.f32 %v534, %v534
  %v742 = vmul.f32 %v539, %v539
  %v743 = vmul.f32 %v542, %v542
  %v744 = vmul.f32 %v547, %v547
  %v745 = vmul.f32 %v550, %v550
  %v746 = vmul.f32 %v555, %v555
  %v747 = vmul.f32 %v558, %v558
  %v748 = vmul.f32 %v563, %v563
  %v749 = vmul.f32 %v566, %v566
  %v750 = vmul.f32 %v571, %v571
  %v751 = vmul.f32 %v574, %v574
  %v752 = vmul.f32 %v579, %v579
  %v753 = vmul.f32 %v582, %v582
  %v754 = vmul.f32 %v587, %v587
  %v755 = vmul.f32 %v590, %v590
  %v756 = vmul.f32 %v595, %v595
  %v757 = vmul.f32 %v598, %v598
  %v758 = vmul.f32 %v603, %v603
  %v759 = vmul.f32 %v606, %v606
  %v760 = vmul.f32 %v611, %v611
  %v761 = vmul.f32 %v614, %v614
  %v762 = vmul.f32 %v619, %v619
  %v763 = vmul.f32 %v622, %v622
  %v764 = vmul.f32 %v627, %v627
  %v765 = vmul.f32 %v630, %v630
  %v766 = vadd.f32 %v702, %v703
  %v767 = vadd.f32 %v766, %v704
  %v768 = vadd.f32 %v767, %v705
  %v769 = vadd.f32 %v768, %v706
  %v770 = vadd.f32 %v769, %v707
  %v771 = vadd.f32 %v770, %v708
  %v772 = vadd.f32 %v771, %v709
  %v773 = vadd.f32 %v772, %v710
  %v774 = vadd.f32 %v773, %v711
  %v775 = vadd.f32 %v774, %v712
  %v776 = vadd.f32 %v775, %v713
  %v777 = vadd.f32 %v776, %v714
  %v778 = vadd.f32 %v777, %v715
  %v779 = vadd.f32 %v778, %v716
  %v780 = vadd.f32 %v779, %v717
  %v781 = vadd.f32 %v780, %v718
  %v782 = vadd.f32 %v781, %v719
  %v783 = vadd.f32 %v782, %v720
  %v784 = vadd.f32 %v783, %v721
  %v785 = vadd.f32 %v784, %v722
  %v786 = vadd.f32 %v785, %v723
  %v787 = vadd.f32 %v786, %v724
  %v788 = vadd.f32 %v787, %v725
  %v789 = vadd.f32 %v788, %v726
  %v790 = vadd.f32 %v789, %v727
  %v791 = vadd.f32 %v790, %v728
  %v792 = vadd.f32 %v791, %v729
  %v793 = vadd.f32 %v792, %v730
  %v794 = vadd.f32 %v793, %v731
  %v795 = vadd.f32 %v794, %v732
  %v796 = vadd.f32 %v795, %v733
  %v797 = vadd.f32 %v796, %v734
  %v798 = vadd.f32 %v797, %v735
  %v799 = vadd.f32 %v798, %v736
  %v800 = vadd.f32 %v799, %v737
  %v801 = vadd.f32 %v800, %v738
  %v802 = vadd.f32 %v801, %v739
  %v803 = vadd.f32 %v802, %v740
  %v804 = vadd.f32 %v803, %v741
  %v805 = vadd.f32 %v804, %v742
  %v806 = vadd.f32 %v805, %v743
  %v807 = vadd.f32 %v806, %v744
  %v808 = vadd.f32 %v807, %v745
  %v809 = vadd.f32 %v808, %v746
  %v810 = vadd.f32 %v809, %v747
  %v811 = vadd.f32 %v810, %v748
  %v812 = vadd.f32 %v811, %v749
  %v813 = vadd.f32 %v812, %v750
  %v814 = vadd.f32 %v813, %v751
  %v815 = vadd.f32 %v814, %v752
  %v816 = vadd.f32 %v815, %v753
  %v817 = vadd.f32 %v816, %v754
  %v818 = vadd.f32 %v817, %v755
  %v819 = vadd.f32 %v818, %v756
  %v820 = vadd.f32 %v819, %v757
  %v821 = vadd.f32 %v820, %v758
  %v822 = vadd.f32 %v821, %v759
  %v823 = vadd.f32 %v822, %v760
  %v824 = vadd.f32 %v823, %v761
  %v825 = vadd.f32 %v824, %v762
  %v826 = vadd.f32 %v825, %v763
  %v827 = vadd.f32 %v826, %v764
  %v828 = vadd.f32 %v827, %v765
  %v829 = vrot.slane %v828, 4
  %v830 = vadd.f32 %v828, %v829
  %v831 = vrot.slane %v830, 2
  %v832 = vadd.f32 %v830, %v831
  %v833 = vrot.slane %v832, 1
  %v834 = vadd.f32 %v832, %v833
  %vm835 = vcmask 1040384
  %v836 = vsel %vm835, %v701, %v834
  %vm837 = vcmask 1041408
  %v838 = vsel %vm837, %v836, 0.0
  %839 = vst [vmem:[%s4] sm:$0xff] %v838
  %v840 = vpack.c.bf16 %v382, %v379
  %v841 = vpack.c.bf16 %v390, %v387
  %v842 = vpack.c.bf16 %v398, %v395
  %v843 = vpack.c.bf16 %v406, %v403
  %v844 = vpack.c.bf16 %v414, %v411
  %v845 = vpack.c.bf16 %v422, %v419
  %v846 = vpack.c.bf16 %v430, %v427
  %v847 = vpack.c.bf16 %v438, %v435
  %v848 = vpack.c.bf16 %v446, %v443
  %v849 = vpack.c.bf16 %v454, %v451
  %v850 = vpack.c.bf16 %v462, %v459
  %v851 = vpack.c.bf16 %v470, %v467
  %v852 = vpack.c.bf16 %v478, %v475
  %v853 = vpack.c.bf16 %v486, %v483
  %v854 = vpack.c.bf16 %v494, %v491
  %v855 = vpack.c.bf16 %v502, %v499
  %v856 = vpack.c.bf16 %v510, %v507
  %v857 = vpack.c.bf16 %v518, %v515
  %v858 = vpack.c.bf16 %v526, %v523
  %v859 = vpack.c.bf16 %v534, %v531
  %v860 = vpack.c.bf16 %v542, %v539
  %v861 = vpack.c.bf16 %v550, %v547
  %v862 = vpack.c.bf16 %v558, %v555
  %v863 = vpack.c.bf16 %v566, %v563
  %v864 = vpack.c.bf16 %v574, %v571
  %v865 = vpack.c.bf16 %v582, %v579
  %v866 = vpack.c.bf16 %v590, %v587
  %v867 = vpack.c.bf16 %v598, %v595
  %v868 = vpack.c.bf16 %v606, %v603
  %v869 = vpack.c.bf16 %v614, %v611
  %v870 = vpack.c.bf16 %v622, %v619
  %v871 = vpack.c.bf16 %v630, %v627
  %v904 = vunpack.c.l.b16 %v840
  %v905 = vunpack.c.h.b16 %v840
  %v906 = vunpack.c.l.b16 %v841
  %v907 = vunpack.c.h.b16 %v841
  %v908 = vunpack.c.l.b16 %v842
  %v909 = vunpack.c.h.b16 %v842
  %v910 = vunpack.c.l.b16 %v843
  %v911 = vunpack.c.h.b16 %v843
  %v912 = vunpack.c.l.b16 %v844
  %v913 = vunpack.c.h.b16 %v844
  %v914 = vunpack.c.l.b16 %v845
  %v915 = vunpack.c.h.b16 %v845
  %v916 = vunpack.c.l.b16 %v846
  %v917 = vunpack.c.h.b16 %v846
  %v918 = vunpack.c.l.b16 %v847
  %v919 = vunpack.c.h.b16 %v847
  %v920 = vunpack.c.l.b16 %v848
  %v921 = vunpack.c.h.b16 %v848
  %v922 = vunpack.c.l.b16 %v849
  %v923 = vunpack.c.h.b16 %v849
  %v924 = vunpack.c.l.b16 %v850
  %v925 = vunpack.c.h.b16 %v850
  %v926 = vunpack.c.l.b16 %v851
  %v927 = vunpack.c.h.b16 %v851
  %v928 = vunpack.c.l.b16 %v852
  %v929 = vunpack.c.h.b16 %v852
  %v930 = vunpack.c.l.b16 %v853
  %v931 = vunpack.c.h.b16 %v853
  %v932 = vunpack.c.l.b16 %v854
  %v933 = vunpack.c.h.b16 %v854
  %v934 = vunpack.c.l.b16 %v855
  %v935 = vunpack.c.h.b16 %v855
  %v936 = vunpack.c.l.b16 %v856
  %v937 = vunpack.c.h.b16 %v856
  %v938 = vunpack.c.l.b16 %v857
  %v939 = vunpack.c.h.b16 %v857
  %v940 = vunpack.c.l.b16 %v858
  %v941 = vunpack.c.h.b16 %v858
  %v942 = vunpack.c.l.b16 %v859
  %v943 = vunpack.c.h.b16 %v859
  %v944 = vunpack.c.l.b16 %v860
  %v945 = vunpack.c.h.b16 %v860
  %v946 = vunpack.c.l.b16 %v861
  %v947 = vunpack.c.h.b16 %v861
  %v948 = vunpack.c.l.b16 %v862
  %v949 = vunpack.c.h.b16 %v862
  %v950 = vunpack.c.l.b16 %v863
  %v951 = vunpack.c.h.b16 %v863
  %v952 = vunpack.c.l.b16 %v864
  %v953 = vunpack.c.h.b16 %v864
  %v954 = vunpack.c.l.b16 %v865
  %v955 = vunpack.c.h.b16 %v865
  %v956 = vunpack.c.l.b16 %v866
  %v957 = vunpack.c.h.b16 %v866
  %v958 = vunpack.c.l.b16 %v867
  %v959 = vunpack.c.h.b16 %v867
  %v960 = vunpack.c.l.b16 %v868
  %v961 = vunpack.c.h.b16 %v868
  %v962 = vunpack.c.l.b16 %v869
  %v963 = vunpack.c.h.b16 %v869
  %v964 = vunpack.c.l.b16 %v870
  %v965 = vunpack.c.h.b16 %v870
  %v966 = vunpack.c.l.b16 %v871
  %v967 = vunpack.c.h.b16 %v871
  %v968 = vpack.c.b16 %v904, %v904
  %v969 = vpack.c.b16 %v905, %v905
  %v970 = vpack.c.b16 %v906, %v906
  %v971 = vpack.c.b16 %v907, %v907
  %v972 = vpack.c.b16 %v908, %v908
  %v973 = vpack.c.b16 %v909, %v909
  %v974 = vpack.c.b16 %v910, %v910
  %v975 = vpack.c.b16 %v911, %v911
  %v976 = vpack.c.b16 %v912, %v912
  %v977 = vpack.c.b16 %v913, %v913
  %v978 = vpack.c.b16 %v914, %v914
  %v979 = vpack.c.b16 %v915, %v915
  %v980 = vpack.c.b16 %v916, %v916
  %v981 = vpack.c.b16 %v917, %v917
  %v982 = vpack.c.b16 %v918, %v918
  %v983 = vpack.c.b16 %v919, %v919
  %v984 = vpack.c.b16 %v920, %v920
  %v985 = vpack.c.b16 %v921, %v921
  %v986 = vpack.c.b16 %v922, %v922
  %v987 = vpack.c.b16 %v923, %v923
  %v988 = vpack.c.b16 %v924, %v924
  %v989 = vpack.c.b16 %v925, %v925
  %v990 = vpack.c.b16 %v926, %v926
  %v991 = vpack.c.b16 %v927, %v927
  %v992 = vpack.c.b16 %v928, %v928
  %v993 = vpack.c.b16 %v929, %v929
  %v994 = vpack.c.b16 %v930, %v930
  %v995 = vpack.c.b16 %v931, %v931
  %v996 = vpack.c.b16 %v932, %v932
  %v997 = vpack.c.b16 %v933, %v933
  %v998 = vpack.c.b16 %v934, %v934
  %v999 = vpack.c.b16 %v935, %v935
  %v1000 = vpack.c.b16 %v936, %v936
  %v1001 = vpack.c.b16 %v937, %v937
  %v1002 = vpack.c.b16 %v938, %v938
  %v1003 = vpack.c.b16 %v939, %v939
  %v1004 = vpack.c.b16 %v940, %v940
  %v1005 = vpack.c.b16 %v941, %v941
  %v1006 = vpack.c.b16 %v942, %v942
  %v1007 = vpack.c.b16 %v943, %v943
  %v1008 = vpack.c.b16 %v944, %v944
  %v1009 = vpack.c.b16 %v945, %v945
  %v1010 = vpack.c.b16 %v946, %v946
  %v1011 = vpack.c.b16 %v947, %v947
  %v1012 = vpack.c.b16 %v948, %v948
  %v1013 = vpack.c.b16 %v949, %v949
  %v1014 = vpack.c.b16 %v950, %v950
  %v1015 = vpack.c.b16 %v951, %v951
  %v1016 = vpack.c.b16 %v952, %v952
  %v1017 = vpack.c.b16 %v953, %v953
  %v1018 = vpack.c.b16 %v954, %v954
  %v1019 = vpack.c.b16 %v955, %v955
  %v1020 = vpack.c.b16 %v956, %v956
  %v1021 = vpack.c.b16 %v957, %v957
  %v1022 = vpack.c.b16 %v958, %v958
  %v1023 = vpack.c.b16 %v959, %v959
  %v1024 = vpack.c.b16 %v960, %v960
  %v1025 = vpack.c.b16 %v961, %v961
  %v1026 = vpack.c.b16 %v962, %v962
  %v1027 = vpack.c.b16 %v963, %v963
  %v1028 = vpack.c.b16 %v964, %v964
  %v1029 = vpack.c.b16 %v965, %v965
  %v1030 = vpack.c.b16 %v966, %v966
  %v1031 = vpack.c.b16 %v967, %v967
  %1096 = vst [vmem:[%s3] sm:$0xf] %v968
  %1097 = vst [vmem:[%s3 + $0x4] sm:$0xf] %v969
  %1098 = vst [vmem:[%s3 + $0x8] sm:$0xf] %v970
  %1099 = vst [vmem:[%s3 + $0xc] sm:$0xf] %v971
  %1100 = vst [vmem:[%s3 + $0x10] sm:$0xf] %v972
  %1101 = vst [vmem:[%s3 + $0x14] sm:$0xf] %v973
  %1102 = vst [vmem:[%s3 + $0x18] sm:$0xf] %v974
  %1103 = vst [vmem:[%s3 + $0x1c] sm:$0xf] %v975
  %1104 = vst [vmem:[%s3 + $0x20] sm:$0xf] %v976
  %1105 = vst [vmem:[%s3 + $0x24] sm:$0xf] %v977
  %1106 = vst [vmem:[%s3 + $0x28] sm:$0xf] %v978
  %1107 = vst [vmem:[%s3 + $0x2c] sm:$0xf] %v979
  %1108 = vst [vmem:[%s3 + $0x30] sm:$0xf] %v980
  %1109 = vst [vmem:[%s3 + $0x34] sm:$0xf] %v981
  %1110 = vst [vmem:[%s3 + $0x38] sm:$0xf] %v982
  %1111 = vst [vmem:[%s3 + $0x3c] sm:$0xf] %v983
  %1112 = vst [vmem:[%s3 + $0x40] sm:$0xf] %v984
  %1113 = vst [vmem:[%s3 + $0x44] sm:$0xf] %v985
  %1114 = vst [vmem:[%s3 + $0x48] sm:$0xf] %v986
  %1115 = vst [vmem:[%s3 + $0x4c] sm:$0xf] %v987
  %1116 = vst [vmem:[%s3 + $0x50] sm:$0xf] %v988
  %1117 = vst [vmem:[%s3 + $0x54] sm:$0xf] %v989
  %1118 = vst [vmem:[%s3 + $0x58] sm:$0xf] %v990
  %1119 = vst [vmem:[%s3 + $0x5c] sm:$0xf] %v991
  %1120 = vst [vmem:[%s3 + $0x60] sm:$0xf] %v992
  %1121 = vst [vmem:[%s3 + $0x64] sm:$0xf] %v993
  %1122 = vst [vmem:[%s3 + $0x68] sm:$0xf] %v994
  %1123 = vst [vmem:[%s3 + $0x6c] sm:$0xf] %v995
  %1124 = vst [vmem:[%s3 + $0x70] sm:$0xf] %v996
  %1125 = vst [vmem:[%s3 + $0x74] sm:$0xf] %v997
  %1126 = vst [vmem:[%s3 + $0x78] sm:$0xf] %v998
  %1127 = vst [vmem:[%s3 + $0x7c] sm:$0xf] %v999
  %1128 = vst [vmem:[%s3 + $0x80] sm:$0xf] %v1000
  %1129 = vst [vmem:[%s3 + $0x84] sm:$0xf] %v1001
  %1130 = vst [vmem:[%s3 + $0x88] sm:$0xf] %v1002
  %1131 = vst [vmem:[%s3 + $0x8c] sm:$0xf] %v1003
  %1132 = vst [vmem:[%s3 + $0x90] sm:$0xf] %v1004
  %1133 = vst [vmem:[%s3 + $0x94] sm:$0xf] %v1005
  %1134 = vst [vmem:[%s3 + $0x98] sm:$0xf] %v1006
  %1135 = vst [vmem:[%s3 + $0x9c] sm:$0xf] %v1007
  %1136 = vst [vmem:[%s3 + $0xa0] sm:$0xf] %v1008
  %1137 = vst [vmem:[%s3 + $0xa4] sm:$0xf] %v1009
  %1138 = vst [vmem:[%s3 + $0xa8] sm:$0xf] %v1010
  %1139 = vst [vmem:[%s3 + $0xac] sm:$0xf] %v1011
  %1140 = vst [vmem:[%s3 + $0xb0] sm:$0xf] %v1012
  %1141 = vst [vmem:[%s3 + $0xb4] sm:$0xf] %v1013
  %1142 = vst [vmem:[%s3 + $0xb8] sm:$0xf] %v1014
  %1143 = vst [vmem:[%s3 + $0xbc] sm:$0xf] %v1015
  %1144 = vst [vmem:[%s3 + $0xc0] sm:$0xf] %v1016
  %1145 = vst [vmem:[%s3 + $0xc4] sm:$0xf] %v1017
  %1146 = vst [vmem:[%s3 + $0xc8] sm:$0xf] %v1018
  %1147 = vst [vmem:[%s3 + $0xcc] sm:$0xf] %v1019
  %1148 = vst [vmem:[%s3 + $0xd0] sm:$0xf] %v1020
  %1149 = vst [vmem:[%s3 + $0xd4] sm:$0xf] %v1021
  %1150 = vst [vmem:[%s3 + $0xd8] sm:$0xf] %v1022
  %1151 = vst [vmem:[%s3 + $0xdc] sm:$0xf] %v1023
  %1152 = vst [vmem:[%s3 + $0xe0] sm:$0xf] %v1024
  %1153 = vst [vmem:[%s3 + $0xe4] sm:$0xf] %v1025
  %1154 = vst [vmem:[%s3 + $0xe8] sm:$0xf] %v1026
  %1155 = vst [vmem:[%s3 + $0xec] sm:$0xf] %v1027
  %1156 = vst [vmem:[%s3 + $0xf0] sm:$0xf] %v1028
  %1157 = vst [vmem:[%s3 + $0xf4] sm:$0xf] %v1029
  %1158 = vst [vmem:[%s3 + $0xf8] sm:$0xf] %v1030
  %1159 = vst [vmem:[%s3 + $0xfc] sm:$0xf] %v1031
  // Predicated region
  $region14: #{mbe_block_forward.5} parent=0 // pred_check
    _
  $region15: #{mbe_block_forward.5} parent=0 // pred_check_branch
    %1161 = sbr.rel (0) target = $region17
  $region16: #{mbe_block_forward.5} parent=0 // pred_region
    _
  $region17: #{mbe_block_forward.5} parent=0 // pred_fallthru
    _
  // Predicated region
  $region18: #{mbe_block_forward.5} parent=0 // pred_check
    _
  $region19: #{mbe_block_forward.5} parent=0 // pred_check_branch
    %1163 = sbr.rel (0) target = $region21
  $region20: #{mbe_block_forward.5} parent=0 // pred_region
    _
  $region21: #{mbe_block_forward.5} parent=0 // pred_fallthru
    _
  // Predicated region
  $region22: #{mbe_block_forward.5} parent=0 // pred_check
    _
  $region23: #{mbe_block_forward.5} parent=0 // pred_check_branch
    %1165 = sbr.rel (0) target = $region25
  $region24: #{mbe_block_forward.5} parent=0 // pred_region
    _
  $region25: #{mbe_block_forward.5} parent=0 // pred_fallthru
    _
  // Predicated region
  $region26: #{mbe_block_forward.5} parent=0 // pred_check
    _
  $region27: #{mbe_block_forward.5} parent=0 // pred_check_branch
    %1167 = sbr.rel (0) target = $region29
  $region28: #{mbe_block_forward.5} parent=0 // pred_region
    _
  $region29: #{mbe_block_forward.5} parent=0 // pred_fallthru
    _

// kernel: mbe_block_forward.6
$region0: #{mbe_block_forward.6}
  #allocation0 [shape = 'u32[]', space=smem, size = 0x4, offset = 0x4, fixed_abs, tag = 'smem constant byte address 0x4 - core index']
  #allocation1 [shape = 'u32[144,128]{1,0:T(1,128)}', space=vmem, size = 0x12000, scoped, tag = 'internal scratch']
  %s0 = inlined_call_operand.vmem [shape: bf16[512,256], index: 0, kind: input, shape index: {}]
  %s1 = inlined_call_operand.vmem [shape: bf16[256,128], index: 1, kind: input, shape index: {}]
  %s2 = inlined_call_operand.vmem [shape: f32[1,128], index: 2, kind: input, shape index: {}]
  %s3 = inlined_call_operand.vmem [shape: bf16[512,128], index: 3, kind: output, shape index: {0}]
  %s4 = inlined_call_operand.vmem [shape: f32[1,8,128], index: 4, kind: output, shape index: {1}]
  %5 = xla_tuple %s3, %s4
  %s6 = sld [smem:[#allocation0]]
  $region30: #{mbe_block_forward.6} parent=0
    _
  %s8 = ssub.s32 1, %s6
  %s9 = scalar_select 0, %s8, %s6
  // Predicated region
  $region2: #{mbe_block_forward.6} parent=0 // pred_check
    _
  $region3: #{mbe_block_forward.6} parent=0 // pred_check_branch
    %11 = sbr.rel (0) target = $region5
  $region4: #{mbe_block_forward.6} parent=0 // pred_region
    _
  $region5: #{mbe_block_forward.6} parent=0 // pred_fallthru
    _
  // Predicated region
  $region6: #{mbe_block_forward.6} parent=0 // pred_check
    _
  $region7: #{mbe_block_forward.6} parent=0 // pred_check_branch
    %13 = sbr.rel (0) target = $region9
  $region8: #{mbe_block_forward.6} parent=0 // pred_region
    _
  $region9: #{mbe_block_forward.6} parent=0 // pred_fallthru
    _
  // Predicated region
  $region10: #{mbe_block_forward.6} parent=0 // pred_check
    _
  $region11: #{mbe_block_forward.6} parent=0 // pred_check_branch
    %15 = sbr.rel (0) target = $region13
  $region12: #{mbe_block_forward.6} parent=0 // pred_region
    _
  $region13: #{mbe_block_forward.6} parent=0 // pred_fallthru
    _
  %v17 = vld [vmem:[%s0] sm:$0xff]
  %v18 = vld [vmem:[%s0 + $0x8] sm:$0xff]
  %v19 = vld [vmem:[%s0 + $0x10] sm:$0xff]
  %v20 = vld [vmem:[%s0 + $0x18] sm:$0xff]
  %v21 = vld [vmem:[%s0 + $0x20] sm:$0xff]
  %v22 = vld [vmem:[%s0 + $0x28] sm:$0xff]
  %v23 = vld [vmem:[%s0 + $0x30] sm:$0xff]
  %v24 = vld [vmem:[%s0 + $0x38] sm:$0xff]
  %v25 = vld [vmem:[%s0 + $0x40] sm:$0xff]
  %v26 = vld [vmem:[%s0 + $0x48] sm:$0xff]
  %v27 = vld [vmem:[%s0 + $0x50] sm:$0xff]
  %v28 = vld [vmem:[%s0 + $0x58] sm:$0xff]
  %v29 = vld [vmem:[%s0 + $0x60] sm:$0xff]
  %v30 = vld [vmem:[%s0 + $0x68] sm:$0xff]
  %v31 = vld [vmem:[%s0 + $0x70] sm:$0xff]
  %v32 = vld [vmem:[%s0 + $0x78] sm:$0xff]
  %v33 = vld [vmem:[%s0 + $0x80] sm:$0xff]
  %v34 = vld [vmem:[%s0 + $0x88] sm:$0xff]
  %v35 = vld [vmem:[%s0 + $0x90] sm:$0xff]
  %v36 = vld [vmem:[%s0 + $0x98] sm:$0xff]
  %v37 = vld [vmem:[%s0 + $0xa0] sm:$0xff]
  %v38 = vld [vmem:[%s0 + $0xa8] sm:$0xff]
  %v39 = vld [vmem:[%s0 + $0xb0] sm:$0xff]
  %v40 = vld [vmem:[%s0 + $0xb8] sm:$0xff]
  %v41 = vld [vmem:[%s0 + $0xc0] sm:$0xff]
  %v42 = vld [vmem:[%s0 + $0xc8] sm:$0xff]
  %v43 = vld [vmem:[%s0 + $0xd0] sm:$0xff]
  %v44 = vld [vmem:[%s0 + $0xd8] sm:$0xff]
  %v45 = vld [vmem:[%s0 + $0xe0] sm:$0xff]
  %v46 = vld [vmem:[%s0 + $0xe8] sm:$0xff]
  %v47 = vld [vmem:[%s0 + $0xf0] sm:$0xff]
  %v48 = vld [vmem:[%s0 + $0xf8] sm:$0xff]
  %v49 = vld [vmem:[%s0 + $0x100] sm:$0xff]
  %v50 = vld [vmem:[%s0 + $0x108] sm:$0xff]
  %v51 = vld [vmem:[%s0 + $0x110] sm:$0xff]
  %v52 = vld [vmem:[%s0 + $0x118] sm:$0xff]
  %v53 = vld [vmem:[%s0 + $0x120] sm:$0xff]
  %v54 = vld [vmem:[%s0 + $0x128] sm:$0xff]
  %v55 = vld [vmem:[%s0 + $0x130] sm:$0xff]
  %v56 = vld [vmem:[%s0 + $0x138] sm:$0xff]
  %v57 = vld [vmem:[%s0 + $0x140] sm:$0xff]
  %v58 = vld [vmem:[%s0 + $0x148] sm:$0xff]
  %v59 = vld [vmem:[%s0 + $0x150] sm:$0xff]
  %v60 = vld [vmem:[%s0 + $0x158] sm:$0xff]
  %v61 = vld [vmem:[%s0 + $0x160] sm:$0xff]
  %v62 = vld [vmem:[%s0 + $0x168] sm:$0xff]
  %v63 = vld [vmem:[%s0 + $0x170] sm:$0xff]
  %v64 = vld [vmem:[%s0 + $0x178] sm:$0xff]
  %v65 = vld [vmem:[%s0 + $0x180] sm:$0xff]
  %v66 = vld [vmem:[%s0 + $0x188] sm:$0xff]
  %v67 = vld [vmem:[%s0 + $0x190] sm:$0xff]
  %v68 = vld [vmem:[%s0 + $0x198] sm:$0xff]
  %v69 = vld [vmem:[%s0 + $0x1a0] sm:$0xff]
  %v70 = vld [vmem:[%s0 + $0x1a8] sm:$0xff]
  %v71 = vld [vmem:[%s0 + $0x1b0] sm:$0xff]
  %v72 = vld [vmem:[%s0 + $0x1b8] sm:$0xff]
  %v73 = vld [vmem:[%s0 + $0x1c0] sm:$0xff]
  %v74 = vld [vmem:[%s0 + $0x1c8] sm:$0xff]
  %v75 = vld [vmem:[%s0 + $0x1d0] sm:$0xff]
  %v76 = vld [vmem:[%s0 + $0x1d8] sm:$0xff]
  %v77 = vld [vmem:[%s0 + $0x1e0] sm:$0xff]
  %v78 = vld [vmem:[%s0 + $0x1e8] sm:$0xff]
  %v79 = vld [vmem:[%s0 + $0x1f0] sm:$0xff]
  %v80 = vld [vmem:[%s0 + $0x1f8] sm:$0xff]
  %v81 = vld [vmem:[%s1] sm:$0xf]
  %v82 = vld [vmem:[%s1 + $0x4] sm:$0xf]
  %v83 = vld [vmem:[%s1 + $0x8] sm:$0xf]
  %v84 = vld [vmem:[%s1 + $0xc] sm:$0xf]
  %v85 = vld [vmem:[%s1 + $0x10] sm:$0xf]
  %v86 = vld [vmem:[%s1 + $0x14] sm:$0xf]
  %v87 = vld [vmem:[%s1 + $0x18] sm:$0xf]
  %v88 = vld [vmem:[%s1 + $0x1c] sm:$0xf]
  %v89 = vld [vmem:[%s1 + $0x20] sm:$0xf]
  %v90 = vld [vmem:[%s1 + $0x24] sm:$0xf]
  %v91 = vld [vmem:[%s1 + $0x28] sm:$0xf]
  %v92 = vld [vmem:[%s1 + $0x2c] sm:$0xf]
  %v93 = vld [vmem:[%s1 + $0x30] sm:$0xf]
  %v94 = vld [vmem:[%s1 + $0x34] sm:$0xf]
  %v95 = vld [vmem:[%s1 + $0x38] sm:$0xf]
  %v96 = vld [vmem:[%s1 + $0x3c] sm:$0xf]
  %v97 = vld [vmem:[%s1 + $0x40] sm:$0xf]
  %v98 = vld [vmem:[%s1 + $0x44] sm:$0xf]
  %v99 = vld [vmem:[%s1 + $0x48] sm:$0xf]
  %v100 = vld [vmem:[%s1 + $0x4c] sm:$0xf]
  %v101 = vld [vmem:[%s1 + $0x50] sm:$0xf]
  %v102 = vld [vmem:[%s1 + $0x54] sm:$0xf]
  %v103 = vld [vmem:[%s1 + $0x58] sm:$0xf]
  %v104 = vld [vmem:[%s1 + $0x5c] sm:$0xf]
  %v105 = vld [vmem:[%s1 + $0x60] sm:$0xf]
  %v106 = vld [vmem:[%s1 + $0x64] sm:$0xf]
  %v107 = vld [vmem:[%s1 + $0x68] sm:$0xf]
  %v108 = vld [vmem:[%s1 + $0x6c] sm:$0xf]
  %v109 = vld [vmem:[%s1 + $0x70] sm:$0xf]
  %v110 = vld [vmem:[%s1 + $0x74] sm:$0xf]
  %v111 = vld [vmem:[%s1 + $0x78] sm:$0xf]
  %v112 = vld [vmem:[%s1 + $0x7c] sm:$0xf]
  %v113 = vld [vmem:[%s2] sm:$0x1]
  %v115 = vlaneseq
  %v116 = vshrl.u32 %v115, 7
  %v117 = vsub.s32 0, %v116
  %v118 = vrot.slane %v113, %v117
  %v184 = vunpack.c.l.b16 %v17
  %v185 = vunpack.c.h.b16 %v17
  %v186 = vunpack.c.l.b16 %v18
  %v187 = vunpack.c.h.b16 %v18
  %v188 = vunpack.c.l.b16 %v19
  %v189 = vunpack.c.h.b16 %v19
  %v190 = vunpack.c.l.b16 %v20
  %v191 = vunpack.c.h.b16 %v20
  %v192 = vunpack.c.l.b16 %v21
  %v193 = vunpack.c.h.b16 %v21
  %v194 = vunpack.c.l.b16 %v22
  %v195 = vunpack.c.h.b16 %v22
  %v196 = vunpack.c.l.b16 %v23
  %v197 = vunpack.c.h.b16 %v23
  %v198 = vunpack.c.l.b16 %v24
  %v199 = vunpack.c.h.b16 %v24
  %v200 = vunpack.c.l.b16 %v25
  %v201 = vunpack.c.h.b16 %v25
  %v202 = vunpack.c.l.b16 %v26
  %v203 = vunpack.c.h.b16 %v26
  %v204 = vunpack.c.l.b16 %v27
  %v205 = vunpack.c.h.b16 %v27
  %v206 = vunpack.c.l.b16 %v28
  %v207 = vunpack.c.h.b16 %v28
  %v208 = vunpack.c.l.b16 %v29
  %v209 = vunpack.c.h.b16 %v29
  %v210 = vunpack.c.l.b16 %v30
  %v211 = vunpack.c.h.b16 %v30
  %v212 = vunpack.c.l.b16 %v31
  %v213 = vunpack.c.h.b16 %v31
  %v214 = vunpack.c.l.b16 %v32
  %v215 = vunpack.c.h.b16 %v32
  %v216 = vunpack.c.l.b16 %v33
  %v217 = vunpack.c.h.b16 %v33
  %v218 = vunpack.c.l.b16 %v34
  %v219 = vunpack.c.h.b16 %v34
  %v220 = vunpack.c.l.b16 %v35
  %v221 = vunpack.c.h.b16 %v35
  %v222 = vunpack.c.l.b16 %v36
  %v223 = vunpack.c.h.b16 %v36
  %v224 = vunpack.c.l.b16 %v37
  %v225 = vunpack.c.h.b16 %v37
  %v226 = vunpack.c.l.b16 %v38
  %v227 = vunpack.c.h.b16 %v38
  %v228 = vunpack.c.l.b16 %v39
  %v229 = vunpack.c.h.b16 %v39
  %v230 = vunpack.c.l.b16 %v40
  %v231 = vunpack.c.h.b16 %v40
  %v232 = vunpack.c.l.b16 %v41
  %v233 = vunpack.c.h.b16 %v41
  %v234 = vunpack.c.l.b16 %v42
  %v235 = vunpack.c.h.b16 %v42
  %v236 = vunpack.c.l.b16 %v43
  %v237 = vunpack.c.h.b16 %v43
  %v238 = vunpack.c.l.b16 %v44
  %v239 = vunpack.c.h.b16 %v44
  %v240 = vunpack.c.l.b16 %v45
  %v241 = vunpack.c.h.b16 %v45
  %v242 = vunpack.c.l.b16 %v46
  %v243 = vunpack.c.h.b16 %v46
  %v244 = vunpack.c.l.b16 %v47
  %v245 = vunpack.c.h.b16 %v47
  %v246 = vunpack.c.l.b16 %v48
  %v247 = vunpack.c.h.b16 %v48
  %v248 = vunpack.c.l.b16 %v49
  %v249 = vunpack.c.h.b16 %v49
  %v250 = vunpack.c.l.b16 %v50
  %v251 = vunpack.c.h.b16 %v50
  %v252 = vunpack.c.l.b16 %v51
  %v253 = vunpack.c.h.b16 %v51
  %v254 = vunpack.c.l.b16 %v52
  %v255 = vunpack.c.h.b16 %v52
  %v256 = vunpack.c.l.b16 %v53
  %v257 = vunpack.c.h.b16 %v53
  %v258 = vunpack.c.l.b16 %v54
  %v259 = vunpack.c.h.b16 %v54
  %v260 = vunpack.c.l.b16 %v55
  %v261 = vunpack.c.h.b16 %v55
  %v262 = vunpack.c.l.b16 %v56
  %v263 = vunpack.c.h.b16 %v56
  %v264 = vunpack.c.l.b16 %v57
  %v265 = vunpack.c.h.b16 %v57
  %v266 = vunpack.c.l.b16 %v58
  %v267 = vunpack.c.h.b16 %v58
  %v268 = vunpack.c.l.b16 %v59
  %v269 = vunpack.c.h.b16 %v59
  %v270 = vunpack.c.l.b16 %v60
  %v271 = vunpack.c.h.b16 %v60
  %v272 = vunpack.c.l.b16 %v61
  %v273 = vunpack.c.h.b16 %v61
  %v274 = vunpack.c.l.b16 %v62
  %v275 = vunpack.c.h.b16 %v62
  %v276 = vunpack.c.l.b16 %v63
  %v277 = vunpack.c.h.b16 %v63
  %v278 = vunpack.c.l.b16 %v64
  %v279 = vunpack.c.h.b16 %v64
  %v280 = vunpack.c.l.b16 %v65
  %v281 = vunpack.c.h.b16 %v65
  %v282 = vunpack.c.l.b16 %v66
  %v283 = vunpack.c.h.b16 %v66
  %v284 = vunpack.c.l.b16 %v67
  %v285 = vunpack.c.h.b16 %v67
  %v286 = vunpack.c.l.b16 %v68
  %v287 = vunpack.c.h.b16 %v68
  %v288 = vunpack.c.l.b16 %v69
  %v289 = vunpack.c.h.b16 %v69
  %v290 = vunpack.c.l.b16 %v70
  %v291 = vunpack.c.h.b16 %v70
  %v292 = vunpack.c.l.b16 %v71
  %v293 = vunpack.c.h.b16 %v71
  %v294 = vunpack.c.l.b16 %v72
  %v295 = vunpack.c.h.b16 %v72
  %v296 = vunpack.c.l.b16 %v73
  %v297 = vunpack.c.h.b16 %v73
  %v298 = vunpack.c.l.b16 %v74
  %v299 = vunpack.c.h.b16 %v74
  %v300 = vunpack.c.l.b16 %v75
  %v301 = vunpack.c.h.b16 %v75
  %v302 = vunpack.c.l.b16 %v76
  %v303 = vunpack.c.h.b16 %v76
  %v304 = vunpack.c.l.b16 %v77
  %v305 = vunpack.c.h.b16 %v77
  %v306 = vunpack.c.l.b16 %v78
  %v307 = vunpack.c.h.b16 %v78
  %v308 = vunpack.c.l.b16 %v79
  %v309 = vunpack.c.h.b16 %v79
  %v310 = vunpack.c.l.b16 %v80
  %v311 = vunpack.c.h.b16 %v80
  %v312 = vpack.c.b16 %v186, %v184
  %v313 = vpack.c.b16 %v187, %v185
  %v314 = vpack.c.b16 %v190, %v188
  %v315 = vpack.c.b16 %v191, %v189
  %v316 = vpack.c.b16 %v194, %v192
  %v317 = vpack.c.b16 %v195, %v193
  %v318 = vpack.c.b16 %v198, %v196
  %v319 = vpack.c.b16 %v199, %v197
  %v320 = vpack.c.b16 %v202, %v200
  %v321 = vpack.c.b16 %v203, %v201
  %v322 = vpack.c.b16 %v206, %v204
  %v323 = vpack.c.b16 %v207, %v205
  %v324 = vpack.c.b16 %v210, %v208
  %v325 = vpack.c.b16 %v211, %v209
  %v326 = vpack.c.b16 %v214, %v212
  %v327 = vpack.c.b16 %v215, %v213
  %v328 = vpack.c.b16 %v218, %v216
  %v329 = vpack.c.b16 %v219, %v217
  %v330 = vpack.c.b16 %v222, %v220
  %v331 = vpack.c.b16 %v223, %v221
  %v332 = vpack.c.b16 %v226, %v224
  %v333 = vpack.c.b16 %v227, %v225
  %v334 = vpack.c.b16 %v230, %v228
  %v335 = vpack.c.b16 %v231, %v229
  %v336 = vpack.c.b16 %v234, %v232
  %v337 = vpack.c.b16 %v235, %v233
  %v338 = vpack.c.b16 %v238, %v236
  %v339 = vpack.c.b16 %v239, %v237
  %v340 = vpack.c.b16 %v242, %v240
  %v341 = vpack.c.b16 %v243, %v241
  %v342 = vpack.c.b16 %v246, %v244
  %v343 = vpack.c.b16 %v247, %v245
  %v344 = vpack.c.b16 %v250, %v248
  %v345 = vpack.c.b16 %v251, %v249
  %v346 = vpack.c.b16 %v254, %v252
  %v347 = vpack.c.b16 %v255, %v253
  %v348 = vpack.c.b16 %v258, %v256
  %v349 = vpack.c.b16 %v259, %v257
  %v350 = vpack.c.b16 %v262, %v260
  %v351 = vpack.c.b16 %v263, %v261
  %v352 = vpack.c.b16 %v266, %v264
  %v353 = vpack.c.b16 %v267, %v265
  %v354 = vpack.c.b16 %v270, %v268
  %v355 = vpack.c.b16 %v271, %v269
  %v356 = vpack.c.b16 %v274, %v272
  %v357 = vpack.c.b16 %v275, %v273
  %v358 = vpack.c.b16 %v278, %v276
  %v359 = vpack.c.b16 %v279, %v277
  %v360 = vpack.c.b16 %v282, %v280
  %v361 = vpack.c.b16 %v283, %v281
  %v362 = vpack.c.b16 %v286, %v284
  %v363 = vpack.c.b16 %v287, %v285
  %v364 = vpack.c.b16 %v290, %v288
  %v365 = vpack.c.b16 %v291, %v289
  %v366 = vpack.c.b16 %v294, %v292
  %v367 = vpack.c.b16 %v295, %v293
  %v368 = vpack.c.b16 %v298, %v296
  %v369 = vpack.c.b16 %v299, %v297
  %v370 = vpack.c.b16 %v302, %v300
  %v371 = vpack.c.b16 %v303, %v301
  %v372 = vpack.c.b16 %v306, %v304
  %v373 = vpack.c.b16 %v307, %v305
  %v374 = vpack.c.b16 %v310, %v308
  %v375 = vpack.c.b16 %v311, %v309
  %v472 = vunpack.c.l.b16 %v81
  %v473 = vunpack.c.l.b16 %v82
  %v474 = vunpack.c.l.b16 %v83
  %v475 = vunpack.c.l.b16 %v84
  %v476 = vunpack.c.l.b16 %v85
  %v477 = vunpack.c.l.b16 %v86
  %v478 = vunpack.c.l.b16 %v87
  %v479 = vunpack.c.l.b16 %v88
  %v480 = vunpack.c.l.b16 %v89
  %v481 = vunpack.c.l.b16 %v90
  %v482 = vunpack.c.l.b16 %v91
  %v483 = vunpack.c.l.b16 %v92
  %v484 = vunpack.c.l.b16 %v93
  %v485 = vunpack.c.l.b16 %v94
  %v486 = vunpack.c.l.b16 %v95
  %v487 = vunpack.c.l.b16 %v96
  %v488 = vunpack.c.l.b16 %v97
  %v489 = vunpack.c.l.b16 %v98
  %v490 = vunpack.c.l.b16 %v99
  %v491 = vunpack.c.l.b16 %v100
  %v492 = vunpack.c.l.b16 %v101
  %v493 = vunpack.c.l.b16 %v102
  %v494 = vunpack.c.l.b16 %v103
  %v495 = vunpack.c.l.b16 %v104
  %v496 = vunpack.c.l.b16 %v105
  %v497 = vunpack.c.l.b16 %v106
  %v498 = vunpack.c.l.b16 %v107
  %v499 = vunpack.c.l.b16 %v108
  %v500 = vunpack.c.l.b16 %v109
  %v501 = vunpack.c.l.b16 %v110
  %v502 = vunpack.c.l.b16 %v111
  %v503 = vunpack.c.l.b16 %v112
  %v504 = vpack.c.b16 %v473, %v472
  %v505 = vpack.c.b16 %v475, %v474
  %v506 = vpack.c.b16 %v477, %v476
  %v507 = vpack.c.b16 %v479, %v478
  %v508 = vpack.c.b16 %v481, %v480
  %v509 = vpack.c.b16 %v483, %v482
  %v510 = vpack.c.b16 %v485, %v484
  %v511 = vpack.c.b16 %v487, %v486
  %v512 = vpack.c.b16 %v489, %v488
  %v513 = vpack.c.b16 %v491, %v490
  %v514 = vpack.c.b16 %v493, %v492
  %v515 = vpack.c.b16 %v495, %v494
  %v516 = vpack.c.b16 %v497, %v496
  %v517 = vpack.c.b16 %v499, %v498
  %v518 = vpack.c.b16 %v501, %v500
  %v519 = vpack.c.b16 %v503, %v502
  %536 = vmatprep.subr.bf16.mxu0 0
  %537 = vmatpush1.bf16.msra.mxu0 %v504
  %538 = vmatprep.subr.bf16.mxu0 0
  %539 = vmatpush1.bf16.msra.mxu0 %v505
  %540 = vmatprep.subr.bf16.mxu0 0
  %541 = vmatpush1.bf16.msra.mxu0 %v506
  %542 = vmatprep.subr.bf16.mxu0 0
  %543 = vmatpush1.bf16.msra.mxu0 %v507
  %544 = vmatprep.subr.bf16.mxu0 0
  %545 = vmatpush1.bf16.msra.mxu0 %v508
  %546 = vmatprep.subr.bf16.mxu0 0
  %547 = vmatpush1.bf16.msra.mxu0 %v509
  %548 = vmatprep.subr.bf16.mxu0 0
  %549 = vmatpush1.bf16.msra.mxu0 %v510
  %550 = vmatprep.subr.bf16.mxu0 0
  %551 = vmatpush1.bf16.msra.mxu0 %v511
  %552 = vmatprep.subr.bf16.mxu0 0
  %553 = vmatpush1.bf16.msra.mxu0 %v512
  %554 = vmatprep.subr.bf16.mxu0 0
  %555 = vmatpush1.bf16.msra.mxu0 %v513
  %556 = vmatprep.subr.bf16.mxu0 0
  %557 = vmatpush1.bf16.msra.mxu0 %v514
  %558 = vmatprep.subr.bf16.mxu0 0
  %559 = vmatpush1.bf16.msra.mxu0 %v515
  %560 = vmatprep.subr.bf16.mxu0 0
  %561 = vmatpush1.bf16.msra.mxu0 %v516
  %562 = vmatprep.subr.bf16.mxu0 0
  %563 = vmatpush1.bf16.msra.mxu0 %v517
  %564 = vmatprep.subr.bf16.mxu0 0
  %565 = vmatpush1.bf16.msra.mxu0 %v518
  %566 = vmatprep.subr.bf16.mxu0 0
  %567 = vmatpush1.bf16.msra.mxu0 %v519
  %568 = vmatprep.mubr.bf16.mxu0 %v313
  %569 = vmatmul.mubr.bf16.gmra.mrb[0].mxu0 %v312
  %v570 = vpop.f32.mrb[0].mxu0
  %v571 = vadd.f32 %v118, %v570
  %v572 = vpop.f32.mrb[0].mxu0
  %v573 = vpop.f32.mrb[0].mxu0
  %v574 = vadd.f32 %v118, %v573
  %v575 = vpop.f32.mrb[0].mxu0
  %576 = vmatprep.mubr.bf16.mxu0 %v315
  %577 = vmatmul.mubr.bf16.gmra.mrb[0].mxu0 %v314
  %v578 = vpop.f32.mrb[0].mxu0
  %v579 = vadd.f32 %v118, %v578
  %v580 = vpop.f32.mrb[0].mxu0
  %v581 = vpop.f32.mrb[0].mxu0
  %v582 = vadd.f32 %v118, %v581
  %v583 = vpop.f32.mrb[0].mxu0
  %584 = vmatprep.mubr.bf16.mxu0 %v317
  %585 = vmatmul.mubr.bf16.gmra.mrb[0].mxu0 %v316
  %v586 = vpop.f32.mrb[0].mxu0
  %v587 = vadd.f32 %v118, %v586
  %v588 = vpop.f32.mrb[0].mxu0
  %v589 = vpop.f32.mrb[0].mxu0
  %v590 = vadd.f32 %v118, %v589
  %v591 = vpop.f32.mrb[0].mxu0
  %592 = vmatprep.mubr.bf16.mxu0 %v319
  %593 = vmatmul.mubr.bf16.gmra.mrb[0].mxu0 %v318
  %v594 = vpop.f32.mrb[0].mxu0
  %v595 = vadd.f32 %v118, %v594
  %v596 = vpop.f32.mrb[0].mxu0
  %v597 = vpop.f32.mrb[0].mxu0
  %v598 = vadd.f32 %v118, %v597
  %v599 = vpop.f32.mrb[0].mxu0
  %600 = vmatprep.mubr.bf16.mxu0 %v321
  %601 = vmatmul.mubr.bf16.gmra.mrb[0].mxu0 %v320
  %v602 = vpop.f32.mrb[0].mxu0
  %v603 = vadd.f32 %v118, %v602
  %v604 = vpop.f32.mrb[0].mxu0
  %v605 = vpop.f32.mrb[0].mxu0
  %v606 = vadd.f32 %v118, %v605
  %v607 = vpop.f32.mrb[0].mxu0
  %608 = vmatprep.mubr.bf16.mxu0 %v323
  %609 = vmatmul.mubr.bf16.gmra.mrb[0].mxu0 %v322
  %v610 = vpop.f32.mrb[0].mxu0
  %v611 = vadd.f32 %v118, %v610
  %v612 = vpop.f32.mrb[0].mxu0
  %v613 = vpop.f32.mrb[0].mxu0
  %v614 = vadd.f32 %v118, %v613
  %v615 = vpop.f32.mrb[0].mxu0
  %616 = vmatprep.mubr.bf16.mxu0 %v325
  %617 = vmatmul.mubr.bf16.gmra.mrb[0].mxu0 %v324
  %v618 = vpop.f32.mrb[0].mxu0
  %v619 = vadd.f32 %v118, %v618
  %v620 = vpop.f32.mrb[0].mxu0
  %v621 = vpop.f32.mrb[0].mxu0
  %v622 = vadd.f32 %v118, %v621
  %v623 = vpop.f32.mrb[0].mxu0
  %624 = vmatprep.mubr.bf16.mxu0 %v327
  %625 = vmatmul.mubr.bf16.gmra.mrb[0].mxu0 %v326
  %v626 = vpop.f32.mrb[0].mxu0
  %v627 = vadd.f32 %v118, %v626
  %v628 = vpop.f32.mrb[0].mxu0
  %v629 = vpop.f32.mrb[0].mxu0
  %v630 = vadd.f32 %v118, %v629
  %v631 = vpop.f32.mrb[0].mxu0
  %632 = vmatprep.mubr.bf16.mxu0 %v329
  %633 = vmatmul.mubr.bf16.gmra.mrb[0].mxu0 %v328
  %v634 = vpop.f32.mrb[0].mxu0
  %v635 = vadd.f32 %v118, %v634
  %v636 = vpop.f32.mrb[0].mxu0
  %v637 = vpop.f32.mrb[0].mxu0
  %v638 = vadd.f32 %v118, %v637
  %v639 = vpop.f32.mrb[0].mxu0
  %640 = vmatprep.mubr.bf16.mxu0 %v331
  %641 = vmatmul.mubr.bf16.gmra.mrb[0].mxu0 %v330
  %v642 = vpop.f32.mrb[0].mxu0
  %v643 = vadd.f32 %v118, %v642
  %v644 = vpop.f32.mrb[0].mxu0
  %v645 = vpop.f32.mrb[0].mxu0
  %v646 = vadd.f32 %v118, %v645
  %v647 = vpop.f32.mrb[0].mxu0
  %648 = vmatprep.mubr.bf16.mxu0 %v333
  %649 = vmatmul.mubr.bf16.gmra.mrb[0].mxu0 %v332
  %v650 = vpop.f32.mrb[0].mxu0
  %v651 = vadd.f32 %v118, %v650
  %v652 = vpop.f32.mrb[0].mxu0
  %v653 = vpop.f32.mrb[0].mxu0
  %v654 = vadd.f32 %v118, %v653
  %v655 = vpop.f32.mrb[0].mxu0
  %656 = vmatprep.mubr.bf16.mxu0 %v335
  %657 = vmatmul.mubr.bf16.gmra.mrb[0].mxu0 %v334
  %v658 = vpop.f32.mrb[0].mxu0
  %v659 = vadd.f32 %v118, %v658
  %v660 = vpop.f32.mrb[0].mxu0
  %v661 = vpop.f32.mrb[0].mxu0
  %v662 = vadd.f32 %v118, %v661
  %v663 = vpop.f32.mrb[0].mxu0
  %664 = vmatprep.mubr.bf16.mxu0 %v337
  %665 = vmatmul.mubr.bf16.gmra.mrb[0].mxu0 %v336
  %v666 = vpop.f32.mrb[0].mxu0
  %v667 = vadd.f32 %v118, %v666
  %v668 = vpop.f32.mrb[0].mxu0
  %v669 = vpop.f32.mrb[0].mxu0
  %v670 = vadd.f32 %v118, %v669
  %v671 = vpop.f32.mrb[0].mxu0
  %672 = vmatprep.mubr.bf16.mxu0 %v339
  %673 = vmatmul.mubr.bf16.gmra.mrb[0].mxu0 %v338
  %v674 = vpop.f32.mrb[0].mxu0
  %v675 = vadd.f32 %v118, %v674
  %v676 = vpop.f32.mrb[0].mxu0
  %v677 = vpop.f32.mrb[0].mxu0
  %v678 = vadd.f32 %v118, %v677
  %v679 = vpop.f32.mrb[0].mxu0
  %680 = vmatprep.mubr.bf16.mxu0 %v341
  %681 = vmatmul.mubr.bf16.gmra.mrb[0].mxu0 %v340
  %v682 = vpop.f32.mrb[0].mxu0
  %v683 = vadd.f32 %v118, %v682
  %v684 = vpop.f32.mrb[0].mxu0
  %v685 = vpop.f32.mrb[0].mxu0
  %v686 = vadd.f32 %v118, %v685
  %v687 = vpop.f32.mrb[0].mxu0
  %688 = vmatprep.mubr.bf16.mxu0 %v343
  %689 = vmatmul.mubr.bf16.gmra.mrb[0].mxu0 %v342
  %v690 = vpop.f32.mrb[0].mxu0
  %v691 = vadd.f32 %v118, %v690
  %v692 = vpop.f32.mrb[0].mxu0
  %v693 = vpop.f32.mrb[0].mxu0
  %v694 = vadd.f32 %v118, %v693
  %v695 = vpop.f32.mrb[0].mxu0
  %696 = vmatprep.mubr.bf16.mxu0 %v345
  %697 = vmatmul.mubr.bf16.gmra.mrb[0].mxu0 %v344
  %v698 = vpop.f32.mrb[0].mxu0
  %v699 = vadd.f32 %v118, %v698
  %v700 = vpop.f32.mrb[0].mxu0
  %v701 = vpop.f32.mrb[0].mxu0
  %v702 = vadd.f32 %v118, %v701
  %v703 = vpop.f32.mrb[0].mxu0
  %704 = vmatprep.mubr.bf16.mxu0 %v347
  %705 = vmatmul.mubr.bf16.gmra.mrb[0].mxu0 %v346
  %v706 = vpop.f32.mrb[0].mxu0
  %v707 = vadd.f32 %v118, %v706
  %v708 = vpop.f32.mrb[0].mxu0
  %v709 = vpop.f32.mrb[0].mxu0
  %v710 = vadd.f32 %v118, %v709
  %v711 = vpop.f32.mrb[0].mxu0
  %712 = vmatprep.mubr.bf16.mxu0 %v349
  %713 = vmatmul.mubr.bf16.gmra.mrb[0].mxu0 %v348
  %v714 = vpop.f32.mrb[0].mxu0
  %v715 = vadd.f32 %v118, %v714
  %v716 = vpop.f32.mrb[0].mxu0
  %v717 = vpop.f32.mrb[0].mxu0
  %v718 = vadd.f32 %v118, %v717
  %v719 = vpop.f32.mrb[0].mxu0
  %720 = vmatprep.mubr.bf16.mxu0 %v351
  %721 = vmatmul.mubr.bf16.gmra.mrb[0].mxu0 %v350
  %v722 = vpop.f32.mrb[0].mxu0
  %v723 = vadd.f32 %v118, %v722
  %v724 = vpop.f32.mrb[0].mxu0
  %v725 = vpop.f32.mrb[0].mxu0
  %v726 = vadd.f32 %v118, %v725
  %v727 = vpop.f32.mrb[0].mxu0
  %728 = vmatprep.mubr.bf16.mxu0 %v353
  %729 = vmatmul.mubr.bf16.gmra.mrb[0].mxu0 %v352
  %v730 = vpop.f32.mrb[0].mxu0
  %v731 = vadd.f32 %v118, %v730
  %v732 = vpop.f32.mrb[0].mxu0
  %v733 = vpop.f32.mrb[0].mxu0
  %v734 = vadd.f32 %v118, %v733
  %v735 = vpop.f32.mrb[0].mxu0
  %736 = vmatprep.mubr.bf16.mxu0 %v355
  %737 = vmatmul.mubr.bf16.gmra.mrb[0].mxu0 %v354
  %v738 = vpop.f32.mrb[0].mxu0
  %v739 = vadd.f32 %v118, %v738
  %v740 = vpop.f32.mrb[0].mxu0
  %v741 = vpop.f32.mrb[0].mxu0
  %v742 = vadd.f32 %v118, %v741
  %v743 = vpop.f32.mrb[0].mxu0
  %744 = vmatprep.mubr.bf16.mxu0 %v357
  %745 = vmatmul.mubr.bf16.gmra.mrb[0].mxu0 %v356
  %v746 = vpop.f32.mrb[0].mxu0
  %v747 = vadd.f32 %v118, %v746
  %v748 = vpop.f32.mrb[0].mxu0
  %v749 = vpop.f32.mrb[0].mxu0
  %v750 = vadd.f32 %v118, %v749
  %v751 = vpop.f32.mrb[0].mxu0
  %752 = vmatprep.mubr.bf16.mxu0 %v359
  %753 = vmatmul.mubr.bf16.gmra.mrb[0].mxu0 %v358
  %v754 = vpop.f32.mrb[0].mxu0
  %v755 = vadd.f32 %v118, %v754
  %v756 = vpop.f32.mrb[0].mxu0
  %v757 = vpop.f32.mrb[0].mxu0
  %v758 = vadd.f32 %v118, %v757
  %v759 = vpop.f32.mrb[0].mxu0
  %760 = vmatprep.mubr.bf16.mxu0 %v361
  %761 = vmatmul.mubr.bf16.gmra.mrb[0].mxu0 %v360
  %v762 = vpop.f32.mrb[0].mxu0
  %v763 = vadd.f32 %v118, %v762
  %v764 = vpop.f32.mrb[0].mxu0
  %v765 = vpop.f32.mrb[0].mxu0
  %v766 = vadd.f32 %v118, %v765
  %v767 = vpop.f32.mrb[0].mxu0
  %768 = vmatprep.mubr.bf16.mxu0 %v363
  %769 = vmatmul.mubr.bf16.gmra.mrb[0].mxu0 %v362
  %v770 = vpop.f32.mrb[0].mxu0
  %v771 = vadd.f32 %v118, %v770
  %v772 = vpop.f32.mrb[0].mxu0
  %v773 = vpop.f32.mrb[0].mxu0
  %v774 = vadd.f32 %v118, %v773
  %v775 = vpop.f32.mrb[0].mxu0
  %776 = vmatprep.mubr.bf16.mxu0 %v365
  %777 = vmatmul.mubr.bf16.gmra.mrb[0].mxu0 %v364
  %v778 = vpop.f32.mrb[0].mxu0
  %v779 = vadd.f32 %v118, %v778
  %v780 = vpop.f32.mrb[0].mxu0
  %v781 = vpop.f32.mrb[0].mxu0
  %v782 = vadd.f32 %v118, %v781
  %v783 = vpop.f32.mrb[0].mxu0
  %784 = vmatprep.mubr.bf16.mxu0 %v367
  %785 = vmatmul.mubr.bf16.gmra.mrb[0].mxu0 %v366
  %v786 = vpop.f32.mrb[0].mxu0
  %v787 = vadd.f32 %v118, %v786
  %v788 = vpop.f32.mrb[0].mxu0
  %v789 = vpop.f32.mrb[0].mxu0
  %v790 = vadd.f32 %v118, %v789
  %v791 = vpop.f32.mrb[0].mxu0
  %792 = vmatprep.mubr.bf16.mxu0 %v369
  %793 = vmatmul.mubr.bf16.gmra.mrb[0].mxu0 %v368
  %v794 = vpop.f32.mrb[0].mxu0
  %v795 = vadd.f32 %v118, %v794
  %v796 = vpop.f32.mrb[0].mxu0
  %v797 = vpop.f32.mrb[0].mxu0
  %v798 = vadd.f32 %v118, %v797
  %v799 = vpop.f32.mrb[0].mxu0
  %800 = vmatprep.mubr.bf16.mxu0 %v371
  %801 = vmatmul.mubr.bf16.gmra.mrb[0].mxu0 %v370
  %v802 = vpop.f32.mrb[0].mxu0
  %v803 = vadd.f32 %v118, %v802
  %v804 = vpop.f32.mrb[0].mxu0
  %v805 = vpop.f32.mrb[0].mxu0
  %v806 = vadd.f32 %v118, %v805
  %v807 = vpop.f32.mrb[0].mxu0
  %808 = vmatprep.mubr.bf16.mxu0 %v373
  %809 = vmatmul.mubr.bf16.gmra.mrb[0].mxu0 %v372
  %v810 = vpop.f32.mrb[0].mxu0
  %v811 = vadd.f32 %v118, %v810
  %v812 = vpop.f32.mrb[0].mxu0
  %v813 = vpop.f32.mrb[0].mxu0
  %v814 = vadd.f32 %v118, %v813
  %v815 = vpop.f32.mrb[0].mxu0
  %816 = vmatprep.mubr.bf16.mxu0 %v375
  %817 = vmatmul.mubr.bf16.gmra.mrb[0].mxu0 %v374
  %v818 = vpop.f32.mrb[0].mxu0
  %v819 = vadd.f32 %v118, %v818
  %v820 = vpop.f32.mrb[0].mxu0
  %v821 = vpop.f32.mrb[0].mxu0
  %v822 = vadd.f32 %v118, %v821
  %v823 = vpop.f32.mrb[0].mxu0
  %824 = vdwg.mxu0
  %v825 = vadd.f32 %v571, %v574
  %v826 = vadd.f32 %v825, %v579
  %v827 = vadd.f32 %v826, %v582
  %v828 = vadd.f32 %v827, %v587
  %v829 = vadd.f32 %v828, %v590
  %v830 = vadd.f32 %v829, %v595
  %v831 = vadd.f32 %v830, %v598
  %v832 = vadd.f32 %v831, %v603
  %v833 = vadd.f32 %v832, %v606
  %v834 = vadd.f32 %v833, %v611
  %v835 = vadd.f32 %v834, %v614
  %v836 = vadd.f32 %v835, %v619
  %v837 = vadd.f32 %v836, %v622
  %v838 = vadd.f32 %v837, %v627
  %v839 = vadd.f32 %v838, %v630
  %v840 = vadd.f32 %v839, %v635
  %v841 = vadd.f32 %v840, %v638
  %v842 = vadd.f32 %v841, %v643
  %v843 = vadd.f32 %v842, %v646
  %v844 = vadd.f32 %v843, %v651
  %v845 = vadd.f32 %v844, %v654
  %v846 = vadd.f32 %v845, %v659
  %v847 = vadd.f32 %v846, %v662
  %v848 = vadd.f32 %v847, %v667
  %v849 = vadd.f32 %v848, %v670
  %v850 = vadd.f32 %v849, %v675
  %v851 = vadd.f32 %v850, %v678
  %v852 = vadd.f32 %v851, %v683
  %v853 = vadd.f32 %v852, %v686
  %v854 = vadd.f32 %v853, %v691
  %v855 = vadd.f32 %v854, %v694
  %v856 = vadd.f32 %v855, %v699
  %v857 = vadd.f32 %v856, %v702
  %v858 = vadd.f32 %v857, %v707
  %v859 = vadd.f32 %v858, %v710
  %v860 = vadd.f32 %v859, %v715
  %v861 = vadd.f32 %v860, %v718
  %v862 = vadd.f32 %v861, %v723
  %v863 = vadd.f32 %v862, %v726
  %v864 = vadd.f32 %v863, %v731
  %v865 = vadd.f32 %v864, %v734
  %v866 = vadd.f32 %v865, %v739
  %v867 = vadd.f32 %v866, %v742
  %v868 = vadd.f32 %v867, %v747
  %v869 = vadd.f32 %v868, %v750
  %v870 = vadd.f32 %v869, %v755
  %v871 = vadd.f32 %v870, %v758
  %v872 = vadd.f32 %v871, %v763
  %v873 = vadd.f32 %v872, %v766
  %v874 = vadd.f32 %v873, %v771
  %v875 = vadd.f32 %v874, %v774
  %v876 = vadd.f32 %v875, %v779
  %v877 = vadd.f32 %v876, %v782
  %v878 = vadd.f32 %v877, %v787
  %v879 = vadd.f32 %v878, %v790
  %v880 = vadd.f32 %v879, %v795
  %v881 = vadd.f32 %v880, %v798
  %v882 = vadd.f32 %v881, %v803
  %v883 = vadd.f32 %v882, %v806
  %v884 = vadd.f32 %v883, %v811
  %v885 = vadd.f32 %v884, %v814
  %v886 = vadd.f32 %v885, %v819
  %v887 = vadd.f32 %v886, %v822
  %v888 = vrot.slane %v887, 4
  %v889 = vadd.f32 %v887, %v888
  %v890 = vrot.slane %v889, 2
  %v891 = vadd.f32 %v889, %v890
  %v892 = vrot.slane %v891, 1
  %v893 = vadd.f32 %v891, %v892
  %v894 = vmul.f32 %v571, %v571
  %v895 = vmul.f32 %v574, %v574
  %v896 = vmul.f32 %v579, %v579
  %v897 = vmul.f32 %v582, %v582
  %v898 = vmul.f32 %v587, %v587
  %v899 = vmul.f32 %v590, %v590
  %v900 = vmul.f32 %v595, %v595
  %v901 = vmul.f32 %v598, %v598
  %v902 = vmul.f32 %v603, %v603
  %v903 = vmul.f32 %v606, %v606
  %v904 = vmul.f32 %v611, %v611
  %v905 = vmul.f32 %v614, %v614
  %v906 = vmul.f32 %v619, %v619
  %v907 = vmul.f32 %v622, %v622
  %v908 = vmul.f32 %v627, %v627
  %v909 = vmul.f32 %v630, %v630
  %v910 = vmul.f32 %v635, %v635
  %v911 = vmul.f32 %v638, %v638
  %v912 = vmul.f32 %v643, %v643
  %v913 = vmul.f32 %v646, %v646
  %v914 = vmul.f32 %v651, %v651
  %v915 = vmul.f32 %v654, %v654
  %v916 = vmul.f32 %v659, %v659
  %v917 = vmul.f32 %v662, %v662
  %v918 = vmul.f32 %v667, %v667
  %v919 = vmul.f32 %v670, %v670
  %v920 = vmul.f32 %v675, %v675
  %v921 = vmul.f32 %v678, %v678
  %v922 = vmul.f32 %v683, %v683
  %v923 = vmul.f32 %v686, %v686
  %v924 = vmul.f32 %v691, %v691
  %v925 = vmul.f32 %v694, %v694
  %v926 = vmul.f32 %v699, %v699
  %v927 = vmul.f32 %v702, %v702
  %v928 = vmul.f32 %v707, %v707
  %v929 = vmul.f32 %v710, %v710
  %v930 = vmul.f32 %v715, %v715
  %v931 = vmul.f32 %v718, %v718
  %v932 = vmul.f32 %v723, %v723
  %v933 = vmul.f32 %v726, %v726
  %v934 = vmul.f32 %v731, %v731
  %v935 = vmul.f32 %v734, %v734
  %v936 = vmul.f32 %v739, %v739
  %v937 = vmul.f32 %v742, %v742
  %v938 = vmul.f32 %v747, %v747
  %v939 = vmul.f32 %v750, %v750
  %v940 = vmul.f32 %v755, %v755
  %v941 = vmul.f32 %v758, %v758
  %v942 = vmul.f32 %v763, %v763
  %v943 = vmul.f32 %v766, %v766
  %v944 = vmul.f32 %v771, %v771
  %v945 = vmul.f32 %v774, %v774
  %v946 = vmul.f32 %v779, %v779
  %v947 = vmul.f32 %v782, %v782
  %v948 = vmul.f32 %v787, %v787
  %v949 = vmul.f32 %v790, %v790
  %v950 = vmul.f32 %v795, %v795
  %v951 = vmul.f32 %v798, %v798
  %v952 = vmul.f32 %v803, %v803
  %v953 = vmul.f32 %v806, %v806
  %v954 = vmul.f32 %v811, %v811
  %v955 = vmul.f32 %v814, %v814
  %v956 = vmul.f32 %v819, %v819
  %v957 = vmul.f32 %v822, %v822
  %v958 = vadd.f32 %v894, %v895
  %v959 = vadd.f32 %v958, %v896
  %v960 = vadd.f32 %v959, %v897
  %v961 = vadd.f32 %v960, %v898
  %v962 = vadd.f32 %v961, %v899
  %v963 = vadd.f32 %v962, %v900
  %v964 = vadd.f32 %v963, %v901
  %v965 = vadd.f32 %v964, %v902
  %v966 = vadd.f32 %v965, %v903
  %v967 = vadd.f32 %v966, %v904
  %v968 = vadd.f32 %v967, %v905
  %v969 = vadd.f32 %v968, %v906
  %v970 = vadd.f32 %v969, %v907
  %v971 = vadd.f32 %v970, %v908
  %v972 = vadd.f32 %v971, %v909
  %v973 = vadd.f32 %v972, %v910
  %v974 = vadd.f32 %v973, %v911
  %v975 = vadd.f32 %v974, %v912
  %v976 = vadd.f32 %v975, %v913
  %v977 = vadd.f32 %v976, %v914
  %v978 = vadd.f32 %v977, %v915
  %v979 = vadd.f32 %v978, %v916
  %v980 = vadd.f32 %v979, %v917
  %v981 = vadd.f32 %v980, %v918
  %v982 = vadd.f32 %v981, %v919
  %v983 = vadd.f32 %v982, %v920
  %v984 = vadd.f32 %v983, %v921
  %v985 = vadd.f32 %v984, %v922
  %v986 = vadd.f32 %v985, %v923
  %v987 = vadd.f32 %v986, %v924
  %v988 = vadd.f32 %v987, %v925
  %v989 = vadd.f32 %v988, %v926
  %v990 = vadd.f32 %v989, %v927
  %v991 = vadd.f32 %v990, %v928
  %v992 = vadd.f32 %v991, %v929
  %v993 = vadd.f32 %v992, %v930
  %v994 = vadd.f32 %v993, %v931
  %v995 = vadd.f32 %v994, %v932
  %v996 = vadd.f32 %v995, %v933
  %v997 = vadd.f32 %v996, %v934
  %v998 = vadd.f32 %v997, %v935
  %v999 = vadd.f32 %v998, %v936
  %v1000 = vadd.f32 %v999, %v937
  %v1001 = vadd.f32 %v1000, %v938
  %v1002 = vadd.f32 %v1001, %v939
  %v1003 = vadd.f32 %v1002, %v940
  %v1004 = vadd.f32 %v1003, %v941
  %v1005 = vadd.f32 %v1004, %v942
  %v1006 = vadd.f32 %v1005, %v943
  %v1007 = vadd.f32 %v1006, %v944
  %v1008 = vadd.f32 %v1007, %v945
  %v1009 = vadd.f32 %v1008, %v946
  %v1010 = vadd.f32 %v1009, %v947
  %v1011 = vadd.f32 %v1010, %v948
  %v1012 = vadd.f32 %v1011, %v949
  %v1013 = vadd.f32 %v1012, %v950
  %v1014 = vadd.f32 %v1013, %v951
  %v1015 = vadd.f32 %v1014, %v952
  %v1016 = vadd.f32 %v1015, %v953
  %v1017 = vadd.f32 %v1016, %v954
  %v1018 = vadd.f32 %v1017, %v955
  %v1019 = vadd.f32 %v1018, %v956
  %v1020 = vadd.f32 %v1019, %v957
  %v1021 = vrot.slane %v1020, 4
  %v1022 = vadd.f32 %v1020, %v1021
  %v1023 = vrot.slane %v1022, 2
  %v1024 = vadd.f32 %v1022, %v1023
  %v1025 = vrot.slane %v1024, 1
  %v1026 = vadd.f32 %v1024, %v1025
  %vm1027 = vcmask 1040384
  %v1028 = vsel %vm1027, %v893, %v1026
  %vm1029 = vcmask 1041408
  %v1030 = vsel %vm1029, %v1028, 0.0
  %1031 = vst [vmem:[%s4] sm:$0xff] %v1030
  %v1032 = vpack.c.bf16 %v574, %v571
  %v1033 = vpack.c.bf16 %v582, %v579
  %v1034 = vpack.c.bf16 %v590, %v587
  %v1035 = vpack.c.bf16 %v598, %v595
  %v1036 = vpack.c.bf16 %v606, %v603
  %v1037 = vpack.c.bf16 %v614, %v611
  %v1038 = vpack.c.bf16 %v622, %v619
  %v1039 = vpack.c.bf16 %v630, %v627
  %v1040 = vpack.c.bf16 %v638, %v635
  %v1041 = vpack.c.bf16 %v646, %v643
  %v1042 = vpack.c.bf16 %v654, %v651
  %v1043 = vpack.c.bf16 %v662, %v659
  %v1044 = vpack.c.bf16 %v670, %v667
  %v1045 = vpack.c.bf16 %v678, %v675
  %v1046 = vpack.c.bf16 %v686, %v683
  %v1047 = vpack.c.bf16 %v694, %v691
  %v1048 = vpack.c.bf16 %v702, %v699
  %v1049 = vpack.c.bf16 %v710, %v707
  %v1050 = vpack.c.bf16 %v718, %v715
  %v1051 = vpack.c.bf16 %v726, %v723
  %v1052 = vpack.c.bf16 %v734, %v731
  %v1053 = vpack.c.bf16 %v742, %v739
  %v1054 = vpack.c.bf16 %v750, %v747
  %v1055 = vpack.c.bf16 %v758, %v755
  %v1056 = vpack.c.bf16 %v766, %v763
  %v1057 = vpack.c.bf16 %v774, %v771
  %v1058 = vpack.c.bf16 %v782, %v779
  %v1059 = vpack.c.bf16 %v790, %v787
  %v1060 = vpack.c.bf16 %v798, %v795
  %v1061 = vpack.c.bf16 %v806, %v803
  %v1062 = vpack.c.bf16 %v814, %v811
  %v1063 = vpack.c.bf16 %v822, %v819
  %v1096 = vunpack.c.l.b16 %v1032
  %v1097 = vunpack.c.h.b16 %v1032
  %v1098 = vunpack.c.l.b16 %v1033
  %v1099 = vunpack.c.h.b16 %v1033
  %v1100 = vunpack.c.l.b16 %v1034
  %v1101 = vunpack.c.h.b16 %v1034
  %v1102 = vunpack.c.l.b16 %v1035
  %v1103 = vunpack.c.h.b16 %v1035
  %v1104 = vunpack.c.l.b16 %v1036
  %v1105 = vunpack.c.h.b16 %v1036
  %v1106 = vunpack.c.l.b16 %v1037
  %v1107 = vunpack.c.h.b16 %v1037
  %v1108 = vunpack.c.l.b16 %v1038
  %v1109 = vunpack.c.h.b16 %v1038
  %v1110 = vunpack.c.l.b16 %v1039
  %v1111 = vunpack.c.h.b16 %v1039
  %v1112 = vunpack.c.l.b16 %v1040
  %v1113 = vunpack.c.h.b16 %v1040
  %v1114 = vunpack.c.l.b16 %v1041
  %v1115 = vunpack.c.h.b16 %v1041
  %v1116 = vunpack.c.l.b16 %v1042
  %v1117 = vunpack.c.h.b16 %v1042
  %v1118 = vunpack.c.l.b16 %v1043
  %v1119 = vunpack.c.h.b16 %v1043
  %v1120 = vunpack.c.l.b16 %v1044
  %v1121 = vunpack.c.h.b16 %v1044
  %v1122 = vunpack.c.l.b16 %v1045
  %v1123 = vunpack.c.h.b16 %v1045
  %v1124 = vunpack.c.l.b16 %v1046
  %v1125 = vunpack.c.h.b16 %v1046
  %v1126 = vunpack.c.l.b16 %v1047
  %v1127 = vunpack.c.h.b16 %v1047
  %v1128 = vunpack.c.l.b16 %v1048
  %v1129 = vunpack.c.h.b16 %v1048
  %v1130 = vunpack.c.l.b16 %v1049
  %v1131 = vunpack.c.h.b16 %v1049
  %v1132 = vunpack.c.l.b16 %v1050
  %v1133 = vunpack.c.h.b16 %v1050
  %v1134 = vunpack.c.l.b16 %v1051
  %v1135 = vunpack.c.h.b16 %v1051
  %v1136 = vunpack.c.l.b16 %v1052
  %v1137 = vunpack.c.h.b16 %v1052
  %v1138 = vunpack.c.l.b16 %v1053
  %v1139 = vunpack.c.h.b16 %v1053
  %v1140 = vunpack.c.l.b16 %v1054
  %v1141 = vunpack.c.h.b16 %v1054
  %v1142 = vunpack.c.l.b16 %v1055
  %v1143 = vunpack.c.h.b16 %v1055
  %v1144 = vunpack.c.l.b16 %v1056
  %v1145 = vunpack.c.h.b16 %v1056
  %v1146 = vunpack.c.l.b16 %v1057
  %v1147 = vunpack.c.h.b16 %v1057
  %v1148 = vunpack.c.l.b16 %v1058
  %v1149 = vunpack.c.h.b16 %v1058
  %v1150 = vunpack.c.l.b16 %v1059
  %v1151 = vunpack.c.h.b16 %v1059
  %v1152 = vunpack.c.l.b16 %v1060
  %v1153 = vunpack.c.h.b16 %v1060
  %v1154 = vunpack.c.l.b16 %v1061
  %v1155 = vunpack.c.h.b16 %v1061
  %v1156 = vunpack.c.l.b16 %v1062
  %v1157 = vunpack.c.h.b16 %v1062
  %v1158 = vunpack.c.l.b16 %v1063
  %v1159 = vunpack.c.h.b16 %v1063
  %v1160 = vpack.c.b16 %v1096, %v1096
  %v1161 = vpack.c.b16 %v1097, %v1097
  %v1162 = vpack.c.b16 %v1098, %v1098
  %v1163 = vpack.c.b16 %v1099, %v1099
  %v1164 = vpack.c.b16 %v1100, %v1100
  %v1165 = vpack.c.b16 %v1101, %v1101
  %v1166 = vpack.c.b16 %v1102, %v1102
  %v1167 = vpack.c.b16 %v1103, %v1103
  %v1168 = vpack.c.b16 %v1104, %v1104
  %v1169 = vpack.c.b16 %v1105, %v1105
  %v1170 = vpack.c.b16 %v1106, %v1106
  %v1171 = vpack.c.b16 %v1107, %v1107
  %v1172 = vpack.c.b16 %v1108, %v1108
  %v1173 = vpack.c.b16 %v1109, %v1109
  %v1174 = vpack.c.b16 %v1110, %v1110
  %v1175 = vpack.c.b16 %v1111, %v1111
  %v1176 = vpack.c.b16 %v1112, %v1112
  %v1177 = vpack.c.b16 %v1113, %v1113
  %v1178 = vpack.c.b16 %v1114, %v1114
  %v1179 = vpack.c.b16 %v1115, %v1115
  %v1180 = vpack.c.b16 %v1116, %v1116
  %v1181 = vpack.c.b16 %v1117, %v1117
  %v1182 = vpack.c.b16 %v1118, %v1118
  %v1183 = vpack.c.b16 %v1119, %v1119
  %v1184 = vpack.c.b16 %v1120, %v1120
  %v1185 = vpack.c.b16 %v1121, %v1121
  %v1186 = vpack.c.b16 %v1122, %v1122
  %v1187 = vpack.c.b16 %v1123, %v1123
  %v1188 = vpack.c.b16 %v1124, %v1124
  %v1189 = vpack.c.b16 %v1125, %v1125
  %v1190 = vpack.c.b16 %v1126, %v1126
  %v1191 = vpack.c.b16 %v1127, %v1127
  %v1192 = vpack.c.b16 %v1128, %v1128
  %v1193 = vpack.c.b16 %v1129, %v1129
  %v1194 = vpack.c.b16 %v1130, %v1130
  %v1195 = vpack.c.b16 %v1131, %v1131
  %v1196 = vpack.c.b16 %v1132, %v1132
  %v1197 = vpack.c.b16 %v1133, %v1133
  %v1198 = vpack.c.b16 %v1134, %v1134
  %v1199 = vpack.c.b16 %v1135, %v1135
  %v1200 = vpack.c.b16 %v1136, %v1136
  %v1201 = vpack.c.b16 %v1137, %v1137
  %v1202 = vpack.c.b16 %v1138, %v1138
  %v1203 = vpack.c.b16 %v1139, %v1139
  %v1204 = vpack.c.b16 %v1140, %v1140
  %v1205 = vpack.c.b16 %v1141, %v1141
  %v1206 = vpack.c.b16 %v1142, %v1142
  %v1207 = vpack.c.b16 %v1143, %v1143
  %v1208 = vpack.c.b16 %v1144, %v1144
  %v1209 = vpack.c.b16 %v1145, %v1145
  %v1210 = vpack.c.b16 %v1146, %v1146
  %v1211 = vpack.c.b16 %v1147, %v1147
  %v1212 = vpack.c.b16 %v1148, %v1148
  %v1213 = vpack.c.b16 %v1149, %v1149
  %v1214 = vpack.c.b16 %v1150, %v1150
  %v1215 = vpack.c.b16 %v1151, %v1151
  %v1216 = vpack.c.b16 %v1152, %v1152
  %v1217 = vpack.c.b16 %v1153, %v1153
  %v1218 = vpack.c.b16 %v1154, %v1154
  %v1219 = vpack.c.b16 %v1155, %v1155
  %v1220 = vpack.c.b16 %v1156, %v1156
  %v1221 = vpack.c.b16 %v1157, %v1157
  %v1222 = vpack.c.b16 %v1158, %v1158
  %v1223 = vpack.c.b16 %v1159, %v1159
  %1288 = vst [vmem:[%s3] sm:$0xf] %v1160
  %1289 = vst [vmem:[%s3 + $0x4] sm:$0xf] %v1161
  %1290 = vst [vmem:[%s3 + $0x8] sm:$0xf] %v1162
  %1291 = vst [vmem:[%s3 + $0xc] sm:$0xf] %v1163
  %1292 = vst [vmem:[%s3 + $0x10] sm:$0xf] %v1164
  %1293 = vst [vmem:[%s3 + $0x14] sm:$0xf] %v1165
  %1294 = vst [vmem:[%s3 + $0x18] sm:$0xf] %v1166
  %1295 = vst [vmem:[%s3 + $0x1c] sm:$0xf] %v1167
  %1296 = vst [vmem:[%s3 + $0x20] sm:$0xf] %v1168
  %1297 = vst [vmem:[%s3 + $0x24] sm:$0xf] %v1169
  %1298 = vst [vmem:[%s3 + $0x28] sm:$0xf] %v1170
  %1299 = vst [vmem:[%s3 + $0x2c] sm:$0xf] %v1171
  %1300 = vst [vmem:[%s3 + $0x30] sm:$0xf] %v1172
  %1301 = vst [vmem:[%s3 + $0x34] sm:$0xf] %v1173
  %1302 = vst [vmem:[%s3 + $0x38] sm:$0xf] %v1174
  %1303 = vst [vmem:[%s3 + $0x3c] sm:$0xf] %v1175
  %1304 = vst [vmem:[%s3 + $0x40] sm:$0xf] %v1176
  %1305 = vst [vmem:[%s3 + $0x44] sm:$0xf] %v1177
  %1306 = vst [vmem:[%s3 + $0x48] sm:$0xf] %v1178
  %1307 = vst [vmem:[%s3 + $0x4c] sm:$0xf] %v1179
  %1308 = vst [vmem:[%s3 + $0x50] sm:$0xf] %v1180
  %1309 = vst [vmem:[%s3 + $0x54] sm:$0xf] %v1181
  %1310 = vst [vmem:[%s3 + $0x58] sm:$0xf] %v1182
  %1311 = vst [vmem:[%s3 + $0x5c] sm:$0xf] %v1183
  %1312 = vst [vmem:[%s3 + $0x60] sm:$0xf] %v1184
  %1313 = vst [vmem:[%s3 + $0x64] sm:$0xf] %v1185
  %1314 = vst [vmem:[%s3 + $0x68] sm:$0xf] %v1186
  %1315 = vst [vmem:[%s3 + $0x6c] sm:$0xf] %v1187
  %1316 = vst [vmem:[%s3 + $0x70] sm:$0xf] %v1188
  %1317 = vst [vmem:[%s3 + $0x74] sm:$0xf] %v1189
  %1318 = vst [vmem:[%s3 + $0x78] sm:$0xf] %v1190
  %1319 = vst [vmem:[%s3 + $0x7c] sm:$0xf] %v1191
  %1320 = vst [vmem:[%s3 + $0x80] sm:$0xf] %v1192
  %1321 = vst [vmem:[%s3 + $0x84] sm:$0xf] %v1193
  %1322 = vst [vmem:[%s3 + $0x88] sm:$0xf] %v1194
  %1323 = vst [vmem:[%s3 + $0x8c] sm:$0xf] %v1195
  %1324 = vst [vmem:[%s3 + $0x90] sm:$0xf] %v1196
  %1325 = vst [vmem:[%s3 + $0x94] sm:$0xf] %v1197
  %1326 = vst [vmem:[%s3 + $0x98] sm:$0xf] %v1198
  %1327 = vst [vmem:[%s3 + $0x9c] sm:$0xf] %v1199
  %1328 = vst [vmem:[%s3 + $0xa0] sm:$0xf] %v1200
  %1329 = vst [vmem:[%s3 + $0xa4] sm:$0xf] %v1201
  %1330 = vst [vmem:[%s3 + $0xa8] sm:$0xf] %v1202
  %1331 = vst [vmem:[%s3 + $0xac] sm:$0xf] %v1203
  %1332 = vst [vmem:[%s3 + $0xb0] sm:$0xf] %v1204
  %1333 = vst [vmem:[%s3 + $0xb4] sm:$0xf] %v1205
  %1334 = vst [vmem:[%s3 + $0xb8] sm:$0xf] %v1206
  %1335 = vst [vmem:[%s3 + $0xbc] sm:$0xf] %v1207
  %1336 = vst [vmem:[%s3 + $0xc0] sm:$0xf] %v1208
  %1337 = vst [vmem:[%s3 + $0xc4] sm:$0xf] %v1209
  %1338 = vst [vmem:[%s3 + $0xc8] sm:$0xf] %v1210
  %1339 = vst [vmem:[%s3 + $0xcc] sm:$0xf] %v1211
  %1340 = vst [vmem:[%s3 + $0xd0] sm:$0xf] %v1212
  %1341 = vst [vmem:[%s3 + $0xd4] sm:$0xf] %v1213
  %1342 = vst [vmem:[%s3 + $0xd8] sm:$0xf] %v1214
  %1343 = vst [vmem:[%s3 + $0xdc] sm:$0xf] %v1215
  %1344 = vst [vmem:[%s3 + $0xe0] sm:$0xf] %v1216
  %1345 = vst [vmem:[%s3 + $0xe4] sm:$0xf] %v1217
  %1346 = vst [vmem:[%s3 + $0xe8] sm:$0xf] %v1218
  %1347 = vst [vmem:[%s3 + $0xec] sm:$0xf] %v1219
  %1348 = vst [vmem:[%s3 + $0xf0] sm:$0xf] %v1220
  %1349 = vst [vmem:[%s3 + $0xf4] sm:$0xf] %v1221
  %1350 = vst [vmem:[%s3 + $0xf8] sm:$0xf] %v1222
  %1351 = vst [vmem:[%s3 + $0xfc] sm:$0xf] %v1223
  // Predicated region
  $region14: #{mbe_block_forward.6} parent=0 // pred_check
    _
  $region15: #{mbe_block_forward.6} parent=0 // pred_check_branch
    %1353 = sbr.rel (0) target = $region17
  $region16: #{mbe_block_forward.6} parent=0 // pred_region
    _
  $region17: #{mbe_block_forward.6} parent=0 // pred_fallthru
    _
  // Predicated region
  $region18: #{mbe_block_forward.6} parent=0 // pred_check
    _
  $region19: #{mbe_block_forward.6} parent=0 // pred_check_branch
    %1355 = sbr.rel (0) target = $region21
  $region20: #{mbe_block_forward.6} parent=0 // pred_region
    _
  $region21: #{mbe_block_forward.6} parent=0 // pred_fallthru
    _
  // Predicated region
  $region22: #{mbe_block_forward.6} parent=0 // pred_check
    _
  $region23: #{mbe_block_forward.6} parent=0 // pred_check_branch
    %1357 = sbr.rel (0) target = $region25
  $region24: #{mbe_block_forward.6} parent=0 // pred_region
    _
  $region25: #{mbe_block_forward.6} parent=0 // pred_fallthru
    _
  // Predicated region
  $region26: #{mbe_block_forward.6} parent=0 // pred_check
    _
  $region27: #{mbe_block_forward.6} parent=0 // pred_check_branch
    %1359 = sbr.rel (0) target = $region29
  $region28: #{mbe_block_forward.6} parent=0 // pred_region
    _
  $region29: #{mbe_block_forward.6} parent=0 // pred_fallthru
    _

// kernel: mbe_block_forward.7
$region0: #{mbe_block_forward.7}
  #allocation0 [shape = 'u32[]', space=smem, size = 0x4, offset = 0x4, fixed_abs, tag = 'smem constant byte address 0x4 - core index']
  #allocation1 [shape = 'u32[144,128]{1,0:T(1,128)}', space=vmem, size = 0x12000, scoped, tag = 'internal scratch']
  %s0 = inlined_call_operand.vmem [shape: bf16[512,128], index: 0, kind: input, shape index: {}]
  %s1 = inlined_call_operand.vmem [shape: bf16[128,128], index: 1, kind: input, shape index: {}]
  %s2 = inlined_call_operand.vmem [shape: f32[1,128], index: 2, kind: input, shape index: {}]
  %s3 = inlined_call_operand.vmem [shape: bf16[512,128], index: 3, kind: output, shape index: {}]
  %s4 = sld [smem:[#allocation0]]
  $region22: #{mbe_block_forward.7} parent=0
    _
  %s6 = ssub.s32 1, %s4
  %s7 = scalar_select 0, %s6, %s4
  // Predicated region
  $region2: #{mbe_block_forward.7} parent=0 // pred_check
    _
  $region3: #{mbe_block_forward.7} parent=0 // pred_check_branch
    %9 = sbr.rel (0) target = $region5
  $region4: #{mbe_block_forward.7} parent=0 // pred_region
    _
  $region5: #{mbe_block_forward.7} parent=0 // pred_fallthru
    _
  // Predicated region
  $region6: #{mbe_block_forward.7} parent=0 // pred_check
    _
  $region7: #{mbe_block_forward.7} parent=0 // pred_check_branch
    %11 = sbr.rel (0) target = $region9
  $region8: #{mbe_block_forward.7} parent=0 // pred_region
    _
  $region9: #{mbe_block_forward.7} parent=0 // pred_fallthru
    _
  // Predicated region
  $region10: #{mbe_block_forward.7} parent=0 // pred_check
    _
  $region11: #{mbe_block_forward.7} parent=0 // pred_check_branch
    %13 = sbr.rel (0) target = $region13
  $region12: #{mbe_block_forward.7} parent=0 // pred_region
    _
  $region13: #{mbe_block_forward.7} parent=0 // pred_fallthru
    _
  %v15 = vld [vmem:[%s0] sm:$0xf]
  %v16 = vld [vmem:[%s0 + $0x4] sm:$0xf]
  %v17 = vld [vmem:[%s0 + $0x8] sm:$0xf]
  %v18 = vld [vmem:[%s0 + $0xc] sm:$0xf]
  %v19 = vld [vmem:[%s0 + $0x10] sm:$0xf]
  %v20 = vld [vmem:[%s0 + $0x14] sm:$0xf]
  %v21 = vld [vmem:[%s0 + $0x18] sm:$0xf]
  %v22 = vld [vmem:[%s0 + $0x1c] sm:$0xf]
  %v23 = vld [vmem:[%s0 + $0x20] sm:$0xf]
  %v24 = vld [vmem:[%s0 + $0x24] sm:$0xf]
  %v25 = vld [vmem:[%s0 + $0x28] sm:$0xf]
  %v26 = vld [vmem:[%s0 + $0x2c] sm:$0xf]
  %v27 = vld [vmem:[%s0 + $0x30] sm:$0xf]
  %v28 = vld [vmem:[%s0 + $0x34] sm:$0xf]
  %v29 = vld [vmem:[%s0 + $0x38] sm:$0xf]
  %v30 = vld [vmem:[%s0 + $0x3c] sm:$0xf]
  %v31 = vld [vmem:[%s0 + $0x40] sm:$0xf]
  %v32 = vld [vmem:[%s0 + $0x44] sm:$0xf]
  %v33 = vld [vmem:[%s0 + $0x48] sm:$0xf]
  %v34 = vld [vmem:[%s0 + $0x4c] sm:$0xf]
  %v35 = vld [vmem:[%s0 + $0x50] sm:$0xf]
  %v36 = vld [vmem:[%s0 + $0x54] sm:$0xf]
  %v37 = vld [vmem:[%s0 + $0x58] sm:$0xf]
  %v38 = vld [vmem:[%s0 + $0x5c] sm:$0xf]
  %v39 = vld [vmem:[%s0 + $0x60] sm:$0xf]
  %v40 = vld [vmem:[%s0 + $0x64] sm:$0xf]
  %v41 = vld [vmem:[%s0 + $0x68] sm:$0xf]
  %v42 = vld [vmem:[%s0 + $0x6c] sm:$0xf]
  %v43 = vld [vmem:[%s0 + $0x70] sm:$0xf]
  %v44 = vld [vmem:[%s0 + $0x74] sm:$0xf]
  %v45 = vld [vmem:[%s0 + $0x78] sm:$0xf]
  %v46 = vld [vmem:[%s0 + $0x7c] sm:$0xf]
  %v47 = vld [vmem:[%s0 + $0x80] sm:$0xf]
  %v48 = vld [vmem:[%s0 + $0x84] sm:$0xf]
  %v49 = vld [vmem:[%s0 + $0x88] sm:$0xf]
  %v50 = vld [vmem:[%s0 + $0x8c] sm:$0xf]
  %v51 = vld [vmem:[%s0 + $0x90] sm:$0xf]
  %v52 = vld [vmem:[%s0 + $0x94] sm:$0xf]
  %v53 = vld [vmem:[%s0 + $0x98] sm:$0xf]
  %v54 = vld [vmem:[%s0 + $0x9c] sm:$0xf]
  %v55 = vld [vmem:[%s0 + $0xa0] sm:$0xf]
  %v56 = vld [vmem:[%s0 + $0xa4] sm:$0xf]
  %v57 = vld [vmem:[%s0 + $0xa8] sm:$0xf]
  %v58 = vld [vmem:[%s0 + $0xac] sm:$0xf]
  %v59 = vld [vmem:[%s0 + $0xb0] sm:$0xf]
  %v60 = vld [vmem:[%s0 + $0xb4] sm:$0xf]
  %v61 = vld [vmem:[%s0 + $0xb8] sm:$0xf]
  %v62 = vld [vmem:[%s0 + $0xbc] sm:$0xf]
  %v63 = vld [vmem:[%s0 + $0xc0] sm:$0xf]
  %v64 = vld [vmem:[%s0 + $0xc4] sm:$0xf]
  %v65 = vld [vmem:[%s0 + $0xc8] sm:$0xf]
  %v66 = vld [vmem:[%s0 + $0xcc] sm:$0xf]
  %v67 = vld [vmem:[%s0 + $0xd0] sm:$0xf]
  %v68 = vld [vmem:[%s0 + $0xd4] sm:$0xf]
  %v69 = vld [vmem:[%s0 + $0xd8] sm:$0xf]
  %v70 = vld [vmem:[%s0 + $0xdc] sm:$0xf]
  %v71 = vld [vmem:[%s0 + $0xe0] sm:$0xf]
  %v72 = vld [vmem:[%s0 + $0xe4] sm:$0xf]
  %v73 = vld [vmem:[%s0 + $0xe8] sm:$0xf]
  %v74 = vld [vmem:[%s0 + $0xec] sm:$0xf]
  %v75 = vld [vmem:[%s0 + $0xf0] sm:$0xf]
  %v76 = vld [vmem:[%s0 + $0xf4] sm:$0xf]
  %v77 = vld [vmem:[%s0 + $0xf8] sm:$0xf]
  %v78 = vld [vmem:[%s0 + $0xfc] sm:$0xf]
  %v79 = vld [vmem:[%s1] sm:$0xf]
  %v80 = vld [vmem:[%s1 + $0x4] sm:$0xf]
  %v81 = vld [vmem:[%s1 + $0x8] sm:$0xf]
  %v82 = vld [vmem:[%s1 + $0xc] sm:$0xf]
  %v83 = vld [vmem:[%s1 + $0x10] sm:$0xf]
  %v84 = vld [vmem:[%s1 + $0x14] sm:$0xf]
  %v85 = vld [vmem:[%s1 + $0x18] sm:$0xf]
  %v86 = vld [vmem:[%s1 + $0x1c] sm:$0xf]
  %v87 = vld [vmem:[%s1 + $0x20] sm:$0xf]
  %v88 = vld [vmem:[%s1 + $0x24] sm:$0xf]
  %v89 = vld [vmem:[%s1 + $0x28] sm:$0xf]
  %v90 = vld [vmem:[%s1 + $0x2c] sm:$0xf]
  %v91 = vld [vmem:[%s1 + $0x30] sm:$0xf]
  %v92 = vld [vmem:[%s1 + $0x34] sm:$0xf]
  %v93 = vld [vmem:[%s1 + $0x38] sm:$0xf]
  %v94 = vld [vmem:[%s1 + $0x3c] sm:$0xf]
  %v95 = vld [vmem:[%s2] sm:$0x1]
  %v97 = vlaneseq
  %v98 = vshrl.u32 %v97, 7
  %v99 = vsub.s32 0, %v98
  %v100 = vrot.slane %v95, %v99
  %v166 = vunpack.c.l.b16 %v15
  %v167 = vunpack.c.l.b16 %v16
  %v168 = vunpack.c.l.b16 %v17
  %v169 = vunpack.c.l.b16 %v18
  %v170 = vunpack.c.l.b16 %v19
  %v171 = vunpack.c.l.b16 %v20
  %v172 = vunpack.c.l.b16 %v21
  %v173 = vunpack.c.l.b16 %v22
  %v174 = vunpack.c.l.b16 %v23
  %v175 = vunpack.c.l.b16 %v24
  %v176 = vunpack.c.l.b16 %v25
  %v177 = vunpack.c.l.b16 %v26
  %v178 = vunpack.c.l.b16 %v27
  %v179 = vunpack.c.l.b16 %v28
  %v180 = vunpack.c.l.b16 %v29
  %v181 = vunpack.c.l.b16 %v30
  %v182 = vunpack.c.l.b16 %v31
  %v183 = vunpack.c.l.b16 %v32
  %v184 = vunpack.c.l.b16 %v33
  %v185 = vunpack.c.l.b16 %v34
  %v186 = vunpack.c.l.b16 %v35
  %v187 = vunpack.c.l.b16 %v36
  %v188 = vunpack.c.l.b16 %v37
  %v189 = vunpack.c.l.b16 %v38
  %v190 = vunpack.c.l.b16 %v39
  %v191 = vunpack.c.l.b16 %v40
  %v192 = vunpack.c.l.b16 %v41
  %v193 = vunpack.c.l.b16 %v42
  %v194 = vunpack.c.l.b16 %v43
  %v195 = vunpack.c.l.b16 %v44
  %v196 = vunpack.c.l.b16 %v45
  %v197 = vunpack.c.l.b16 %v46
  %v198 = vunpack.c.l.b16 %v47
  %v199 = vunpack.c.l.b16 %v48
  %v200 = vunpack.c.l.b16 %v49
  %v201 = vunpack.c.l.b16 %v50
  %v202 = vunpack.c.l.b16 %v51
  %v203 = vunpack.c.l.b16 %v52
  %v204 = vunpack.c.l.b16 %v53
  %v205 = vunpack.c.l.b16 %v54
  %v206 = vunpack.c.l.b16 %v55
  %v207 = vunpack.c.l.b16 %v56
  %v208 = vunpack.c.l.b16 %v57
  %v209 = vunpack.c.l.b16 %v58
  %v210 = vunpack.c.l.b16 %v59
  %v211 = vunpack.c.l.b16 %v60
  %v212 = vunpack.c.l.b16 %v61
  %v213 = vunpack.c.l.b16 %v62
  %v214 = vunpack.c.l.b16 %v63
  %v215 = vunpack.c.l.b16 %v64
  %v216 = vunpack.c.l.b16 %v65
  %v217 = vunpack.c.l.b16 %v66
  %v218 = vunpack.c.l.b16 %v67
  %v219 = vunpack.c.l.b16 %v68
  %v220 = vunpack.c.l.b16 %v69
  %v221 = vunpack.c.l.b16 %v70
  %v222 = vunpack.c.l.b16 %v71
  %v223 = vunpack.c.l.b16 %v72
  %v224 = vunpack.c.l.b16 %v73
  %v225 = vunpack.c.l.b16 %v74
  %v226 = vunpack.c.l.b16 %v75
  %v227 = vunpack.c.l.b16 %v76
  %v228 = vunpack.c.l.b16 %v77
  %v229 = vunpack.c.l.b16 %v78
  %v230 = vpack.c.b16 %v167, %v166
  %v231 = vpack.c.b16 %v169, %v168
  %v232 = vpack.c.b16 %v171, %v170
  %v233 = vpack.c.b16 %v173, %v172
  %v234 = vpack.c.b16 %v175, %v174
  %v235 = vpack.c.b16 %v177, %v176
  %v236 = vpack.c.b16 %v179, %v178
  %v237 = vpack.c.b16 %v181, %v180
  %v238 = vpack.c.b16 %v183, %v182
  %v239 = vpack.c.b16 %v185, %v184
  %v240 = vpack.c.b16 %v187, %v186
  %v241 = vpack.c.b16 %v189, %v188
  %v242 = vpack.c.b16 %v191, %v190
  %v243 = vpack.c.b16 %v193, %v192
  %v244 = vpack.c.b16 %v195, %v194
  %v245 = vpack.c.b16 %v197, %v196
  %v246 = vpack.c.b16 %v199, %v198
  %v247 = vpack.c.b16 %v201, %v200
  %v248 = vpack.c.b16 %v203, %v202
  %v249 = vpack.c.b16 %v205, %v204
  %v250 = vpack.c.b16 %v207, %v206
  %v251 = vpack.c.b16 %v209, %v208
  %v252 = vpack.c.b16 %v211, %v210
  %v253 = vpack.c.b16 %v213, %v212
  %v254 = vpack.c.b16 %v215, %v214
  %v255 = vpack.c.b16 %v217, %v216
  %v256 = vpack.c.b16 %v219, %v218
  %v257 = vpack.c.b16 %v221, %v220
  %v258 = vpack.c.b16 %v223, %v222
  %v259 = vpack.c.b16 %v225, %v224
  %v260 = vpack.c.b16 %v227, %v226
  %v261 = vpack.c.b16 %v229, %v228
  %v310 = vunpack.c.l.b16 %v79
  %v311 = vunpack.c.l.b16 %v80
  %v312 = vunpack.c.l.b16 %v81
  %v313 = vunpack.c.l.b16 %v82
  %v314 = vunpack.c.l.b16 %v83
  %v315 = vunpack.c.l.b16 %v84
  %v316 = vunpack.c.l.b16 %v85
  %v317 = vunpack.c.l.b16 %v86
  %v318 = vunpack.c.l.b16 %v87
  %v319 = vunpack.c.l.b16 %v88
  %v320 = vunpack.c.l.b16 %v89
  %v321 = vunpack.c.l.b16 %v90
  %v322 = vunpack.c.l.b16 %v91
  %v323 = vunpack.c.l.b16 %v92
  %v324 = vunpack.c.l.b16 %v93
  %v325 = vunpack.c.l.b16 %v94
  %v326 = vpack.c.b16 %v311, %v310
  %v327 = vpack.c.b16 %v313, %v312
  %v328 = vpack.c.b16 %v315, %v314
  %v329 = vpack.c.b16 %v317, %v316
  %v330 = vpack.c.b16 %v319, %v318
  %v331 = vpack.c.b16 %v321, %v320
  %v332 = vpack.c.b16 %v323, %v322
  %v333 = vpack.c.b16 %v325, %v324
  %342 = vmatprep.subr.bf16.mxu0 0
  %343 = vmatpush1.bf16.msra.mxu0 %v326
  %344 = vmatprep.subr.bf16.mxu0 0
  %345 = vmatpush1.bf16.msra.mxu0 %v327
  %346 = vmatprep.subr.bf16.mxu0 0
  %347 = vmatpush1.bf16.msra.mxu0 %v328
  %348 = vmatprep.subr.bf16.mxu0 0
  %349 = vmatpush1.bf16.msra.mxu0 %v329
  %350 = vmatprep.subr.bf16.mxu0 0
  %351 = vmatpush1.bf16.msra.mxu0 %v330
  %352 = vmatprep.subr.bf16.mxu0 0
  %353 = vmatpush1.bf16.msra.mxu0 %v331
  %354 = vmatprep.subr.bf16.mxu0 0
  %355 = vmatpush1.bf16.msra.mxu0 %v332
  %356 = vmatprep.subr.bf16.mxu0 0
  %357 = vmatpush1.bf16.msra.mxu0 %v333
  %358 = vmatprep.subr.bf16.mxu0 0
  %359 = vmatpush1.bf16.msra.mxu0 0
  %360 = vmatprep.subr.bf16.mxu0 0
  %361 = vmatpush1.bf16.msra.mxu0 0
  %362 = vmatprep.subr.bf16.mxu0 0
  %363 = vmatpush1.bf16.msra.mxu0 0
  %364 = vmatprep.subr.bf16.mxu0 0
  %365 = vmatpush1.bf16.msra.mxu0 0
  %366 = vmatprep.subr.bf16.mxu0 0
  %367 = vmatpush1.bf16.msra.mxu0 0
  %368 = vmatprep.subr.bf16.mxu0 0
  %369 = vmatpush1.bf16.msra.mxu0 0
  %370 = vmatprep.subr.bf16.mxu0 0
  %371 = vmatpush1.bf16.msra.mxu0 0
  %372 = vmatprep.subr.bf16.mxu0 0
  %373 = vmatpush1.bf16.msra.mxu0 0
  %374 = vmatprep.mubr.bf16.mxu0 0
  %375 = vmatmul.mubr.bf16.gmra.mrb[0].mxu0 %v230
  %v376 = vpop.f32.mrb[0].mxu0
  %v377 = vadd.f32 %v100, %v376
  %v378 = vpop.f32.mrb[0].mxu0
  %v379 = vpop.f32.mrb[0].mxu0
  %v380 = vadd.f32 %v100, %v379
  %v381 = vpop.f32.mrb[0].mxu0
  %382 = vmatprep.mubr.bf16.mxu0 0
  %383 = vmatmul.mubr.bf16.gmra.mrb[0].mxu0 %v231
  %v384 = vpop.f32.mrb[0].mxu0
  %v385 = vadd.f32 %v100, %v384
  %v386 = vpop.f32.mrb[0].mxu0
  %v387 = vpop.f32.mrb[0].mxu0
  %v388 = vadd.f32 %v100, %v387
  %v389 = vpop.f32.mrb[0].mxu0
  %390 = vmatprep.mubr.bf16.mxu0 0
  %391 = vmatmul.mubr.bf16.gmra.mrb[0].mxu0 %v232
  %v392 = vpop.f32.mrb[0].mxu0
  %v393 = vadd.f32 %v100, %v392
  %v394 = vpop.f32.mrb[0].mxu0
  %v395 = vpop.f32.mrb[0].mxu0
  %v396 = vadd.f32 %v100, %v395
  %v397 = vpop.f32.mrb[0].mxu0
  %398 = vmatprep.mubr.bf16.mxu0 0
  %399 = vmatmul.mubr.bf16.gmra.mrb[0].mxu0 %v233
  %v400 = vpop.f32.mrb[0].mxu0
  %v401 = vadd.f32 %v100, %v400
  %v402 = vpop.f32.mrb[0].mxu0
  %v403 = vpop.f32.mrb[0].mxu0
  %v404 = vadd.f32 %v100, %v403
  %v405 = vpop.f32.mrb[0].mxu0
  %406 = vmatprep.mubr.bf16.mxu0 0
  %407 = vmatmul.mubr.bf16.gmra.mrb[0].mxu0 %v234
  %v408 = vpop.f32.mrb[0].mxu0
  %v409 = vadd.f32 %v100, %v408
  %v410 = vpop.f32.mrb[0].mxu0
  %v411 = vpop.f32.mrb[0].mxu0
  %v412 = vadd.f32 %v100, %v411
  %v413 = vpop.f32.mrb[0].mxu0
  %414 = vmatprep.mubr.bf16.mxu0 0
  %415 = vmatmul.mubr.bf16.gmra.mrb[0].mxu0 %v235
  %v416 = vpop.f32.mrb[0].mxu0
  %v417 = vadd.f32 %v100, %v416
  %v418 = vpop.f32.mrb[0].mxu0
  %v419 = vpop.f32.mrb[0].mxu0
  %v420 = vadd.f32 %v100, %v419
  %v421 = vpop.f32.mrb[0].mxu0
  %422 = vmatprep.mubr.bf16.mxu0 0
  %423 = vmatmul.mubr.bf16.gmra.mrb[0].mxu0 %v236
  %v424 = vpop.f32.mrb[0].mxu0
  %v425 = vadd.f32 %v100, %v424
  %v426 = vpop.f32.mrb[0].mxu0
  %v427 = vpop.f32.mrb[0].mxu0
  %v428 = vadd.f32 %v100, %v427
  %v429 = vpop.f32.mrb[0].mxu0
  %430 = vmatprep.mubr.bf16.mxu0 0
  %431 = vmatmul.mubr.bf16.gmra.mrb[0].mxu0 %v237
  %v432 = vpop.f32.mrb[0].mxu0
  %v433 = vadd.f32 %v100, %v432
  %v434 = vpop.f32.mrb[0].mxu0
  %v435 = vpop.f32.mrb[0].mxu0
  %v436 = vadd.f32 %v100, %v435
  %v437 = vpop.f32.mrb[0].mxu0
  %438 = vmatprep.mubr.bf16.mxu0 0
  %439 = vmatmul.mubr.bf16.gmra.mrb[0].mxu0 %v238
  %v440 = vpop.f32.mrb[0].mxu0
  %v441 = vadd.f32 %v100, %v440
  %v442 = vpop.f32.mrb[0].mxu0
  %v443 = vpop.f32.mrb[0].mxu0
  %v444 = vadd.f32 %v100, %v443
  %v445 = vpop.f32.mrb[0].mxu0
  %446 = vmatprep.mubr.bf16.mxu0 0
  %447 = vmatmul.mubr.bf16.gmra.mrb[0].mxu0 %v239
  %v448 = vpop.f32.mrb[0].mxu0
  %v449 = vadd.f32 %v100, %v448
  %v450 = vpop.f32.mrb[0].mxu0
  %v451 = vpop.f32.mrb[0].mxu0
  %v452 = vadd.f32 %v100, %v451
  %v453 = vpop.f32.mrb[0].mxu0
  %454 = vmatprep.mubr.bf16.mxu0 0
  %455 = vmatmul.mubr.bf16.gmra.mrb[0].mxu0 %v240
  %v456 = vpop.f32.mrb[0].mxu0
  %v457 = vadd.f32 %v100, %v456
  %v458 = vpop.f32.mrb[0].mxu0
  %v459 = vpop.f32.mrb[0].mxu0
  %v460 = vadd.f32 %v100, %v459
  %v461 = vpop.f32.mrb[0].mxu0
  %462 = vmatprep.mubr.bf16.mxu0 0
  %463 = vmatmul.mubr.bf16.gmra.mrb[0].mxu0 %v241
  %v464 = vpop.f32.mrb[0].mxu0
  %v465 = vadd.f32 %v100, %v464
  %v466 = vpop.f32.mrb[0].mxu0
  %v467 = vpop.f32.mrb[0].mxu0
  %v468 = vadd.f32 %v100, %v467
  %v469 = vpop.f32.mrb[0].mxu0
  %470 = vmatprep.mubr.bf16.mxu0 0
  %471 = vmatmul.mubr.bf16.gmra.mrb[0].mxu0 %v242
  %v472 = vpop.f32.mrb[0].mxu0
  %v473 = vadd.f32 %v100, %v472
  %v474 = vpop.f32.mrb[0].mxu0
  %v475 = vpop.f32.mrb[0].mxu0
  %v476 = vadd.f32 %v100, %v475
  %v477 = vpop.f32.mrb[0].mxu0
  %478 = vmatprep.mubr.bf16.mxu0 0
  %479 = vmatmul.mubr.bf16.gmra.mrb[0].mxu0 %v243
  %v480 = vpop.f32.mrb[0].mxu0
  %v481 = vadd.f32 %v100, %v480
  %v482 = vpop.f32.mrb[0].mxu0
  %v483 = vpop.f32.mrb[0].mxu0
  %v484 = vadd.f32 %v100, %v483
  %v485 = vpop.f32.mrb[0].mxu0
  %486 = vmatprep.mubr.bf16.mxu0 0
  %487 = vmatmul.mubr.bf16.gmra.mrb[0].mxu0 %v244
  %v488 = vpop.f32.mrb[0].mxu0
  %v489 = vadd.f32 %v100, %v488
  %v490 = vpop.f32.mrb[0].mxu0
  %v491 = vpop.f32.mrb[0].mxu0
  %v492 = vadd.f32 %v100, %v491
  %v493 = vpop.f32.mrb[0].mxu0
  %494 = vmatprep.mubr.bf16.mxu0 0
  %495 = vmatmul.mubr.bf16.gmra.mrb[0].mxu0 %v245
  %v496 = vpop.f32.mrb[0].mxu0
  %v497 = vadd.f32 %v100, %v496
  %v498 = vpop.f32.mrb[0].mxu0
  %v499 = vpop.f32.mrb[0].mxu0
  %v500 = vadd.f32 %v100, %v499
  %v501 = vpop.f32.mrb[0].mxu0
  %502 = vmatprep.mubr.bf16.mxu0 0
  %503 = vmatmul.mubr.bf16.gmra.mrb[0].mxu0 %v246
  %v504 = vpop.f32.mrb[0].mxu0
  %v505 = vadd.f32 %v100, %v504
  %v506 = vpop.f32.mrb[0].mxu0
  %v507 = vpop.f32.mrb[0].mxu0
  %v508 = vadd.f32 %v100, %v507
  %v509 = vpop.f32.mrb[0].mxu0
  %510 = vmatprep.mubr.bf16.mxu0 0
  %511 = vmatmul.mubr.bf16.gmra.mrb[0].mxu0 %v247
  %v512 = vpop.f32.mrb[0].mxu0
  %v513 = vadd.f32 %v100, %v512
  %v514 = vpop.f32.mrb[0].mxu0
  %v515 = vpop.f32.mrb[0].mxu0
  %v516 = vadd.f32 %v100, %v515
  %v517 = vpop.f32.mrb[0].mxu0
  %518 = vmatprep.mubr.bf16.mxu0 0
  %519 = vmatmul.mubr.bf16.gmra.mrb[0].mxu0 %v248
  %v520 = vpop.f32.mrb[0].mxu0
  %v521 = vadd.f32 %v100, %v520
  %v522 = vpop.f32.mrb[0].mxu0
  %v523 = vpop.f32.mrb[0].mxu0
  %v524 = vadd.f32 %v100, %v523
  %v525 = vpop.f32.mrb[0].mxu0
  %526 = vmatprep.mubr.bf16.mxu0 0
  %527 = vmatmul.mubr.bf16.gmra.mrb[0].mxu0 %v249
  %v528 = vpop.f32.mrb[0].mxu0
  %v529 = vadd.f32 %v100, %v528
  %v530 = vpop.f32.mrb[0].mxu0
  %v531 = vpop.f32.mrb[0].mxu0
  %v532 = vadd.f32 %v100, %v531
  %v533 = vpop.f32.mrb[0].mxu0
  %534 = vmatprep.mubr.bf16.mxu0 0
  %535 = vmatmul.mubr.bf16.gmra.mrb[0].mxu0 %v250
  %v536 = vpop.f32.mrb[0].mxu0
  %v537 = vadd.f32 %v100, %v536
  %v538 = vpop.f32.mrb[0].mxu0
  %v539 = vpop.f32.mrb[0].mxu0
  %v540 = vadd.f32 %v100, %v539
  %v541 = vpop.f32.mrb[0].mxu0
  %542 = vmatprep.mubr.bf16.mxu0 0
  %543 = vmatmul.mubr.bf16.gmra.mrb[0].mxu0 %v251
  %v544 = vpop.f32.mrb[0].mxu0
  %v545 = vadd.f32 %v100, %v544
  %v546 = vpop.f32.mrb[0].mxu0
  %v547 = vpop.f32.mrb[0].mxu0
  %v548 = vadd.f32 %v100, %v547
  %v549 = vpop.f32.mrb[0].mxu0
  %550 = vmatprep.mubr.bf16.mxu0 0
  %551 = vmatmul.mubr.bf16.gmra.mrb[0].mxu0 %v252
  %v552 = vpop.f32.mrb[0].mxu0
  %v553 = vadd.f32 %v100, %v552
  %v554 = vpop.f32.mrb[0].mxu0
  %v555 = vpop.f32.mrb[0].mxu0
  %v556 = vadd.f32 %v100, %v555
  %v557 = vpop.f32.mrb[0].mxu0
  %558 = vmatprep.mubr.bf16.mxu0 0
  %559 = vmatmul.mubr.bf16.gmra.mrb[0].mxu0 %v253
  %v560 = vpop.f32.mrb[0].mxu0
  %v561 = vadd.f32 %v100, %v560
  %v562 = vpop.f32.mrb[0].mxu0
  %v563 = vpop.f32.mrb[0].mxu0
  %v564 = vadd.f32 %v100, %v563
  %v565 = vpop.f32.mrb[0].mxu0
  %566 = vmatprep.mubr.bf16.mxu0 0
  %567 = vmatmul.mubr.bf16.gmra.mrb[0].mxu0 %v254
  %v568 = vpop.f32.mrb[0].mxu0
  %v569 = vadd.f32 %v100, %v568
  %v570 = vpop.f32.mrb[0].mxu0
  %v571 = vpop.f32.mrb[0].mxu0
  %v572 = vadd.f32 %v100, %v571
  %v573 = vpop.f32.mrb[0].mxu0
  %574 = vmatprep.mubr.bf16.mxu0 0
  %575 = vmatmul.mubr.bf16.gmra.mrb[0].mxu0 %v255
  %v576 = vpop.f32.mrb[0].mxu0
  %v577 = vadd.f32 %v100, %v576
  %v578 = vpop.f32.mrb[0].mxu0
  %v579 = vpop.f32.mrb[0].mxu0
  %v580 = vadd.f32 %v100, %v579
  %v581 = vpop.f32.mrb[0].mxu0
  %582 = vmatprep.mubr.bf16.mxu0 0
  %583 = vmatmul.mubr.bf16.gmra.mrb[0].mxu0 %v256
  %v584 = vpop.f32.mrb[0].mxu0
  %v585 = vadd.f32 %v100, %v584
  %v586 = vpop.f32.mrb[0].mxu0
  %v587 = vpop.f32.mrb[0].mxu0
  %v588 = vadd.f32 %v100, %v587
  %v589 = vpop.f32.mrb[0].mxu0
  %590 = vmatprep.mubr.bf16.mxu0 0
  %591 = vmatmul.mubr.bf16.gmra.mrb[0].mxu0 %v257
  %v592 = vpop.f32.mrb[0].mxu0
  %v593 = vadd.f32 %v100, %v592
  %v594 = vpop.f32.mrb[0].mxu0
  %v595 = vpop.f32.mrb[0].mxu0
  %v596 = vadd.f32 %v100, %v595
  %v597 = vpop.f32.mrb[0].mxu0
  %598 = vmatprep.mubr.bf16.mxu0 0
  %599 = vmatmul.mubr.bf16.gmra.mrb[0].mxu0 %v258
  %v600 = vpop.f32.mrb[0].mxu0
  %v601 = vadd.f32 %v100, %v600
  %v602 = vpop.f32.mrb[0].mxu0
  %v603 = vpop.f32.mrb[0].mxu0
  %v604 = vadd.f32 %v100, %v603
  %v605 = vpop.f32.mrb[0].mxu0
  %606 = vmatprep.mubr.bf16.mxu0 0
  %607 = vmatmul.mubr.bf16.gmra.mrb[0].mxu0 %v259
  %v608 = vpop.f32.mrb[0].mxu0
  %v609 = vadd.f32 %v100, %v608
  %v610 = vpop.f32.mrb[0].mxu0
  %v611 = vpop.f32.mrb[0].mxu0
  %v612 = vadd.f32 %v100, %v611
  %v613 = vpop.f32.mrb[0].mxu0
  %614 = vmatprep.mubr.bf16.mxu0 0
  %615 = vmatmul.mubr.bf16.gmra.mrb[0].mxu0 %v260
  %v616 = vpop.f32.mrb[0].mxu0
  %v617 = vadd.f32 %v100, %v616
  %v618 = vpop.f32.mrb[0].mxu0
  %v619 = vpop.f32.mrb[0].mxu0
  %v620 = vadd.f32 %v100, %v619
  %v621 = vpop.f32.mrb[0].mxu0
  %622 = vmatprep.mubr.bf16.mxu0 0
  %623 = vmatmul.mubr.bf16.gmra.mrb[0].mxu0 %v261
  %v624 = vpop.f32.mrb[0].mxu0
  %v625 = vadd.f32 %v100, %v624
  %v626 = vpop.f32.mrb[0].mxu0
  %v627 = vpop.f32.mrb[0].mxu0
  %v628 = vadd.f32 %v100, %v627
  %v629 = vpop.f32.mrb[0].mxu0
  %630 = vdwg.mxu0
  %v631 = vmax.f32 %v377, 0.0
  %v632 = vmax.f32 %v380, 0.0
  %v633 = vmax.f32 %v385, 0.0
  %v634 = vmax.f32 %v388, 0.0
  %v635 = vmax.f32 %v393, 0.0
  %v636 = vmax.f32 %v396, 0.0
  %v637 = vmax.f32 %v401, 0.0
  %v638 = vmax.f32 %v404, 0.0
  %v639 = vmax.f32 %v409, 0.0
  %v640 = vmax.f32 %v412, 0.0
  %v641 = vmax.f32 %v417, 0.0
  %v642 = vmax.f32 %v420, 0.0
  %v643 = vmax.f32 %v425, 0.0
  %v644 = vmax.f32 %v428, 0.0
  %v645 = vmax.f32 %v433, 0.0
  %v646 = vmax.f32 %v436, 0.0
  %v647 = vmax.f32 %v441, 0.0
  %v648 = vmax.f32 %v444, 0.0
  %v649 = vmax.f32 %v449, 0.0
  %v650 = vmax.f32 %v452, 0.0
  %v651 = vmax.f32 %v457, 0.0
  %v652 = vmax.f32 %v460, 0.0
  %v653 = vmax.f32 %v465, 0.0
  %v654 = vmax.f32 %v468, 0.0
  %v655 = vmax.f32 %v473, 0.0
  %v656 = vmax.f32 %v476, 0.0
  %v657 = vmax.f32 %v481, 0.0
  %v658 = vmax.f32 %v484, 0.0
  %v659 = vmax.f32 %v489, 0.0
  %v660 = vmax.f32 %v492, 0.0
  %v661 = vmax.f32 %v497, 0.0
  %v662 = vmax.f32 %v500, 0.0
  %v663 = vmax.f32 %v505, 0.0
  %v664 = vmax.f32 %v508, 0.0
  %v665 = vmax.f32 %v513, 0.0
  %v666 = vmax.f32 %v516, 0.0
  %v667 = vmax.f32 %v521, 0.0
  %v668 = vmax.f32 %v524, 0.0
  %v669 = vmax.f32 %v529, 0.0
  %v670 = vmax.f32 %v532, 0.0
  %v671 = vmax.f32 %v537, 0.0
  %v672 = vmax.f32 %v540, 0.0
  %v673 = vmax.f32 %v545, 0.0
  %v674 = vmax.f32 %v548, 0.0
  %v675 = vmax.f32 %v553, 0.0
  %v676 = vmax.f32 %v556, 0.0
  %v677 = vmax.f32 %v561, 0.0
  %v678 = vmax.f32 %v564, 0.0
  %v679 = vmax.f32 %v569, 0.0
  %v680 = vmax.f32 %v572, 0.0
  %v681 = vmax.f32 %v577, 0.0
  %v682 = vmax.f32 %v580, 0.0
  %v683 = vmax.f32 %v585, 0.0
  %v684 = vmax.f32 %v588, 0.0
  %v685 = vmax.f32 %v593, 0.0
  %v686 = vmax.f32 %v596, 0.0
  %v687 = vmax.f32 %v601, 0.0
  %v688 = vmax.f32 %v604, 0.0
  %v689 = vmax.f32 %v609, 0.0
  %v690 = vmax.f32 %v612, 0.0
  %v691 = vmax.f32 %v617, 0.0
  %v692 = vmax.f32 %v620, 0.0
  %v693 = vmax.f32 %v625, 0.0
  %v694 = vmax.f32 %v628, 0.0
  %v695 = vpack.c.bf16 %v632, %v631
  %v696 = vpack.c.bf16 %v634, %v633
  %v697 = vpack.c.bf16 %v636, %v635
  %v698 = vpack.c.bf16 %v638, %v637
  %v699 = vpack.c.bf16 %v640, %v639
  %v700 = vpack.c.bf16 %v642, %v641
  %v701 = vpack.c.bf16 %v644, %v643
  %v702 = vpack.c.bf16 %v646, %v645
  %v703 = vpack.c.bf16 %v648, %v647
  %v704 = vpack.c.bf16 %v650, %v649
  %v705 = vpack.c.bf16 %v652, %v651
  %v706 = vpack.c.bf16 %v654, %v653
  %v707 = vpack.c.bf16 %v656, %v655
  %v708 = vpack.c.bf16 %v658, %v657
  %v709 = vpack.c.bf16 %v660, %v659
  %v710 = vpack.c.bf16 %v662, %v661
  %v711 = vpack.c.bf16 %v664, %v663
  %v712 = vpack.c.bf16 %v666, %v665
  %v713 = vpack.c.bf16 %v668, %v667
  %v714 = vpack.c.bf16 %v670, %v669
  %v715 = vpack.c.bf16 %v672, %v671
  %v716 = vpack.c.bf16 %v674, %v673
  %v717 = vpack.c.bf16 %v676, %v675
  %v718 = vpack.c.bf16 %v678, %v677
  %v719 = vpack.c.bf16 %v680, %v679
  %v720 = vpack.c.bf16 %v682, %v681
  %v721 = vpack.c.bf16 %v684, %v683
  %v722 = vpack.c.bf16 %v686, %v685
  %v723 = vpack.c.bf16 %v688, %v687
  %v724 = vpack.c.bf16 %v690, %v689
  %v725 = vpack.c.bf16 %v692, %v691
  %v726 = vpack.c.bf16 %v694, %v693
  %v759 = vunpack.c.l.b16 %v695
  %v760 = vunpack.c.h.b16 %v695
  %v761 = vunpack.c.l.b16 %v696
  %v762 = vunpack.c.h.b16 %v696
  %v763 = vunpack.c.l.b16 %v697
  %v764 = vunpack.c.h.b16 %v697
  %v765 = vunpack.c.l.b16 %v698
  %v766 = vunpack.c.h.b16 %v698
  %v767 = vunpack.c.l.b16 %v699
  %v768 = vunpack.c.h.b16 %v699
  %v769 = vunpack.c.l.b16 %v700
  %v770 = vunpack.c.h.b16 %v700
  %v771 = vunpack.c.l.b16 %v701
  %v772 = vunpack.c.h.b16 %v701
  %v773 = vunpack.c.l.b16 %v702
  %v774 = vunpack.c.h.b16 %v702
  %v775 = vunpack.c.l.b16 %v703
  %v776 = vunpack.c.h.b16 %v703
  %v777 = vunpack.c.l.b16 %v704
  %v778 = vunpack.c.h.b16 %v704
  %v779 = vunpack.c.l.b16 %v705
  %v780 = vunpack.c.h.b16 %v705
  %v781 = vunpack.c.l.b16 %v706
  %v782 = vunpack.c.h.b16 %v706
  %v783 = vunpack.c.l.b16 %v707
  %v784 = vunpack.c.h.b16 %v707
  %v785 = vunpack.c.l.b16 %v708
  %v786 = vunpack.c.h.b16 %v708
  %v787 = vunpack.c.l.b16 %v709
  %v788 = vunpack.c.h.b16 %v709
  %v789 = vunpack.c.l.b16 %v710
  %v790 = vunpack.c.h.b16 %v710
  %v791 = vunpack.c.l.b16 %v711
  %v792 = vunpack.c.h.b16 %v711
  %v793 = vunpack.c.l.b16 %v712
  %v794 = vunpack.c.h.b16 %v712
  %v795 = vunpack.c.l.b16 %v713
  %v796 = vunpack.c.h.b16 %v713
  %v797 = vunpack.c.l.b16 %v714
  %v798 = vunpack.c.h.b16 %v714
  %v799 = vunpack.c.l.b16 %v715
  %v800 = vunpack.c.h.b16 %v715
  %v801 = vunpack.c.l.b16 %v716
  %v802 = vunpack.c.h.b16 %v716
  %v803 = vunpack.c.l.b16 %v717
  %v804 = vunpack.c.h.b16 %v717
  %v805 = vunpack.c.l.b16 %v718
  %v806 = vunpack.c.h.b16 %v718
  %v807 = vunpack.c.l.b16 %v719
  %v808 = vunpack.c.h.b16 %v719
  %v809 = vunpack.c.l.b16 %v720
  %v810 = vunpack.c.h.b16 %v720
  %v811 = vunpack.c.l.b16 %v721
  %v812 = vunpack.c.h.b16 %v721
  %v813 = vunpack.c.l.b16 %v722
  %v814 = vunpack.c.h.b16 %v722
  %v815 = vunpack.c.l.b16 %v723
  %v816 = vunpack.c.h.b16 %v723
  %v817 = vunpack.c.l.b16 %v724
  %v818 = vunpack.c.h.b16 %v724
  %v819 = vunpack.c.l.b16 %v725
  %v820 = vunpack.c.h.b16 %v725
  %v821 = vunpack.c.l.b16 %v726
  %v822 = vunpack.c.h.b16 %v726
  %v823 = vpack.c.b16 %v759, %v759
  %v824 = vpack.c.b16 %v760, %v760
  %v825 = vpack.c.b16 %v761, %v761
  %v826 = vpack.c.b16 %v762, %v762
  %v827 = vpack.c.b16 %v763, %v763
  %v828 = vpack.c.b16 %v764, %v764
  %v829 = vpack.c.b16 %v765, %v765
  %v830 = vpack.c.b16 %v766, %v766
  %v831 = vpack.c.b16 %v767, %v767
  %v832 = vpack.c.b16 %v768, %v768
  %v833 = vpack.c.b16 %v769, %v769
  %v834 = vpack.c.b16 %v770, %v770
  %v835 = vpack.c.b16 %v771, %v771
  %v836 = vpack.c.b16 %v772, %v772
  %v837 = vpack.c.b16 %v773, %v773
  %v838 = vpack.c.b16 %v774, %v774
  %v839 = vpack.c.b16 %v775, %v775
  %v840 = vpack.c.b16 %v776, %v776
  %v841 = vpack.c.b16 %v777, %v777
  %v842 = vpack.c.b16 %v778, %v778
  %v843 = vpack.c.b16 %v779, %v779
  %v844 = vpack.c.b16 %v780, %v780
  %v845 = vpack.c.b16 %v781, %v781
  %v846 = vpack.c.b16 %v782, %v782
  %v847 = vpack.c.b16 %v783, %v783
  %v848 = vpack.c.b16 %v784, %v784
  %v849 = vpack.c.b16 %v785, %v785
  %v850 = vpack.c.b16 %v786, %v786
  %v851 = vpack.c.b16 %v787, %v787
  %v852 = vpack.c.b16 %v788, %v788
  %v853 = vpack.c.b16 %v789, %v789
  %v854 = vpack.c.b16 %v790, %v790
  %v855 = vpack.c.b16 %v791, %v791
  %v856 = vpack.c.b16 %v792, %v792
  %v857 = vpack.c.b16 %v793, %v793
  %v858 = vpack.c.b16 %v794, %v794
  %v859 = vpack.c.b16 %v795, %v795
  %v860 = vpack.c.b16 %v796, %v796
  %v861 = vpack.c.b16 %v797, %v797
  %v862 = vpack.c.b16 %v798, %v798
  %v863 = vpack.c.b16 %v799, %v799
  %v864 = vpack.c.b16 %v800, %v800
  %v865 = vpack.c.b16 %v801, %v801
  %v866 = vpack.c.b16 %v802, %v802
  %v867 = vpack.c.b16 %v803, %v803
  %v868 = vpack.c.b16 %v804, %v804
  %v869 = vpack.c.b16 %v805, %v805
  %v870 = vpack.c.b16 %v806, %v806
  %v871 = vpack.c.b16 %v807, %v807
  %v872 = vpack.c.b16 %v808, %v808
  %v873 = vpack.c.b16 %v809, %v809
  %v874 = vpack.c.b16 %v810, %v810
  %v875 = vpack.c.b16 %v811, %v811
  %v876 = vpack.c.b16 %v812, %v812
  %v877 = vpack.c.b16 %v813, %v813
  %v878 = vpack.c.b16 %v814, %v814
  %v879 = vpack.c.b16 %v815, %v815
  %v880 = vpack.c.b16 %v816, %v816
  %v881 = vpack.c.b16 %v817, %v817
  %v882 = vpack.c.b16 %v818, %v818
  %v883 = vpack.c.b16 %v819, %v819
  %v884 = vpack.c.b16 %v820, %v820
  %v885 = vpack.c.b16 %v821, %v821
  %v886 = vpack.c.b16 %v822, %v822
  %951 = vst [vmem:[%s3] sm:$0xf] %v823
  %952 = vst [vmem:[%s3 + $0x4] sm:$0xf] %v824
  %953 = vst [vmem:[%s3 + $0x8] sm:$0xf] %v825
  %954 = vst [vmem:[%s3 + $0xc] sm:$0xf] %v826
  %955 = vst [vmem:[%s3 + $0x10] sm:$0xf] %v827
  %956 = vst [vmem:[%s3 + $0x14] sm:$0xf] %v828
  %957 = vst [vmem:[%s3 + $0x18] sm:$0xf] %v829
  %958 = vst [vmem:[%s3 + $0x1c] sm:$0xf] %v830
  %959 = vst [vmem:[%s3 + $0x20] sm:$0xf] %v831
  %960 = vst [vmem:[%s3 + $0x24] sm:$0xf] %v832
  %961 = vst [vmem:[%s3 + $0x28] sm:$0xf] %v833
  %962 = vst [vmem:[%s3 + $0x2c] sm:$0xf] %v834
  %963 = vst [vmem:[%s3 + $0x30] sm:$0xf] %v835
  %964 = vst [vmem:[%s3 + $0x34] sm:$0xf] %v836
  %965 = vst [vmem:[%s3 + $0x38] sm:$0xf] %v837
  %966 = vst [vmem:[%s3 + $0x3c] sm:$0xf] %v838
  %967 = vst [vmem:[%s3 + $0x40] sm:$0xf] %v839
  %968 = vst [vmem:[%s3 + $0x44] sm:$0xf] %v840
  %969 = vst [vmem:[%s3 + $0x48] sm:$0xf] %v841
  %970 = vst [vmem:[%s3 + $0x4c] sm:$0xf] %v842
  %971 = vst [vmem:[%s3 + $0x50] sm:$0xf] %v843
  %972 = vst [vmem:[%s3 + $0x54] sm:$0xf] %v844
  %973 = vst [vmem:[%s3 + $0x58] sm:$0xf] %v845
  %974 = vst [vmem:[%s3 + $0x5c] sm:$0xf] %v846
  %975 = vst [vmem:[%s3 + $0x60] sm:$0xf] %v847
  %976 = vst [vmem:[%s3 + $0x64] sm:$0xf] %v848
  %977 = vst [vmem:[%s3 + $0x68] sm:$0xf] %v849
  %978 = vst [vmem:[%s3 + $0x6c] sm:$0xf] %v850
  %979 = vst [vmem:[%s3 + $0x70] sm:$0xf] %v851
  %980 = vst [vmem:[%s3 + $0x74] sm:$0xf] %v852
  %981 = vst [vmem:[%s3 + $0x78] sm:$0xf] %v853
  %982 = vst [vmem:[%s3 + $0x7c] sm:$0xf] %v854
  %983 = vst [vmem:[%s3 + $0x80] sm:$0xf] %v855
  %984 = vst [vmem:[%s3 + $0x84] sm:$0xf] %v856
  %985 = vst [vmem:[%s3 + $0x88] sm:$0xf] %v857
  %986 = vst [vmem:[%s3 + $0x8c] sm:$0xf] %v858
  %987 = vst [vmem:[%s3 + $0x90] sm:$0xf] %v859
  %988 = vst [vmem:[%s3 + $0x94] sm:$0xf] %v860
  %989 = vst [vmem:[%s3 + $0x98] sm:$0xf] %v861
  %990 = vst [vmem:[%s3 + $0x9c] sm:$0xf] %v862
  %991 = vst [vmem:[%s3 + $0xa0] sm:$0xf] %v863
  %992 = vst [vmem:[%s3 + $0xa4] sm:$0xf] %v864
  %993 = vst [vmem:[%s3 + $0xa8] sm:$0xf] %v865
  %994 = vst [vmem:[%s3 + $0xac] sm:$0xf] %v866
  %995 = vst [vmem:[%s3 + $0xb0] sm:$0xf] %v867
  %996 = vst [vmem:[%s3 + $0xb4] sm:$0xf] %v868
  %997 = vst [vmem:[%s3 + $0xb8] sm:$0xf] %v869
  %998 = vst [vmem:[%s3 + $0xbc] sm:$0xf] %v870
  %999 = vst [vmem:[%s3 + $0xc0] sm:$0xf] %v871
  %1000 = vst [vmem:[%s3 + $0xc4] sm:$0xf] %v872
  %1001 = vst [vmem:[%s3 + $0xc8] sm:$0xf] %v873
  %1002 = vst [vmem:[%s3 + $0xcc] sm:$0xf] %v874
  %1003 = vst [vmem:[%s3 + $0xd0] sm:$0xf] %v875
  %1004 = vst [vmem:[%s3 + $0xd4] sm:$0xf] %v876
  %1005 = vst [vmem:[%s3 + $0xd8] sm:$0xf] %v877
  %1006 = vst [vmem:[%s3 + $0xdc] sm:$0xf] %v878
  %1007 = vst [vmem:[%s3 + $0xe0] sm:$0xf] %v879
  %1008 = vst [vmem:[%s3 + $0xe4] sm:$0xf] %v880
  %1009 = vst [vmem:[%s3 + $0xe8] sm:$0xf] %v881
  %1010 = vst [vmem:[%s3 + $0xec] sm:$0xf] %v882
  %1011 = vst [vmem:[%s3 + $0xf0] sm:$0xf] %v883
  %1012 = vst [vmem:[%s3 + $0xf4] sm:$0xf] %v884
  %1013 = vst [vmem:[%s3 + $0xf8] sm:$0xf] %v885
  %1014 = vst [vmem:[%s3 + $0xfc] sm:$0xf] %v886
  // Predicated region
  $region14: #{mbe_block_forward.7} parent=0 // pred_check
    _
  $region15: #{mbe_block_forward.7} parent=0 // pred_check_branch
    %1016 = sbr.rel (0) target = $region17
  $region16: #{mbe_block_forward.7} parent=0 // pred_region
    _
  $region17: #{mbe_block_forward.7} parent=0 // pred_fallthru
    _
  // Predicated region
  $region18: #{mbe_block_forward.7} parent=0 // pred_check
    _
  $region19: #{mbe_block_forward.7} parent=0 // pred_check_branch
    %1018 = sbr.rel (0) target = $region21
  $region20: #{mbe_block_forward.7} parent=0 // pred_region
    _
  $region21: #{mbe_block_forward.7} parent=0 // pred_fallthru
    _

// kernel: mbe_block_forward.8
$region0: #{mbe_block_forward.8}
  #allocation0 [shape = 'u32[]', space=smem, size = 0x4, offset = 0x4, fixed_abs, tag = 'smem constant byte address 0x4 - core index']
  #allocation1 [shape = 'u32[144,128]{1,0:T(1,128)}', space=vmem, size = 0x12000, scoped, tag = 'internal scratch']
  %s0 = inlined_call_operand.vmem [shape: bf16[512,128], index: 0, kind: input, shape index: {}]
  %s1 = inlined_call_operand.vmem [shape: bf16[128,128], index: 1, kind: input, shape index: {}]
  %s2 = inlined_call_operand.vmem [shape: f32[1,128], index: 2, kind: input, shape index: {}]
  %s3 = inlined_call_operand.vmem [shape: bf16[512,128], index: 3, kind: input, shape index: {}]
  %s4 = inlined_call_operand.vmem [shape: f32[1,128], index: 4, kind: input, shape index: {}]
  %s5 = inlined_call_operand.vmem [shape: f32[1,128], index: 5, kind: input, shape index: {}]
  %s6 = inlined_call_operand.vmem [shape: bf16[512,128], index: 6, kind: output, shape index: {0}]
  %s7 = inlined_call_operand.vmem [shape: bf16[512,128], index: 7, kind: output, shape index: {1}]
  %8 = xla_tuple %s6, %s7
  %s9 = sld [smem:[#allocation0]]
  $region42: #{mbe_block_forward.8} parent=0
    _
  %s11 = ssub.s32 1, %s9
  %s12 = scalar_select 0, %s11, %s9
  // Predicated region
  $region2: #{mbe_block_forward.8} parent=0 // pred_check
    _
  $region3: #{mbe_block_forward.8} parent=0 // pred_check_branch
    %14 = sbr.rel (0) target = $region5
  $region4: #{mbe_block_forward.8} parent=0 // pred_region
    _
  $region5: #{mbe_block_forward.8} parent=0 // pred_fallthru
    _
  // Predicated region
  $region6: #{mbe_block_forward.8} parent=0 // pred_check
    _
  $region7: #{mbe_block_forward.8} parent=0 // pred_check_branch
    %16 = sbr.rel (0) target = $region9
  $region8: #{mbe_block_forward.8} parent=0 // pred_region
    _
  $region9: #{mbe_block_forward.8} parent=0 // pred_fallthru
    _
  // Predicated region
  $region10: #{mbe_block_forward.8} parent=0 // pred_check
    _
  $region11: #{mbe_block_forward.8} parent=0 // pred_check_branch
    %18 = sbr.rel (0) target = $region13
  $region12: #{mbe_block_forward.8} parent=0 // pred_region
    _
  $region13: #{mbe_block_forward.8} parent=0 // pred_fallthru
    _
  // Predicated region
  $region14: #{mbe_block_forward.8} parent=0 // pred_check
    _
  $region15: #{mbe_block_forward.8} parent=0 // pred_check_branch
    %20 = sbr.rel (0) target = $region17
  $region16: #{mbe_block_forward.8} parent=0 // pred_region
    _
  $region17: #{mbe_block_forward.8} parent=0 // pred_fallthru
    _
  // Predicated region
  $region18: #{mbe_block_forward.8} parent=0 // pred_check
    _
  $region19: #{mbe_block_forward.8} parent=0 // pred_check_branch
    %22 = sbr.rel (0) target = $region21
  $region20: #{mbe_block_forward.8} parent=0 // pred_region
    _
  $region21: #{mbe_block_forward.8} parent=0 // pred_fallthru
    _
  // Predicated region
  $region22: #{mbe_block_forward.8} parent=0 // pred_check
    _
  $region23: #{mbe_block_forward.8} parent=0 // pred_check_branch
    %24 = sbr.rel (0) target = $region25
  $region24: #{mbe_block_forward.8} parent=0 // pred_region
    _
  $region25: #{mbe_block_forward.8} parent=0 // pred_fallthru
    _
  %v26 = vld [vmem:[%s3] sm:$0xf]
  %v27 = vld [vmem:[%s3 + $0x4] sm:$0xf]
  %v28 = vld [vmem:[%s3 + $0x8] sm:$0xf]
  %v29 = vld [vmem:[%s3 + $0xc] sm:$0xf]
  %v30 = vld [vmem:[%s3 + $0x10] sm:$0xf]
  %v31 = vld [vmem:[%s3 + $0x14] sm:$0xf]
  %v32 = vld [vmem:[%s3 + $0x18] sm:$0xf]
  %v33 = vld [vmem:[%s3 + $0x1c] sm:$0xf]
  %v34 = vld [vmem:[%s3 + $0x20] sm:$0xf]
  %v35 = vld [vmem:[%s3 + $0x24] sm:$0xf]
  %v36 = vld [vmem:[%s3 + $0x28] sm:$0xf]
  %v37 = vld [vmem:[%s3 + $0x2c] sm:$0xf]
  %v38 = vld [vmem:[%s3 + $0x30] sm:$0xf]
  %v39 = vld [vmem:[%s3 + $0x34] sm:$0xf]
  %v40 = vld [vmem:[%s3 + $0x38] sm:$0xf]
  %v41 = vld [vmem:[%s3 + $0x3c] sm:$0xf]
  %v42 = vld [vmem:[%s3 + $0x40] sm:$0xf]
  %v43 = vld [vmem:[%s3 + $0x44] sm:$0xf]
  %v44 = vld [vmem:[%s3 + $0x48] sm:$0xf]
  %v45 = vld [vmem:[%s3 + $0x4c] sm:$0xf]
  %v46 = vld [vmem:[%s3 + $0x50] sm:$0xf]
  %v47 = vld [vmem:[%s3 + $0x54] sm:$0xf]
  %v48 = vld [vmem:[%s3 + $0x58] sm:$0xf]
  %v49 = vld [vmem:[%s3 + $0x5c] sm:$0xf]
  %v50 = vld [vmem:[%s3 + $0x60] sm:$0xf]
  %v51 = vld [vmem:[%s3 + $0x64] sm:$0xf]
  %v52 = vld [vmem:[%s3 + $0x68] sm:$0xf]
  %v53 = vld [vmem:[%s3 + $0x6c] sm:$0xf]
  %v54 = vld [vmem:[%s3 + $0x70] sm:$0xf]
  %v55 = vld [vmem:[%s3 + $0x74] sm:$0xf]
  %v56 = vld [vmem:[%s3 + $0x78] sm:$0xf]
  %v57 = vld [vmem:[%s3 + $0x7c] sm:$0xf]
  %v58 = vld [vmem:[%s3 + $0x80] sm:$0xf]
  %v59 = vld [vmem:[%s3 + $0x84] sm:$0xf]
  %v60 = vld [vmem:[%s3 + $0x88] sm:$0xf]
  %v61 = vld [vmem:[%s3 + $0x8c] sm:$0xf]
  %v62 = vld [vmem:[%s3 + $0x90] sm:$0xf]
  %v63 = vld [vmem:[%s3 + $0x94] sm:$0xf]
  %v64 = vld [vmem:[%s3 + $0x98] sm:$0xf]
  %v65 = vld [vmem:[%s3 + $0x9c] sm:$0xf]
  %v66 = vld [vmem:[%s3 + $0xa0] sm:$0xf]
  %v67 = vld [vmem:[%s3 + $0xa4] sm:$0xf]
  %v68 = vld [vmem:[%s3 + $0xa8] sm:$0xf]
  %v69 = vld [vmem:[%s3 + $0xac] sm:$0xf]
  %v70 = vld [vmem:[%s3 + $0xb0] sm:$0xf]
  %v71 = vld [vmem:[%s3 + $0xb4] sm:$0xf]
  %v72 = vld [vmem:[%s3 + $0xb8] sm:$0xf]
  %v73 = vld [vmem:[%s3 + $0xbc] sm:$0xf]
  %v74 = vld [vmem:[%s3 + $0xc0] sm:$0xf]
  %v75 = vld [vmem:[%s3 + $0xc4] sm:$0xf]
  %v76 = vld [vmem:[%s3 + $0xc8] sm:$0xf]
  %v77 = vld [vmem:[%s3 + $0xcc] sm:$0xf]
  %v78 = vld [vmem:[%s3 + $0xd0] sm:$0xf]
  %v79 = vld [vmem:[%s3 + $0xd4] sm:$0xf]
  %v80 = vld [vmem:[%s3 + $0xd8] sm:$0xf]
  %v81 = vld [vmem:[%s3 + $0xdc] sm:$0xf]
  %v82 = vld [vmem:[%s3 + $0xe0] sm:$0xf]
  %v83 = vld [vmem:[%s3 + $0xe4] sm:$0xf]
  %v84 = vld [vmem:[%s3 + $0xe8] sm:$0xf]
  %v85 = vld [vmem:[%s3 + $0xec] sm:$0xf]
  %v86 = vld [vmem:[%s3 + $0xf0] sm:$0xf]
  %v87 = vld [vmem:[%s3 + $0xf4] sm:$0xf]
  %v88 = vld [vmem:[%s3 + $0xf8] sm:$0xf]
  %v89 = vld [vmem:[%s3 + $0xfc] sm:$0xf]
  %v90 = vunpack.c.l.bf16 %v26
  %v91 = vunpack.c.l.bf16 %v27
  %v92 = vunpack.c.l.bf16 %v28
  %v93 = vunpack.c.l.bf16 %v29
  %v94 = vunpack.c.l.bf16 %v30
  %v95 = vunpack.c.l.bf16 %v31
  %v96 = vunpack.c.l.bf16 %v32
  %v97 = vunpack.c.l.bf16 %v33
  %v98 = vunpack.c.l.bf16 %v34
  %v99 = vunpack.c.l.bf16 %v35
  %v100 = vunpack.c.l.bf16 %v36
  %v101 = vunpack.c.l.bf16 %v37
  %v102 = vunpack.c.l.bf16 %v38
  %v103 = vunpack.c.l.bf16 %v39
  %v104 = vunpack.c.l.bf16 %v40
  %v105 = vunpack.c.l.bf16 %v41
  %v106 = vunpack.c.l.bf16 %v42
  %v107 = vunpack.c.l.bf16 %v43
  %v108 = vunpack.c.l.bf16 %v44
  %v109 = vunpack.c.l.bf16 %v45
  %v110 = vunpack.c.l.bf16 %v46
  %v111 = vunpack.c.l.bf16 %v47
  %v112 = vunpack.c.l.bf16 %v48
  %v113 = vunpack.c.l.bf16 %v49
  %v114 = vunpack.c.l.bf16 %v50
  %v115 = vunpack.c.l.bf16 %v51
  %v116 = vunpack.c.l.bf16 %v52
  %v117 = vunpack.c.l.bf16 %v53
  %v118 = vunpack.c.l.bf16 %v54
  %v119 = vunpack.c.l.bf16 %v55
  %v120 = vunpack.c.l.bf16 %v56
  %v121 = vunpack.c.l.bf16 %v57
  %v122 = vunpack.c.l.bf16 %v58
  %v123 = vunpack.c.l.bf16 %v59
  %v124 = vunpack.c.l.bf16 %v60
  %v125 = vunpack.c.l.bf16 %v61
  %v126 = vunpack.c.l.bf16 %v62
  %v127 = vunpack.c.l.bf16 %v63
  %v128 = vunpack.c.l.bf16 %v64
  %v129 = vunpack.c.l.bf16 %v65
  %v130 = vunpack.c.l.bf16 %v66
  %v131 = vunpack.c.l.bf16 %v67
  %v132 = vunpack.c.l.bf16 %v68
  %v133 = vunpack.c.l.bf16 %v69
  %v134 = vunpack.c.l.bf16 %v70
  %v135 = vunpack.c.l.bf16 %v71
  %v136 = vunpack.c.l.bf16 %v72
  %v137 = vunpack.c.l.bf16 %v73
  %v138 = vunpack.c.l.bf16 %v74
  %v139 = vunpack.c.l.bf16 %v75
  %v140 = vunpack.c.l.bf16 %v76
  %v141 = vunpack.c.l.bf16 %v77
  %v142 = vunpack.c.l.bf16 %v78
  %v143 = vunpack.c.l.bf16 %v79
  %v144 = vunpack.c.l.bf16 %v80
  %v145 = vunpack.c.l.bf16 %v81
  %v146 = vunpack.c.l.bf16 %v82
  %v147 = vunpack.c.l.bf16 %v83
  %v148 = vunpack.c.l.bf16 %v84
  %v149 = vunpack.c.l.bf16 %v85
  %v150 = vunpack.c.l.bf16 %v86
  %v151 = vunpack.c.l.bf16 %v87
  %v152 = vunpack.c.l.bf16 %v88
  %v153 = vunpack.c.l.bf16 %v89
  %v154 = vld [vmem:[%s4] sm:$0x1]
  %v156 = vlaneseq
  %v157 = vshrl.u32 %v156, 7
  %v158 = vsub.s32 0, %v157
  %v159 = vrot.slane %v154, %v158
  %v161 = vmul.f32 %v90, %v159
  %v162 = vmul.f32 %v91, %v159
  %v163 = vmul.f32 %v92, %v159
  %v164 = vmul.f32 %v93, %v159
  %v165 = vmul.f32 %v94, %v159
  %v166 = vmul.f32 %v95, %v159
  %v167 = vmul.f32 %v96, %v159
  %v168 = vmul.f32 %v97, %v159
  %v169 = vmul.f32 %v98, %v159
  %v170 = vmul.f32 %v99, %v159
  %v171 = vmul.f32 %v100, %v159
  %v172 = vmul.f32 %v101, %v159
  %v173 = vmul.f32 %v102, %v159
  %v174 = vmul.f32 %v103, %v159
  %v175 = vmul.f32 %v104, %v159
  %v176 = vmul.f32 %v105, %v159
  %v177 = vmul.f32 %v106, %v159
  %v178 = vmul.f32 %v107, %v159
  %v179 = vmul.f32 %v108, %v159
  %v180 = vmul.f32 %v109, %v159
  %v181 = vmul.f32 %v110, %v159
  %v182 = vmul.f32 %v111, %v159
  %v183 = vmul.f32 %v112, %v159
  %v184 = vmul.f32 %v113, %v159
  %v185 = vmul.f32 %v114, %v159
  %v186 = vmul.f32 %v115, %v159
  %v187 = vmul.f32 %v116, %v159
  %v188 = vmul.f32 %v117, %v159
  %v189 = vmul.f32 %v118, %v159
  %v190 = vmul.f32 %v119, %v159
  %v191 = vmul.f32 %v120, %v159
  %v192 = vmul.f32 %v121, %v159
  %v193 = vmul.f32 %v122, %v159
  %v194 = vmul.f32 %v123, %v159
  %v195 = vmul.f32 %v124, %v159
  %v196 = vmul.f32 %v125, %v159
  %v197 = vmul.f32 %v126, %v159
  %v198 = vmul.f32 %v127, %v159
  %v199 = vmul.f32 %v128, %v159
  %v200 = vmul.f32 %v129, %v159
  %v201 = vmul.f32 %v130, %v159
  %v202 = vmul.f32 %v131, %v159
  %v203 = vmul.f32 %v132, %v159
  %v204 = vmul.f32 %v133, %v159
  %v205 = vmul.f32 %v134, %v159
  %v206 = vmul.f32 %v135, %v159
  %v207 = vmul.f32 %v136, %v159
  %v208 = vmul.f32 %v137, %v159
  %v209 = vmul.f32 %v138, %v159
  %v210 = vmul.f32 %v139, %v159
  %v211 = vmul.f32 %v140, %v159
  %v212 = vmul.f32 %v141, %v159
  %v213 = vmul.f32 %v142, %v159
  %v214 = vmul.f32 %v143, %v159
  %v215 = vmul.f32 %v144, %v159
  %v216 = vmul.f32 %v145, %v159
  %v217 = vmul.f32 %v146, %v159
  %v218 = vmul.f32 %v147, %v159
  %v219 = vmul.f32 %v148, %v159
  %v220 = vmul.f32 %v149, %v159
  %v221 = vmul.f32 %v150, %v159
  %v222 = vmul.f32 %v151, %v159
  %v223 = vmul.f32 %v152, %v159
  %v224 = vmul.f32 %v153, %v159
  %v225 = vld [vmem:[%s5] sm:$0x1]
  %v227 = vlaneseq
  %v228 = vshrl.u32 %v227, 7
  %v229 = vsub.s32 0, %v228
  %v230 = vrot.slane %v225, %v229
  %v232 = vadd.f32 %v161, %v230
  %v233 = vadd.f32 %v162, %v230
  %v234 = vadd.f32 %v163, %v230
  %v235 = vadd.f32 %v164, %v230
  %v236 = vadd.f32 %v165, %v230
  %v237 = vadd.f32 %v166, %v230
  %v238 = vadd.f32 %v167, %v230
  %v239 = vadd.f32 %v168, %v230
  %v240 = vadd.f32 %v169, %v230
  %v241 = vadd.f32 %v170, %v230
  %v242 = vadd.f32 %v171, %v230
  %v243 = vadd.f32 %v172, %v230
  %v244 = vadd.f32 %v173, %v230
  %v245 = vadd.f32 %v174, %v230
  %v246 = vadd.f32 %v175, %v230
  %v247 = vadd.f32 %v176, %v230
  %v248 = vadd.f32 %v177, %v230
  %v249 = vadd.f32 %v178, %v230
  %v250 = vadd.f32 %v179, %v230
  %v251 = vadd.f32 %v180, %v230
  %v252 = vadd.f32 %v181, %v230
  %v253 = vadd.f32 %v182, %v230
  %v254 = vadd.f32 %v183, %v230
  %v255 = vadd.f32 %v184, %v230
  %v256 = vadd.f32 %v185, %v230
  %v257 = vadd.f32 %v186, %v230
  %v258 = vadd.f32 %v187, %v230
  %v259 = vadd.f32 %v188, %v230
  %v260 = vadd.f32 %v189, %v230
  %v261 = vadd.f32 %v190, %v230
  %v262 = vadd.f32 %v191, %v230
  %v263 = vadd.f32 %v192, %v230
  %v264 = vadd.f32 %v193, %v230
  %v265 = vadd.f32 %v194, %v230
  %v266 = vadd.f32 %v195, %v230
  %v267 = vadd.f32 %v196, %v230
  %v268 = vadd.f32 %v197, %v230
  %v269 = vadd.f32 %v198, %v230
  %v270 = vadd.f32 %v199, %v230
  %v271 = vadd.f32 %v200, %v230
  %v272 = vadd.f32 %v201, %v230
  %v273 = vadd.f32 %v202, %v230
  %v274 = vadd.f32 %v203, %v230
  %v275 = vadd.f32 %v204, %v230
  %v276 = vadd.f32 %v205, %v230
  %v277 = vadd.f32 %v206, %v230
  %v278 = vadd.f32 %v207, %v230
  %v279 = vadd.f32 %v208, %v230
  %v280 = vadd.f32 %v209, %v230
  %v281 = vadd.f32 %v210, %v230
  %v282 = vadd.f32 %v211, %v230
  %v283 = vadd.f32 %v212, %v230
  %v284 = vadd.f32 %v213, %v230
  %v285 = vadd.f32 %v214, %v230
  %v286 = vadd.f32 %v215, %v230
  %v287 = vadd.f32 %v216, %v230
  %v288 = vadd.f32 %v217, %v230
  %v289 = vadd.f32 %v218, %v230
  %v290 = vadd.f32 %v219, %v230
  %v291 = vadd.f32 %v220, %v230
  %v292 = vadd.f32 %v221, %v230
  %v293 = vadd.f32 %v222, %v230
  %v294 = vadd.f32 %v223, %v230
  %v295 = vadd.f32 %v224, %v230
  %v296 = vmax.f32 %v232, 0.0
  %v297 = vmax.f32 %v233, 0.0
  %v298 = vmax.f32 %v234, 0.0
  %v299 = vmax.f32 %v235, 0.0
  %v300 = vmax.f32 %v236, 0.0
  %v301 = vmax.f32 %v237, 0.0
  %v302 = vmax.f32 %v238, 0.0
  %v303 = vmax.f32 %v239, 0.0
  %v304 = vmax.f32 %v240, 0.0
  %v305 = vmax.f32 %v241, 0.0
  %v306 = vmax.f32 %v242, 0.0
  %v307 = vmax.f32 %v243, 0.0
  %v308 = vmax.f32 %v244, 0.0
  %v309 = vmax.f32 %v245, 0.0
  %v310 = vmax.f32 %v246, 0.0
  %v311 = vmax.f32 %v247, 0.0
  %v312 = vmax.f32 %v248, 0.0
  %v313 = vmax.f32 %v249, 0.0
  %v314 = vmax.f32 %v250, 0.0
  %v315 = vmax.f32 %v251, 0.0
  %v316 = vmax.f32 %v252, 0.0
  %v317 = vmax.f32 %v253, 0.0
  %v318 = vmax.f32 %v254, 0.0
  %v319 = vmax.f32 %v255, 0.0
  %v320 = vmax.f32 %v256, 0.0
  %v321 = vmax.f32 %v257, 0.0
  %v322 = vmax.f32 %v258, 0.0
  %v323 = vmax.f32 %v259, 0.0
  %v324 = vmax.f32 %v260, 0.0
  %v325 = vmax.f32 %v261, 0.0
  %v326 = vmax.f32 %v262, 0.0
  %v327 = vmax.f32 %v263, 0.0
  %v328 = vmax.f32 %v264, 0.0
  %v329 = vmax.f32 %v265, 0.0
  %v330 = vmax.f32 %v266, 0.0
  %v331 = vmax.f32 %v267, 0.0
  %v332 = vmax.f32 %v268, 0.0
  %v333 = vmax.f32 %v269, 0.0
  %v334 = vmax.f32 %v270, 0.0
  %v335 = vmax.f32 %v271, 0.0
  %v336 = vmax.f32 %v272, 0.0
  %v337 = vmax.f32 %v273, 0.0
  %v338 = vmax.f32 %v274, 0.0
  %v339 = vmax.f32 %v275, 0.0
  %v340 = vmax.f32 %v276, 0.0
  %v341 = vmax.f32 %v277, 0.0
  %v342 = vmax.f32 %v278, 0.0
  %v343 = vmax.f32 %v279, 0.0
  %v344 = vmax.f32 %v280, 0.0
  %v345 = vmax.f32 %v281, 0.0
  %v346 = vmax.f32 %v282, 0.0
  %v347 = vmax.f32 %v283, 0.0
  %v348 = vmax.f32 %v284, 0.0
  %v349 = vmax.f32 %v285, 0.0
  %v350 = vmax.f32 %v286, 0.0
  %v351 = vmax.f32 %v287, 0.0
  %v352 = vmax.f32 %v288, 0.0
  %v353 = vmax.f32 %v289, 0.0
  %v354 = vmax.f32 %v290, 0.0
  %v355 = vmax.f32 %v291, 0.0
  %v356 = vmax.f32 %v292, 0.0
  %v357 = vmax.f32 %v293, 0.0
  %v358 = vmax.f32 %v294, 0.0
  %v359 = vmax.f32 %v295, 0.0
  %v360 = vld [vmem:[%s0] sm:$0xf]
  %v361 = vld [vmem:[%s0 + $0x4] sm:$0xf]
  %v362 = vld [vmem:[%s0 + $0x8] sm:$0xf]
  %v363 = vld [vmem:[%s0 + $0xc] sm:$0xf]
  %v364 = vld [vmem:[%s0 + $0x10] sm:$0xf]
  %v365 = vld [vmem:[%s0 + $0x14] sm:$0xf]
  %v366 = vld [vmem:[%s0 + $0x18] sm:$0xf]
  %v367 = vld [vmem:[%s0 + $0x1c] sm:$0xf]
  %v368 = vld [vmem:[%s0 + $0x20] sm:$0xf]
  %v369 = vld [vmem:[%s0 + $0x24] sm:$0xf]
  %v370 = vld [vmem:[%s0 + $0x28] sm:$0xf]
  %v371 = vld [vmem:[%s0 + $0x2c] sm:$0xf]
  %v372 = vld [vmem:[%s0 + $0x30] sm:$0xf]
  %v373 = vld [vmem:[%s0 + $0x34] sm:$0xf]
  %v374 = vld [vmem:[%s0 + $0x38] sm:$0xf]
  %v375 = vld [vmem:[%s0 + $0x3c] sm:$0xf]
  %v376 = vld [vmem:[%s0 + $0x40] sm:$0xf]
  %v377 = vld [vmem:[%s0 + $0x44] sm:$0xf]
  %v378 = vld [vmem:[%s0 + $0x48] sm:$0xf]
  %v379 = vld [vmem:[%s0 + $0x4c] sm:$0xf]
  %v380 = vld [vmem:[%s0 + $0x50] sm:$0xf]
  %v381 = vld [vmem:[%s0 + $0x54] sm:$0xf]
  %v382 = vld [vmem:[%s0 + $0x58] sm:$0xf]
  %v383 = vld [vmem:[%s0 + $0x5c] sm:$0xf]
  %v384 = vld [vmem:[%s0 + $0x60] sm:$0xf]
  %v385 = vld [vmem:[%s0 + $0x64] sm:$0xf]
  %v386 = vld [vmem:[%s0 + $0x68] sm:$0xf]
  %v387 = vld [vmem:[%s0 + $0x6c] sm:$0xf]
  %v388 = vld [vmem:[%s0 + $0x70] sm:$0xf]
  %v389 = vld [vmem:[%s0 + $0x74] sm:$0xf]
  %v390 = vld [vmem:[%s0 + $0x78] sm:$0xf]
  %v391 = vld [vmem:[%s0 + $0x7c] sm:$0xf]
  %v392 = vld [vmem:[%s0 + $0x80] sm:$0xf]
  %v393 = vld [vmem:[%s0 + $0x84] sm:$0xf]
  %v394 = vld [vmem:[%s0 + $0x88] sm:$0xf]
  %v395 = vld [vmem:[%s0 + $0x8c] sm:$0xf]
  %v396 = vld [vmem:[%s0 + $0x90] sm:$0xf]
  %v397 = vld [vmem:[%s0 + $0x94] sm:$0xf]
  %v398 = vld [vmem:[%s0 + $0x98] sm:$0xf]
  %v399 = vld [vmem:[%s0 + $0x9c] sm:$0xf]
  %v400 = vld [vmem:[%s0 + $0xa0] sm:$0xf]
  %v401 = vld [vmem:[%s0 + $0xa4] sm:$0xf]
  %v402 = vld [vmem:[%s0 + $0xa8] sm:$0xf]
  %v403 = vld [vmem:[%s0 + $0xac] sm:$0xf]
  %v404 = vld [vmem:[%s0 + $0xb0] sm:$0xf]
  %v405 = vld [vmem:[%s0 + $0xb4] sm:$0xf]
  %v406 = vld [vmem:[%s0 + $0xb8] sm:$0xf]
  %v407 = vld [vmem:[%s0 + $0xbc] sm:$0xf]
  %v408 = vld [vmem:[%s0 + $0xc0] sm:$0xf]
  %v409 = vld [vmem:[%s0 + $0xc4] sm:$0xf]
  %v410 = vld [vmem:[%s0 + $0xc8] sm:$0xf]
  %v411 = vld [vmem:[%s0 + $0xcc] sm:$0xf]
  %v412 = vld [vmem:[%s0 + $0xd0] sm:$0xf]
  %v413 = vld [vmem:[%s0 + $0xd4] sm:$0xf]
  %v414 = vld [vmem:[%s0 + $0xd8] sm:$0xf]
  %v415 = vld [vmem:[%s0 + $0xdc] sm:$0xf]
  %v416 = vld [vmem:[%s0 + $0xe0] sm:$0xf]
  %v417 = vld [vmem:[%s0 + $0xe4] sm:$0xf]
  %v418 = vld [vmem:[%s0 + $0xe8] sm:$0xf]
  %v419 = vld [vmem:[%s0 + $0xec] sm:$0xf]
  %v420 = vld [vmem:[%s0 + $0xf0] sm:$0xf]
  %v421 = vld [vmem:[%s0 + $0xf4] sm:$0xf]
  %v422 = vld [vmem:[%s0 + $0xf8] sm:$0xf]
  %v423 = vld [vmem:[%s0 + $0xfc] sm:$0xf]
  %v424 = vld [vmem:[%s1] sm:$0xf]
  %v425 = vld [vmem:[%s1 + $0x4] sm:$0xf]
  %v426 = vld [vmem:[%s1 + $0x8] sm:$0xf]
  %v427 = vld [vmem:[%s1 + $0xc] sm:$0xf]
  %v428 = vld [vmem:[%s1 + $0x10] sm:$0xf]
  %v429 = vld [vmem:[%s1 + $0x14] sm:$0xf]
  %v430 = vld [vmem:[%s1 + $0x18] sm:$0xf]
  %v431 = vld [vmem:[%s1 + $0x1c] sm:$0xf]
  %v432 = vld [vmem:[%s1 + $0x20] sm:$0xf]
  %v433 = vld [vmem:[%s1 + $0x24] sm:$0xf]
  %v434 = vld [vmem:[%s1 + $0x28] sm:$0xf]
  %v435 = vld [vmem:[%s1 + $0x2c] sm:$0xf]
  %v436 = vld [vmem:[%s1 + $0x30] sm:$0xf]
  %v437 = vld [vmem:[%s1 + $0x34] sm:$0xf]
  %v438 = vld [vmem:[%s1 + $0x38] sm:$0xf]
  %v439 = vld [vmem:[%s1 + $0x3c] sm:$0xf]
  %v440 = vld [vmem:[%s2] sm:$0x1]
  %v442 = vlaneseq
  %v443 = vshrl.u32 %v442, 7
  %v444 = vsub.s32 0, %v443
  %v445 = vrot.slane %v440, %v444
  %v511 = vunpack.c.l.b16 %v360
  %v512 = vunpack.c.l.b16 %v361
  %v513 = vunpack.c.l.b16 %v362
  %v514 = vunpack.c.l.b16 %v363
  %v515 = vunpack.c.l.b16 %v364
  %v516 = vunpack.c.l.b16 %v365
  %v517 = vunpack.c.l.b16 %v366
  %v518 = vunpack.c.l.b16 %v367
  %v519 = vunpack.c.l.b16 %v368
  %v520 = vunpack.c.l.b16 %v369
  %v521 = vunpack.c.l.b16 %v370
  %v522 = vunpack.c.l.b16 %v371
  %v523 = vunpack.c.l.b16 %v372
  %v524 = vunpack.c.l.b16 %v373
  %v525 = vunpack.c.l.b16 %v374
  %v526 = vunpack.c.l.b16 %v375
  %v527 = vunpack.c.l.b16 %v376
  %v528 = vunpack.c.l.b16 %v377
  %v529 = vunpack.c.l.b16 %v378
  %v530 = vunpack.c.l.b16 %v379
  %v531 = vunpack.c.l.b16 %v380
  %v532 = vunpack.c.l.b16 %v381
  %v533 = vunpack.c.l.b16 %v382
  %v534 = vunpack.c.l.b16 %v383
  %v535 = vunpack.c.l.b16 %v384
  %v536 = vunpack.c.l.b16 %v385
  %v537 = vunpack.c.l.b16 %v386
  %v538 = vunpack.c.l.b16 %v387
  %v539 = vunpack.c.l.b16 %v388
  %v540 = vunpack.c.l.b16 %v389
  %v541 = vunpack.c.l.b16 %v390
  %v542 = vunpack.c.l.b16 %v391
  %v543 = vunpack.c.l.b16 %v392
  %v544 = vunpack.c.l.b16 %v393
  %v545 = vunpack.c.l.b16 %v394
  %v546 = vunpack.c.l.b16 %v395
  %v547 = vunpack.c.l.b16 %v396
  %v548 = vunpack.c.l.b16 %v397
  %v549 = vunpack.c.l.b16 %v398
  %v550 = vunpack.c.l.b16 %v399
  %v551 = vunpack.c.l.b16 %v400
  %v552 = vunpack.c.l.b16 %v401
  %v553 = vunpack.c.l.b16 %v402
  %v554 = vunpack.c.l.b16 %v403
  %v555 = vunpack.c.l.b16 %v404
  %v556 = vunpack.c.l.b16 %v405
  %v557 = vunpack.c.l.b16 %v406
  %v558 = vunpack.c.l.b16 %v407
  %v559 = vunpack.c.l.b16 %v408
  %v560 = vunpack.c.l.b16 %v409
  %v561 = vunpack.c.l.b16 %v410
  %v562 = vunpack.c.l.b16 %v411
  %v563 = vunpack.c.l.b16 %v412
  %v564 = vunpack.c.l.b16 %v413
  %v565 = vunpack.c.l.b16 %v414
  %v566 = vunpack.c.l.b16 %v415
  %v567 = vunpack.c.l.b16 %v416
  %v568 = vunpack.c.l.b16 %v417
  %v569 = vunpack.c.l.b16 %v418
  %v570 = vunpack.c.l.b16 %v419
  %v571 = vunpack.c.l.b16 %v420
  %v572 = vunpack.c.l.b16 %v421
  %v573 = vunpack.c.l.b16 %v422
  %v574 = vunpack.c.l.b16 %v423
  %v575 = vpack.c.b16 %v512, %v511
  %v576 = vpack.c.b16 %v514, %v513
  %v577 = vpack.c.b16 %v516, %v515
  %v578 = vpack.c.b16 %v518, %v517
  %v579 = vpack.c.b16 %v520, %v519
  %v580 = vpack.c.b16 %v522, %v521
  %v581 = vpack.c.b16 %v524, %v523
  %v582 = vpack.c.b16 %v526, %v525
  %v583 = vpack.c.b16 %v528, %v527
  %v584 = vpack.c.b16 %v530, %v529
  %v585 = vpack.c.b16 %v532, %v531
  %v586 = vpack.c.b16 %v534, %v533
  %v587 = vpack.c.b16 %v536, %v535
  %v588 = vpack.c.b16 %v538, %v537
  %v589 = vpack.c.b16 %v540, %v539
  %v590 = vpack.c.b16 %v542, %v541
  %v591 = vpack.c.b16 %v544, %v543
  %v592 = vpack.c.b16 %v546, %v545
  %v593 = vpack.c.b16 %v548, %v547
  %v594 = vpack.c.b16 %v550, %v549
  %v595 = vpack.c.b16 %v552, %v551
  %v596 = vpack.c.b16 %v554, %v553
  %v597 = vpack.c.b16 %v556, %v555
  %v598 = vpack.c.b16 %v558, %v557
  %v599 = vpack.c.b16 %v560, %v559
  %v600 = vpack.c.b16 %v562, %v561
  %v601 = vpack.c.b16 %v564, %v563
  %v602 = vpack.c.b16 %v566, %v565
  %v603 = vpack.c.b16 %v568, %v567
  %v604 = vpack.c.b16 %v570, %v569
  %v605 = vpack.c.b16 %v572, %v571
  %v606 = vpack.c.b16 %v574, %v573
  %v655 = vunpack.c.l.b16 %v424
  %v656 = vunpack.c.l.b16 %v425
  %v657 = vunpack.c.l.b16 %v426
  %v658 = vunpack.c.l.b16 %v427
  %v659 = vunpack.c.l.b16 %v428
  %v660 = vunpack.c.l.b16 %v429
  %v661 = vunpack.c.l.b16 %v430
  %v662 = vunpack.c.l.b16 %v431
  %v663 = vunpack.c.l.b16 %v432
  %v664 = vunpack.c.l.b16 %v433
  %v665 = vunpack.c.l.b16 %v434
  %v666 = vunpack.c.l.b16 %v435
  %v667 = vunpack.c.l.b16 %v436
  %v668 = vunpack.c.l.b16 %v437
  %v669 = vunpack.c.l.b16 %v438
  %v670 = vunpack.c.l.b16 %v439
  %v671 = vpack.c.b16 %v656, %v655
  %v672 = vpack.c.b16 %v658, %v657
  %v673 = vpack.c.b16 %v660, %v659
  %v674 = vpack.c.b16 %v662, %v661
  %v675 = vpack.c.b16 %v664, %v663
  %v676 = vpack.c.b16 %v666, %v665
  %v677 = vpack.c.b16 %v668, %v667
  %v678 = vpack.c.b16 %v670, %v669
  %687 = vmatprep.subr.bf16.mxu0 0
  %688 = vmatpush1.bf16.msra.mxu0 %v671
  %689 = vmatprep.subr.bf16.mxu0 0
  %690 = vmatpush1.bf16.msra.mxu0 %v672
  %691 = vmatprep.subr.bf16.mxu0 0
  %692 = vmatpush1.bf16.msra.mxu0 %v673
  %693 = vmatprep.subr.bf16.mxu0 0
  %694 = vmatpush1.bf16.msra.mxu0 %v674
  %695 = vmatprep.subr.bf16.mxu0 0
  %696 = vmatpush1.bf16.msra.mxu0 %v675
  %697 = vmatprep.subr.bf16.mxu0 0
  %698 = vmatpush1.bf16.msra.mxu0 %v676
  %699 = vmatprep.subr.bf16.mxu0 0
  %700 = vmatpush1.bf16.msra.mxu0 %v677
  %701 = vmatprep.subr.bf16.mxu0 0
  %702 = vmatpush1.bf16.msra.mxu0 %v678
  %703 = vmatprep.subr.bf16.mxu0 0
  %704 = vmatpush1.bf16.msra.mxu0 0
  %705 = vmatprep.subr.bf16.mxu0 0
  %706 = vmatpush1.bf16.msra.mxu0 0
  %707 = vmatprep.subr.bf16.mxu0 0
  %708 = vmatpush1.bf16.msra.mxu0 0
  %709 = vmatprep.subr.bf16.mxu0 0
  %710 = vmatpush1.bf16.msra.mxu0 0
  %711 = vmatprep.subr.bf16.mxu0 0
  %712 = vmatpush1.bf16.msra.mxu0 0
  %713 = vmatprep.subr.bf16.mxu0 0
  %714 = vmatpush1.bf16.msra.mxu0 0
  %715 = vmatprep.subr.bf16.mxu0 0
  %716 = vmatpush1.bf16.msra.mxu0 0
  %717 = vmatprep.subr.bf16.mxu0 0
  %718 = vmatpush1.bf16.msra.mxu0 0
  %719 = vmatprep.mubr.bf16.mxu0 0
  %720 = vmatmul.mubr.bf16.gmra.mrb[0].mxu0 %v575
  %v721 = vpop.f32.mrb[0].mxu0
  %v722 = vadd.f32 %v445, %v721
  %v723 = vpop.f32.mrb[0].mxu0
  %v724 = vpop.f32.mrb[0].mxu0
  %v725 = vadd.f32 %v445, %v724
  %v726 = vpop.f32.mrb[0].mxu0
  %727 = vmatprep.mubr.bf16.mxu0 0
  %728 = vmatmul.mubr.bf16.gmra.mrb[0].mxu0 %v576
  %v729 = vpop.f32.mrb[0].mxu0
  %v730 = vadd.f32 %v445, %v729
  %v731 = vpop.f32.mrb[0].mxu0
  %v732 = vpop.f32.mrb[0].mxu0
  %v733 = vadd.f32 %v445, %v732
  %v734 = vpop.f32.mrb[0].mxu0
  %735 = vmatprep.mubr.bf16.mxu0 0
  %736 = vmatmul.mubr.bf16.gmra.mrb[0].mxu0 %v577
  %v737 = vpop.f32.mrb[0].mxu0
  %v738 = vadd.f32 %v445, %v737
  %v739 = vpop.f32.mrb[0].mxu0
  %v740 = vpop.f32.mrb[0].mxu0
  %v741 = vadd.f32 %v445, %v740
  %v742 = vpop.f32.mrb[0].mxu0
  %743 = vmatprep.mubr.bf16.mxu0 0
  %744 = vmatmul.mubr.bf16.gmra.mrb[0].mxu0 %v578
  %v745 = vpop.f32.mrb[0].mxu0
  %v746 = vadd.f32 %v445, %v745
  %v747 = vpop.f32.mrb[0].mxu0
  %v748 = vpop.f32.mrb[0].mxu0
  %v749 = vadd.f32 %v445, %v748
  %v750 = vpop.f32.mrb[0].mxu0
  %751 = vmatprep.mubr.bf16.mxu0 0
  %752 = vmatmul.mubr.bf16.gmra.mrb[0].mxu0 %v579
  %v753 = vpop.f32.mrb[0].mxu0
  %v754 = vadd.f32 %v445, %v753
  %v755 = vpop.f32.mrb[0].mxu0
  %v756 = vpop.f32.mrb[0].mxu0
  %v757 = vadd.f32 %v445, %v756
  %v758 = vpop.f32.mrb[0].mxu0
  %759 = vmatprep.mubr.bf16.mxu0 0
  %760 = vmatmul.mubr.bf16.gmra.mrb[0].mxu0 %v580
  %v761 = vpop.f32.mrb[0].mxu0
  %v762 = vadd.f32 %v445, %v761
  %v763 = vpop.f32.mrb[0].mxu0
  %v764 = vpop.f32.mrb[0].mxu0
  %v765 = vadd.f32 %v445, %v764
  %v766 = vpop.f32.mrb[0].mxu0
  %767 = vmatprep.mubr.bf16.mxu0 0
  %768 = vmatmul.mubr.bf16.gmra.mrb[0].mxu0 %v581
  %v769 = vpop.f32.mrb[0].mxu0
  %v770 = vadd.f32 %v445, %v769
  %v771 = vpop.f32.mrb[0].mxu0
  %v772 = vpop.f32.mrb[0].mxu0
  %v773 = vadd.f32 %v445, %v772
  %v774 = vpop.f32.mrb[0].mxu0
  %775 = vmatprep.mubr.bf16.mxu0 0
  %776 = vmatmul.mubr.bf16.gmra.mrb[0].mxu0 %v582
  %v777 = vpop.f32.mrb[0].mxu0
  %v778 = vadd.f32 %v445, %v777
  %v779 = vpop.f32.mrb[0].mxu0
  %v780 = vpop.f32.mrb[0].mxu0
  %v781 = vadd.f32 %v445, %v780
  %v782 = vpop.f32.mrb[0].mxu0
  %783 = vmatprep.mubr.bf16.mxu0 0
  %784 = vmatmul.mubr.bf16.gmra.mrb[0].mxu0 %v583
  %v785 = vpop.f32.mrb[0].mxu0
  %v786 = vadd.f32 %v445, %v785
  %v787 = vpop.f32.mrb[0].mxu0
  %v788 = vpop.f32.mrb[0].mxu0
  %v789 = vadd.f32 %v445, %v788
  %v790 = vpop.f32.mrb[0].mxu0
  %791 = vmatprep.mubr.bf16.mxu0 0
  %792 = vmatmul.mubr.bf16.gmra.mrb[0].mxu0 %v584
  %v793 = vpop.f32.mrb[0].mxu0
  %v794 = vadd.f32 %v445, %v793
  %v795 = vpop.f32.mrb[0].mxu0
  %v796 = vpop.f32.mrb[0].mxu0
  %v797 = vadd.f32 %v445, %v796
  %v798 = vpop.f32.mrb[0].mxu0
  %799 = vmatprep.mubr.bf16.mxu0 0
  %800 = vmatmul.mubr.bf16.gmra.mrb[0].mxu0 %v585
  %v801 = vpop.f32.mrb[0].mxu0
  %v802 = vadd.f32 %v445, %v801
  %v803 = vpop.f32.mrb[0].mxu0
  %v804 = vpop.f32.mrb[0].mxu0
  %v805 = vadd.f32 %v445, %v804
  %v806 = vpop.f32.mrb[0].mxu0
  %807 = vmatprep.mubr.bf16.mxu0 0
  %808 = vmatmul.mubr.bf16.gmra.mrb[0].mxu0 %v586
  %v809 = vpop.f32.mrb[0].mxu0
  %v810 = vadd.f32 %v445, %v809
  %v811 = vpop.f32.mrb[0].mxu0
  %v812 = vpop.f32.mrb[0].mxu0
  %v813 = vadd.f32 %v445, %v812
  %v814 = vpop.f32.mrb[0].mxu0
  %815 = vmatprep.mubr.bf16.mxu0 0
  %816 = vmatmul.mubr.bf16.gmra.mrb[0].mxu0 %v587
  %v817 = vpop.f32.mrb[0].mxu0
  %v818 = vadd.f32 %v445, %v817
  %v819 = vpop.f32.mrb[0].mxu0
  %v820 = vpop.f32.mrb[0].mxu0
  %v821 = vadd.f32 %v445, %v820
  %v822 = vpop.f32.mrb[0].mxu0
  %823 = vmatprep.mubr.bf16.mxu0 0
  %824 = vmatmul.mubr.bf16.gmra.mrb[0].mxu0 %v588
  %v825 = vpop.f32.mrb[0].mxu0
  %v826 = vadd.f32 %v445, %v825
  %v827 = vpop.f32.mrb[0].mxu0
  %v828 = vpop.f32.mrb[0].mxu0
  %v829 = vadd.f32 %v445, %v828
  %v830 = vpop.f32.mrb[0].mxu0
  %831 = vmatprep.mubr.bf16.mxu0 0
  %832 = vmatmul.mubr.bf16.gmra.mrb[0].mxu0 %v589
  %v833 = vpop.f32.mrb[0].mxu0
  %v834 = vadd.f32 %v445, %v833
  %v835 = vpop.f32.mrb[0].mxu0
  %v836 = vpop.f32.mrb[0].mxu0
  %v837 = vadd.f32 %v445, %v836
  %v838 = vpop.f32.mrb[0].mxu0
  %839 = vmatprep.mubr.bf16.mxu0 0
  %840 = vmatmul.mubr.bf16.gmra.mrb[0].mxu0 %v590
  %v841 = vpop.f32.mrb[0].mxu0
  %v842 = vadd.f32 %v445, %v841
  %v843 = vpop.f32.mrb[0].mxu0
  %v844 = vpop.f32.mrb[0].mxu0
  %v845 = vadd.f32 %v445, %v844
  %v846 = vpop.f32.mrb[0].mxu0
  %847 = vmatprep.mubr.bf16.mxu0 0
  %848 = vmatmul.mubr.bf16.gmra.mrb[0].mxu0 %v591
  %v849 = vpop.f32.mrb[0].mxu0
  %v850 = vadd.f32 %v445, %v849
  %v851 = vpop.f32.mrb[0].mxu0
  %v852 = vpop.f32.mrb[0].mxu0
  %v853 = vadd.f32 %v445, %v852
  %v854 = vpop.f32.mrb[0].mxu0
  %855 = vmatprep.mubr.bf16.mxu0 0
  %856 = vmatmul.mubr.bf16.gmra.mrb[0].mxu0 %v592
  %v857 = vpop.f32.mrb[0].mxu0
  %v858 = vadd.f32 %v445, %v857
  %v859 = vpop.f32.mrb[0].mxu0
  %v860 = vpop.f32.mrb[0].mxu0
  %v861 = vadd.f32 %v445, %v860
  %v862 = vpop.f32.mrb[0].mxu0
  %863 = vmatprep.mubr.bf16.mxu0 0
  %864 = vmatmul.mubr.bf16.gmra.mrb[0].mxu0 %v593
  %v865 = vpop.f32.mrb[0].mxu0
  %v866 = vadd.f32 %v445, %v865
  %v867 = vpop.f32.mrb[0].mxu0
  %v868 = vpop.f32.mrb[0].mxu0
  %v869 = vadd.f32 %v445, %v868
  %v870 = vpop.f32.mrb[0].mxu0
  %871 = vmatprep.mubr.bf16.mxu0 0
  %872 = vmatmul.mubr.bf16.gmra.mrb[0].mxu0 %v594
  %v873 = vpop.f32.mrb[0].mxu0
  %v874 = vadd.f32 %v445, %v873
  %v875 = vpop.f32.mrb[0].mxu0
  %v876 = vpop.f32.mrb[0].mxu0
  %v877 = vadd.f32 %v445, %v876
  %v878 = vpop.f32.mrb[0].mxu0
  %879 = vmatprep.mubr.bf16.mxu0 0
  %880 = vmatmul.mubr.bf16.gmra.mrb[0].mxu0 %v595
  %v881 = vpop.f32.mrb[0].mxu0
  %v882 = vadd.f32 %v445, %v881
  %v883 = vpop.f32.mrb[0].mxu0
  %v884 = vpop.f32.mrb[0].mxu0
  %v885 = vadd.f32 %v445, %v884
  %v886 = vpop.f32.mrb[0].mxu0
  %887 = vmatprep.mubr.bf16.mxu0 0
  %888 = vmatmul.mubr.bf16.gmra.mrb[0].mxu0 %v596
  %v889 = vpop.f32.mrb[0].mxu0
  %v890 = vadd.f32 %v445, %v889
  %v891 = vpop.f32.mrb[0].mxu0
  %v892 = vpop.f32.mrb[0].mxu0
  %v893 = vadd.f32 %v445, %v892
  %v894 = vpop.f32.mrb[0].mxu0
  %895 = vmatprep.mubr.bf16.mxu0 0
  %896 = vmatmul.mubr.bf16.gmra.mrb[0].mxu0 %v597
  %v897 = vpop.f32.mrb[0].mxu0
  %v898 = vadd.f32 %v445, %v897
  %v899 = vpop.f32.mrb[0].mxu0
  %v900 = vpop.f32.mrb[0].mxu0
  %v901 = vadd.f32 %v445, %v900
  %v902 = vpop.f32.mrb[0].mxu0
  %903 = vmatprep.mubr.bf16.mxu0 0
  %904 = vmatmul.mubr.bf16.gmra.mrb[0].mxu0 %v598
  %v905 = vpop.f32.mrb[0].mxu0
  %v906 = vadd.f32 %v445, %v905
  %v907 = vpop.f32.mrb[0].mxu0
  %v908 = vpop.f32.mrb[0].mxu0
  %v909 = vadd.f32 %v445, %v908
  %v910 = vpop.f32.mrb[0].mxu0
  %911 = vmatprep.mubr.bf16.mxu0 0
  %912 = vmatmul.mubr.bf16.gmra.mrb[0].mxu0 %v599
  %v913 = vpop.f32.mrb[0].mxu0
  %v914 = vadd.f32 %v445, %v913
  %v915 = vpop.f32.mrb[0].mxu0
  %v916 = vpop.f32.mrb[0].mxu0
  %v917 = vadd.f32 %v445, %v916
  %v918 = vpop.f32.mrb[0].mxu0
  %919 = vmatprep.mubr.bf16.mxu0 0
  %920 = vmatmul.mubr.bf16.gmra.mrb[0].mxu0 %v600
  %v921 = vpop.f32.mrb[0].mxu0
  %v922 = vadd.f32 %v445, %v921
  %v923 = vpop.f32.mrb[0].mxu0
  %v924 = vpop.f32.mrb[0].mxu0
  %v925 = vadd.f32 %v445, %v924
  %v926 = vpop.f32.mrb[0].mxu0
  %927 = vmatprep.mubr.bf16.mxu0 0
  %928 = vmatmul.mubr.bf16.gmra.mrb[0].mxu0 %v601
  %v929 = vpop.f32.mrb[0].mxu0
  %v930 = vadd.f32 %v445, %v929
  %v931 = vpop.f32.mrb[0].mxu0
  %v932 = vpop.f32.mrb[0].mxu0
  %v933 = vadd.f32 %v445, %v932
  %v934 = vpop.f32.mrb[0].mxu0
  %935 = vmatprep.mubr.bf16.mxu0 0
  %936 = vmatmul.mubr.bf16.gmra.mrb[0].mxu0 %v602
  %v937 = vpop.f32.mrb[0].mxu0
  %v938 = vadd.f32 %v445, %v937
  %v939 = vpop.f32.mrb[0].mxu0
  %v940 = vpop.f32.mrb[0].mxu0
  %v941 = vadd.f32 %v445, %v940
  %v942 = vpop.f32.mrb[0].mxu0
  %943 = vmatprep.mubr.bf16.mxu0 0
  %944 = vmatmul.mubr.bf16.gmra.mrb[0].mxu0 %v603
  %v945 = vpop.f32.mrb[0].mxu0
  %v946 = vadd.f32 %v445, %v945
  %v947 = vpop.f32.mrb[0].mxu0
  %v948 = vpop.f32.mrb[0].mxu0
  %v949 = vadd.f32 %v445, %v948
  %v950 = vpop.f32.mrb[0].mxu0
  %951 = vmatprep.mubr.bf16.mxu0 0
  %952 = vmatmul.mubr.bf16.gmra.mrb[0].mxu0 %v604
  %v953 = vpop.f32.mrb[0].mxu0
  %v954 = vadd.f32 %v445, %v953
  %v955 = vpop.f32.mrb[0].mxu0
  %v956 = vpop.f32.mrb[0].mxu0
  %v957 = vadd.f32 %v445, %v956
  %v958 = vpop.f32.mrb[0].mxu0
  %959 = vmatprep.mubr.bf16.mxu0 0
  %960 = vmatmul.mubr.bf16.gmra.mrb[0].mxu0 %v605
  %v961 = vpop.f32.mrb[0].mxu0
  %v962 = vadd.f32 %v445, %v961
  %v963 = vpop.f32.mrb[0].mxu0
  %v964 = vpop.f32.mrb[0].mxu0
  %v965 = vadd.f32 %v445, %v964
  %v966 = vpop.f32.mrb[0].mxu0
  %967 = vmatprep.mubr.bf16.mxu0 0
  %968 = vmatmul.mubr.bf16.gmra.mrb[0].mxu0 %v606
  %v969 = vpop.f32.mrb[0].mxu0
  %v970 = vadd.f32 %v445, %v969
  %v971 = vpop.f32.mrb[0].mxu0
  %v972 = vpop.f32.mrb[0].mxu0
  %v973 = vadd.f32 %v445, %v972
  %v974 = vpop.f32.mrb[0].mxu0
  %975 = vdwg.mxu0
  %v976 = vxor.u32 %v722, 2147483648
  %v977 = vxor.u32 %v725, 2147483648
  %v978 = vxor.u32 %v730, 2147483648
  %v979 = vxor.u32 %v733, 2147483648
  %v980 = vxor.u32 %v738, 2147483648
  %v981 = vxor.u32 %v741, 2147483648
  %v982 = vxor.u32 %v746, 2147483648
  %v983 = vxor.u32 %v749, 2147483648
  %v984 = vxor.u32 %v754, 2147483648
  %v985 = vxor.u32 %v757, 2147483648
  %v986 = vxor.u32 %v762, 2147483648
  %v987 = vxor.u32 %v765, 2147483648
  %v988 = vxor.u32 %v770, 2147483648
  %v989 = vxor.u32 %v773, 2147483648
  %v990 = vxor.u32 %v778, 2147483648
  %v991 = vxor.u32 %v781, 2147483648
  %v992 = vxor.u32 %v786, 2147483648
  %v993 = vxor.u32 %v789, 2147483648
  %v994 = vxor.u32 %v794, 2147483648
  %v995 = vxor.u32 %v797, 2147483648
  %v996 = vxor.u32 %v802, 2147483648
  %v997 = vxor.u32 %v805, 2147483648
  %v998 = vxor.u32 %v810, 2147483648
  %v999 = vxor.u32 %v813, 2147483648
  %v1000 = vxor.u32 %v818, 2147483648
  %v1001 = vxor.u32 %v821, 2147483648
  %v1002 = vxor.u32 %v826, 2147483648
  %v1003 = vxor.u32 %v829, 2147483648
  %v1004 = vxor.u32 %v834, 2147483648
  %v1005 = vxor.u32 %v837, 2147483648
  %v1006 = vxor.u32 %v842, 2147483648
  %v1007 = vxor.u32 %v845, 2147483648
  %v1008 = vxor.u32 %v850, 2147483648
  %v1009 = vxor.u32 %v853, 2147483648
  %v1010 = vxor.u32 %v858, 2147483648
  %v1011 = vxor.u32 %v861, 2147483648
  %v1012 = vxor.u32 %v866, 2147483648
  %v1013 = vxor.u32 %v869, 2147483648
  %v1014 = vxor.u32 %v874, 2147483648
  %v1015 = vxor.u32 %v877, 2147483648
  %v1016 = vxor.u32 %v882, 2147483648
  %v1017 = vxor.u32 %v885, 2147483648
  %v1018 = vxor.u32 %v890, 2147483648
  %v1019 = vxor.u32 %v893, 2147483648
  %v1020 = vxor.u32 %v898, 2147483648
  %v1021 = vxor.u32 %v901, 2147483648
  %v1022 = vxor.u32 %v906, 2147483648
  %v1023 = vxor.u32 %v909, 2147483648
  %v1024 = vxor.u32 %v914, 2147483648
  %v1025 = vxor.u32 %v917, 2147483648
  %v1026 = vxor.u32 %v922, 2147483648
  %v1027 = vxor.u32 %v925, 2147483648
  %v1028 = vxor.u32 %v930, 2147483648
  %v1029 = vxor.u32 %v933, 2147483648
  %v1030 = vxor.u32 %v938, 2147483648
  %v1031 = vxor.u32 %v941, 2147483648
  %v1032 = vxor.u32 %v946, 2147483648
  %v1033 = vxor.u32 %v949, 2147483648
  %v1034 = vxor.u32 %v954, 2147483648
  %v1035 = vxor.u32 %v957, 2147483648
  %v1036 = vxor.u32 %v962, 2147483648
  %v1037 = vxor.u32 %v965, 2147483648
  %v1038 = vxor.u32 %v970, 2147483648
  %v1039 = vxor.u32 %v973, 2147483648
  %v1040 = vmul.f32 %v976, 1.442695
  %v1041 = vpow.pop %v1040
  %v1042 = vmul.f32 %v977, 1.442695
  %v1043 = vpow.pop %v1042
  %v1044 = vmul.f32 %v978, 1.442695
  %v1045 = vpow.pop %v1044
  %v1046 = vmul.f32 %v979, 1.442695
  %v1047 = vpow.pop %v1046
  %v1048 = vmul.f32 %v980, 1.442695
  %v1049 = vpow.pop %v1048
  %v1050 = vmul.f32 %v981, 1.442695
  %v1051 = vpow.pop %v1050
  %v1052 = vmul.f32 %v982, 1.442695
  %v1053 = vpow.pop %v1052
  %v1054 = vmul.f32 %v983, 1.442695
  %v1055 = vpow.pop %v1054
  %v1056 = vmul.f32 %v984, 1.442695
  %v1057 = vpow.pop %v1056
  %v1058 = vmul.f32 %v985, 1.442695
  %v1059 = vpow.pop %v1058
  %v1060 = vmul.f32 %v986, 1.442695
  %v1061 = vpow.pop %v1060
  %v1062 = vmul.f32 %v987, 1.442695
  %v1063 = vpow.pop %v1062
  %v1064 = vmul.f32 %v988, 1.442695
  %v1065 = vpow.pop %v1064
  %v1066 = vmul.f32 %v989, 1.442695
  %v1067 = vpow.pop %v1066
  %v1068 = vmul.f32 %v990, 1.442695
  %v1069 = vpow.pop %v1068
  %v1070 = vmul.f32 %v991, 1.442695
  %v1071 = vpow.pop %v1070
  %v1072 = vmul.f32 %v992, 1.442695
  %v1073 = vpow.pop %v1072
  %v1074 = vmul.f32 %v993, 1.442695
  %v1075 = vpow.pop %v1074
  %v1076 = vmul.f32 %v994, 1.442695
  %v1077 = vpow.pop %v1076
  %v1078 = vmul.f32 %v995, 1.442695
  %v1079 = vpow.pop %v1078
  %v1080 = vmul.f32 %v996, 1.442695
  %v1081 = vpow.pop %v1080
  %v1082 = vmul.f32 %v997, 1.442695
  %v1083 = vpow.pop %v1082
  %v1084 = vmul.f32 %v998, 1.442695
  %v1085 = vpow.pop %v1084
  %v1086 = vmul.f32 %v999, 1.442695
  %v1087 = vpow.pop %v1086
  %v1088 = vmul.f32 %v1000, 1.442695
  %v1089 = vpow.pop %v1088
  %v1090 = vmul.f32 %v1001, 1.442695
  %v1091 = vpow.pop %v1090
  %v1092 = vmul.f32 %v1002, 1.442695
  %v1093 = vpow.pop %v1092
  %v1094 = vmul.f32 %v1003, 1.442695
  %v1095 = vpow.pop %v1094
  %v1096 = vmul.f32 %v1004, 1.442695
  %v1097 = vpow.pop %v1096
  %v1098 = vmul.f32 %v1005, 1.442695
  %v1099 = vpow.pop %v1098
  %v1100 = vmul.f32 %v1006, 1.442695
  %v1101 = vpow.pop %v1100
  %v1102 = vmul.f32 %v1007, 1.442695
  %v1103 = vpow.pop %v1102
  %v1104 = vmul.f32 %v1008, 1.442695
  %v1105 = vpow.pop %v1104
  %v1106 = vmul.f32 %v1009, 1.442695
  %v1107 = vpow.pop %v1106
  %v1108 = vmul.f32 %v1010, 1.442695
  %v1109 = vpow.pop %v1108
  %v1110 = vmul.f32 %v1011, 1.442695
  %v1111 = vpow.pop %v1110
  %v1112 = vmul.f32 %v1012, 1.442695
  %v1113 = vpow.pop %v1112
  %v1114 = vmul.f32 %v1013, 1.442695
  %v1115 = vpow.pop %v1114
  %v1116 = vmul.f32 %v1014, 1.442695
  %v1117 = vpow.pop %v1116
  %v1118 = vmul.f32 %v1015, 1.442695
  %v1119 = vpow.pop %v1118
  %v1120 = vmul.f32 %v1016, 1.442695
  %v1121 = vpow.pop %v1120
  %v1122 = vmul.f32 %v1017, 1.442695
  %v1123 = vpow.pop %v1122
  %v1124 = vmul.f32 %v1018, 1.442695
  %v1125 = vpow.pop %v1124
  %v1126 = vmul.f32 %v1019, 1.442695
  %v1127 = vpow.pop %v1126
  %v1128 = vmul.f32 %v1020, 1.442695
  %v1129 = vpow.pop %v1128
  %v1130 = vmul.f32 %v1021, 1.442695
  %v1131 = vpow.pop %v1130
  %v1132 = vmul.f32 %v1022, 1.442695
  %v1133 = vpow.pop %v1132
  %v1134 = vmul.f32 %v1023, 1.442695
  %v1135 = vpow.pop %v1134
  %v1136 = vmul.f32 %v1024, 1.442695
  %v1137 = vpow.pop %v1136
  %v1138 = vmul.f32 %v1025, 1.442695
  %v1139 = vpow.pop %v1138
  %v1140 = vmul.f32 %v1026, 1.442695
  %v1141 = vpow.pop %v1140
  %v1142 = vmul.f32 %v1027, 1.442695
  %v1143 = vpow.pop %v1142
  %v1144 = vmul.f32 %v1028, 1.442695
  %v1145 = vpow.pop %v1144
  %v1146 = vmul.f32 %v1029, 1.442695
  %v1147 = vpow.pop %v1146
  %v1148 = vmul.f32 %v1030, 1.442695
  %v1149 = vpow.pop %v1148
  %v1150 = vmul.f32 %v1031, 1.442695
  %v1151 = vpow.pop %v1150
  %v1152 = vmul.f32 %v1032, 1.442695
  %v1153 = vpow.pop %v1152
  %v1154 = vmul.f32 %v1033, 1.442695
  %v1155 = vpow.pop %v1154
  %v1156 = vmul.f32 %v1034, 1.442695
  %v1157 = vpow.pop %v1156
  %v1158 = vmul.f32 %v1035, 1.442695
  %v1159 = vpow.pop %v1158
  %v1160 = vmul.f32 %v1036, 1.442695
  %v1161 = vpow.pop %v1160
  %v1162 = vmul.f32 %v1037, 1.442695
  %v1163 = vpow.pop %v1162
  %v1164 = vmul.f32 %v1038, 1.442695
  %v1165 = vpow.pop %v1164
  %v1166 = vmul.f32 %v1039, 1.442695
  %v1167 = vpow.pop %v1166
  %v1168 = vadd.f32 %v1041, 1.0
  %v1169 = vadd.f32 %v1043, 1.0
  %v1170 = vadd.f32 %v1045, 1.0
  %v1171 = vadd.f32 %v1047, 1.0
  %v1172 = vadd.f32 %v1049, 1.0
  %v1173 = vadd.f32 %v1051, 1.0
  %v1174 = vadd.f32 %v1053, 1.0
  %v1175 = vadd.f32 %v1055, 1.0
  %v1176 = vadd.f32 %v1057, 1.0
  %v1177 = vadd.f32 %v1059, 1.0
  %v1178 = vadd.f32 %v1061, 1.0
  %v1179 = vadd.f32 %v1063, 1.0
  %v1180 = vadd.f32 %v1065, 1.0
  %v1181 = vadd.f32 %v1067, 1.0
  %v1182 = vadd.f32 %v1069, 1.0
  %v1183 = vadd.f32 %v1071, 1.0
  %v1184 = vadd.f32 %v1073, 1.0
  %v1185 = vadd.f32 %v1075, 1.0
  %v1186 = vadd.f32 %v1077, 1.0
  %v1187 = vadd.f32 %v1079, 1.0
  %v1188 = vadd.f32 %v1081, 1.0
  %v1189 = vadd.f32 %v1083, 1.0
  %v1190 = vadd.f32 %v1085, 1.0
  %v1191 = vadd.f32 %v1087, 1.0
  %v1192 = vadd.f32 %v1089, 1.0
  %v1193 = vadd.f32 %v1091, 1.0
  %v1194 = vadd.f32 %v1093, 1.0
  %v1195 = vadd.f32 %v1095, 1.0
  %v1196 = vadd.f32 %v1097, 1.0
  %v1197 = vadd.f32 %v1099, 1.0
  %v1198 = vadd.f32 %v1101, 1.0
  %v1199 = vadd.f32 %v1103, 1.0
  %v1200 = vadd.f32 %v1105, 1.0
  %v1201 = vadd.f32 %v1107, 1.0
  %v1202 = vadd.f32 %v1109, 1.0
  %v1203 = vadd.f32 %v1111, 1.0
  %v1204 = vadd.f32 %v1113, 1.0
  %v1205 = vadd.f32 %v1115, 1.0
  %v1206 = vadd.f32 %v1117, 1.0
  %v1207 = vadd.f32 %v1119, 1.0
  %v1208 = vadd.f32 %v1121, 1.0
  %v1209 = vadd.f32 %v1123, 1.0
  %v1210 = vadd.f32 %v1125, 1.0
  %v1211 = vadd.f32 %v1127, 1.0
  %v1212 = vadd.f32 %v1129, 1.0
  %v1213 = vadd.f32 %v1131, 1.0
  %v1214 = vadd.f32 %v1133, 1.0
  %v1215 = vadd.f32 %v1135, 1.0
  %v1216 = vadd.f32 %v1137, 1.0
  %v1217 = vadd.f32 %v1139, 1.0
  %v1218 = vadd.f32 %v1141, 1.0
  %v1219 = vadd.f32 %v1143, 1.0
  %v1220 = vadd.f32 %v1145, 1.0
  %v1221 = vadd.f32 %v1147, 1.0
  %v1222 = vadd.f32 %v1149, 1.0
  %v1223 = vadd.f32 %v1151, 1.0
  %v1224 = vadd.f32 %v1153, 1.0
  %v1225 = vadd.f32 %v1155, 1.0
  %v1226 = vadd.f32 %v1157, 1.0
  %v1227 = vadd.f32 %v1159, 1.0
  %v1228 = vadd.f32 %v1161, 1.0
  %v1229 = vadd.f32 %v1163, 1.0
  %v1230 = vadd.f32 %v1165, 1.0
  %v1231 = vadd.f32 %v1167, 1.0
  %v1232 = vrcp.pop %v1168
  %v1233 = vmul.f32 1.0, %v1232
  %v1234 = vrcp.pop %v1169
  %v1235 = vmul.f32 1.0, %v1234
  %v1236 = vrcp.pop %v1170
  %v1237 = vmul.f32 1.0, %v1236
  %v1238 = vrcp.pop %v1171
  %v1239 = vmul.f32 1.0, %v1238
  %v1240 = vrcp.pop %v1172
  %v1241 = vmul.f32 1.0, %v1240
  %v1242 = vrcp.pop %v1173
  %v1243 = vmul.f32 1.0, %v1242
  %v1244 = vrcp.pop %v1174
  %v1245 = vmul.f32 1.0, %v1244
  %v1246 = vrcp.pop %v1175
  %v1247 = vmul.f32 1.0, %v1246
  %v1248 = vrcp.pop %v1176
  %v1249 = vmul.f32 1.0, %v1248
  %v1250 = vrcp.pop %v1177
  %v1251 = vmul.f32 1.0, %v1250
  %v1252 = vrcp.pop %v1178
  %v1253 = vmul.f32 1.0, %v1252
  %v1254 = vrcp.pop %v1179
  %v1255 = vmul.f32 1.0, %v1254
  %v1256 = vrcp.pop %v1180
  %v1257 = vmul.f32 1.0, %v1256
  %v1258 = vrcp.pop %v1181
  %v1259 = vmul.f32 1.0, %v1258
  %v1260 = vrcp.pop %v1182
  %v1261 = vmul.f32 1.0, %v1260
  %v1262 = vrcp.pop %v1183
  %v1263 = vmul.f32 1.0, %v1262
  %v1264 = vrcp.pop %v1184
  %v1265 = vmul.f32 1.0, %v1264
  %v1266 = vrcp.pop %v1185
  %v1267 = vmul.f32 1.0, %v1266
  %v1268 = vrcp.pop %v1186
  %v1269 = vmul.f32 1.0, %v1268
  %v1270 = vrcp.pop %v1187
  %v1271 = vmul.f32 1.0, %v1270
  %v1272 = vrcp.pop %v1188
  %v1273 = vmul.f32 1.0, %v1272
  %v1274 = vrcp.pop %v1189
  %v1275 = vmul.f32 1.0, %v1274
  %v1276 = vrcp.pop %v1190
  %v1277 = vmul.f32 1.0, %v1276
  %v1278 = vrcp.pop %v1191
  %v1279 = vmul.f32 1.0, %v1278
  %v1280 = vrcp.pop %v1192
  %v1281 = vmul.f32 1.0, %v1280
  %v1282 = vrcp.pop %v1193
  %v1283 = vmul.f32 1.0, %v1282
  %v1284 = vrcp.pop %v1194
  %v1285 = vmul.f32 1.0, %v1284
  %v1286 = vrcp.pop %v1195
  %v1287 = vmul.f32 1.0, %v1286
  %v1288 = vrcp.pop %v1196
  %v1289 = vmul.f32 1.0, %v1288
  %v1290 = vrcp.pop %v1197
  %v1291 = vmul.f32 1.0, %v1290
  %v1292 = vrcp.pop %v1198
  %v1293 = vmul.f32 1.0, %v1292
  %v1294 = vrcp.pop %v1199
  %v1295 = vmul.f32 1.0, %v1294
  %v1296 = vrcp.pop %v1200
  %v1297 = vmul.f32 1.0, %v1296
  %v1298 = vrcp.pop %v1201
  %v1299 = vmul.f32 1.0, %v1298
  %v1300 = vrcp.pop %v1202
  %v1301 = vmul.f32 1.0, %v1300
  %v1302 = vrcp.pop %v1203
  %v1303 = vmul.f32 1.0, %v1302
  %v1304 = vrcp.pop %v1204
  %v1305 = vmul.f32 1.0, %v1304
  %v1306 = vrcp.pop %v1205
  %v1307 = vmul.f32 1.0, %v1306
  %v1308 = vrcp.pop %v1206
  %v1309 = vmul.f32 1.0, %v1308
  %v1310 = vrcp.pop %v1207
  %v1311 = vmul.f32 1.0, %v1310
  %v1312 = vrcp.pop %v1208
  %v1313 = vmul.f32 1.0, %v1312
  %v1314 = vrcp.pop %v1209
  %v1315 = vmul.f32 1.0, %v1314
  %v1316 = vrcp.pop %v1210
  %v1317 = vmul.f32 1.0, %v1316
  %v1318 = vrcp.pop %v1211
  %v1319 = vmul.f32 1.0, %v1318
  %v1320 = vrcp.pop %v1212
  %v1321 = vmul.f32 1.0, %v1320
  %v1322 = vrcp.pop %v1213
  %v1323 = vmul.f32 1.0, %v1322
  %v1324 = vrcp.pop %v1214
  %v1325 = vmul.f32 1.0, %v1324
  %v1326 = vrcp.pop %v1215
  %v1327 = vmul.f32 1.0, %v1326
  %v1328 = vrcp.pop %v1216
  %v1329 = vmul.f32 1.0, %v1328
  %v1330 = vrcp.pop %v1217
  %v1331 = vmul.f32 1.0, %v1330
  %v1332 = vrcp.pop %v1218
  %v1333 = vmul.f32 1.0, %v1332
  %v1334 = vrcp.pop %v1219
  %v1335 = vmul.f32 1.0, %v1334
  %v1336 = vrcp.pop %v1220
  %v1337 = vmul.f32 1.0, %v1336
  %v1338 = vrcp.pop %v1221
  %v1339 = vmul.f32 1.0, %v1338
  %v1340 = vrcp.pop %v1222
  %v1341 = vmul.f32 1.0, %v1340
  %v1342 = vrcp.pop %v1223
  %v1343 = vmul.f32 1.0, %v1342
  %v1344 = vrcp.pop %v1224
  %v1345 = vmul.f32 1.0, %v1344
  %v1346 = vrcp.pop %v1225
  %v1347 = vmul.f32 1.0, %v1346
  %v1348 = vrcp.pop %v1226
  %v1349 = vmul.f32 1.0, %v1348
  %v1350 = vrcp.pop %v1227
  %v1351 = vmul.f32 1.0, %v1350
  %v1352 = vrcp.pop %v1228
  %v1353 = vmul.f32 1.0, %v1352
  %v1354 = vrcp.pop %v1229
  %v1355 = vmul.f32 1.0, %v1354
  %v1356 = vrcp.pop %v1230
  %v1357 = vmul.f32 1.0, %v1356
  %v1358 = vrcp.pop %v1231
  %v1359 = vmul.f32 1.0, %v1358
  %v1360 = vadd.f32 %v1233, 1.0
  %v1361 = vadd.f32 %v1235, 1.0
  %v1362 = vadd.f32 %v1237, 1.0
  %v1363 = vadd.f32 %v1239, 1.0
  %v1364 = vadd.f32 %v1241, 1.0
  %v1365 = vadd.f32 %v1243, 1.0
  %v1366 = vadd.f32 %v1245, 1.0
  %v1367 = vadd.f32 %v1247, 1.0
  %v1368 = vadd.f32 %v1249, 1.0
  %v1369 = vadd.f32 %v1251, 1.0
  %v1370 = vadd.f32 %v1253, 1.0
  %v1371 = vadd.f32 %v1255, 1.0
  %v1372 = vadd.f32 %v1257, 1.0
  %v1373 = vadd.f32 %v1259, 1.0
  %v1374 = vadd.f32 %v1261, 1.0
  %v1375 = vadd.f32 %v1263, 1.0
  %v1376 = vadd.f32 %v1265, 1.0
  %v1377 = vadd.f32 %v1267, 1.0
  %v1378 = vadd.f32 %v1269, 1.0
  %v1379 = vadd.f32 %v1271, 1.0
  %v1380 = vadd.f32 %v1273, 1.0
  %v1381 = vadd.f32 %v1275, 1.0
  %v1382 = vadd.f32 %v1277, 1.0
  %v1383 = vadd.f32 %v1279, 1.0
  %v1384 = vadd.f32 %v1281, 1.0
  %v1385 = vadd.f32 %v1283, 1.0
  %v1386 = vadd.f32 %v1285, 1.0
  %v1387 = vadd.f32 %v1287, 1.0
  %v1388 = vadd.f32 %v1289, 1.0
  %v1389 = vadd.f32 %v1291, 1.0
  %v1390 = vadd.f32 %v1293, 1.0
  %v1391 = vadd.f32 %v1295, 1.0
  %v1392 = vadd.f32 %v1297, 1.0
  %v1393 = vadd.f32 %v1299, 1.0
  %v1394 = vadd.f32 %v1301, 1.0
  %v1395 = vadd.f32 %v1303, 1.0
  %v1396 = vadd.f32 %v1305, 1.0
  %v1397 = vadd.f32 %v1307, 1.0
  %v1398 = vadd.f32 %v1309, 1.0
  %v1399 = vadd.f32 %v1311, 1.0
  %v1400 = vadd.f32 %v1313, 1.0
  %v1401 = vadd.f32 %v1315, 1.0
  %v1402 = vadd.f32 %v1317, 1.0
  %v1403 = vadd.f32 %v1319, 1.0
  %v1404 = vadd.f32 %v1321, 1.0
  %v1405 = vadd.f32 %v1323, 1.0
  %v1406 = vadd.f32 %v1325, 1.0
  %v1407 = vadd.f32 %v1327, 1.0
  %v1408 = vadd.f32 %v1329, 1.0
  %v1409 = vadd.f32 %v1331, 1.0
  %v1410 = vadd.f32 %v1333, 1.0
  %v1411 = vadd.f32 %v1335, 1.0
  %v1412 = vadd.f32 %v1337, 1.0
  %v1413 = vadd.f32 %v1339, 1.0
  %v1414 = vadd.f32 %v1341, 1.0
  %v1415 = vadd.f32 %v1343, 1.0
  %v1416 = vadd.f32 %v1345, 1.0
  %v1417 = vadd.f32 %v1347, 1.0
  %v1418 = vadd.f32 %v1349, 1.0
  %v1419 = vadd.f32 %v1351, 1.0
  %v1420 = vadd.f32 %v1353, 1.0
  %v1421 = vadd.f32 %v1355, 1.0
  %v1422 = vadd.f32 %v1357, 1.0
  %v1423 = vadd.f32 %v1359, 1.0
  %v1424 = vmul.f32 %v296, %v1360
  %v1425 = vmul.f32 %v297, %v1361
  %v1426 = vmul.f32 %v298, %v1362
  %v1427 = vmul.f32 %v299, %v1363
  %v1428 = vmul.f32 %v300, %v1364
  %v1429 = vmul.f32 %v301, %v1365
  %v1430 = vmul.f32 %v302, %v1366
  %v1431 = vmul.f32 %v303, %v1367
  %v1432 = vmul.f32 %v304, %v1368
  %v1433 = vmul.f32 %v305, %v1369
  %v1434 = vmul.f32 %v306, %v1370
  %v1435 = vmul.f32 %v307, %v1371
  %v1436 = vmul.f32 %v308, %v1372
  %v1437 = vmul.f32 %v309, %v1373
  %v1438 = vmul.f32 %v310, %v1374
  %v1439 = vmul.f32 %v311, %v1375
  %v1440 = vmul.f32 %v312, %v1376
  %v1441 = vmul.f32 %v313, %v1377
  %v1442 = vmul.f32 %v314, %v1378
  %v1443 = vmul.f32 %v315, %v1379
  %v1444 = vmul.f32 %v316, %v1380
  %v1445 = vmul.f32 %v317, %v1381
  %v1446 = vmul.f32 %v318, %v1382
  %v1447 = vmul.f32 %v319, %v1383
  %v1448 = vmul.f32 %v320, %v1384
  %v1449 = vmul.f32 %v321, %v1385
  %v1450 = vmul.f32 %v322, %v1386
  %v1451 = vmul.f32 %v323, %v1387
  %v1452 = vmul.f32 %v324, %v1388
  %v1453 = vmul.f32 %v325, %v1389
  %v1454 = vmul.f32 %v326, %v1390
  %v1455 = vmul.f32 %v327, %v1391
  %v1456 = vmul.f32 %v328, %v1392
  %v1457 = vmul.f32 %v329, %v1393
  %v1458 = vmul.f32 %v330, %v1394
  %v1459 = vmul.f32 %v331, %v1395
  %v1460 = vmul.f32 %v332, %v1396
  %v1461 = vmul.f32 %v333, %v1397
  %v1462 = vmul.f32 %v334, %v1398
  %v1463 = vmul.f32 %v335, %v1399
  %v1464 = vmul.f32 %v336, %v1400
  %v1465 = vmul.f32 %v337, %v1401
  %v1466 = vmul.f32 %v338, %v1402
  %v1467 = vmul.f32 %v339, %v1403
  %v1468 = vmul.f32 %v340, %v1404
  %v1469 = vmul.f32 %v341, %v1405
  %v1470 = vmul.f32 %v342, %v1406
  %v1471 = vmul.f32 %v343, %v1407
  %v1472 = vmul.f32 %v344, %v1408
  %v1473 = vmul.f32 %v345, %v1409
  %v1474 = vmul.f32 %v346, %v1410
  %v1475 = vmul.f32 %v347, %v1411
  %v1476 = vmul.f32 %v348, %v1412
  %v1477 = vmul.f32 %v349, %v1413
  %v1478 = vmul.f32 %v350, %v1414
  %v1479 = vmul.f32 %v351, %v1415
  %v1480 = vmul.f32 %v352, %v1416
  %v1481 = vmul.f32 %v353, %v1417
  %v1482 = vmul.f32 %v354, %v1418
  %v1483 = vmul.f32 %v355, %v1419
  %v1484 = vmul.f32 %v356, %v1420
  %v1485 = vmul.f32 %v357, %v1421
  %v1486 = vmul.f32 %v358, %v1422
  %v1487 = vmul.f32 %v359, %v1423
  %v1488 = vpack.c.bf16 %v1425, %v1424
  %v1489 = vpack.c.bf16 %v1427, %v1426
  %v1490 = vpack.c.bf16 %v1429, %v1428
  %v1491 = vpack.c.bf16 %v1431, %v1430
  %v1492 = vpack.c.bf16 %v1433, %v1432
  %v1493 = vpack.c.bf16 %v1435, %v1434
  %v1494 = vpack.c.bf16 %v1437, %v1436
  %v1495 = vpack.c.bf16 %v1439, %v1438
  %v1496 = vpack.c.bf16 %v1441, %v1440
  %v1497 = vpack.c.bf16 %v1443, %v1442
  %v1498 = vpack.c.bf16 %v1445, %v1444
  %v1499 = vpack.c.bf16 %v1447, %v1446
  %v1500 = vpack.c.bf16 %v1449, %v1448
  %v1501 = vpack.c.bf16 %v1451, %v1450
  %v1502 = vpack.c.bf16 %v1453, %v1452
  %v1503 = vpack.c.bf16 %v1455, %v1454
  %v1504 = vpack.c.bf16 %v1457, %v1456
  %v1505 = vpack.c.bf16 %v1459, %v1458
  %v1506 = vpack.c.bf16 %v1461, %v1460
  %v1507 = vpack.c.bf16 %v1463, %v1462
  %v1508 = vpack.c.bf16 %v1465, %v1464
  %v1509 = vpack.c.bf16 %v1467, %v1466
  %v1510 = vpack.c.bf16 %v1469, %v1468
  %v1511 = vpack.c.bf16 %v1471, %v1470
  %v1512 = vpack.c.bf16 %v1473, %v1472
  %v1513 = vpack.c.bf16 %v1475, %v1474
  %v1514 = vpack.c.bf16 %v1477, %v1476
  %v1515 = vpack.c.bf16 %v1479, %v1478
  %v1516 = vpack.c.bf16 %v1481, %v1480
  %v1517 = vpack.c.bf16 %v1483, %v1482
  %v1518 = vpack.c.bf16 %v1485, %v1484
  %v1519 = vpack.c.bf16 %v1487, %v1486
  %v1552 = vunpack.c.l.b16 %v1488
  %v1553 = vunpack.c.h.b16 %v1488
  %v1554 = vunpack.c.l.b16 %v1489
  %v1555 = vunpack.c.h.b16 %v1489
  %v1556 = vunpack.c.l.b16 %v1490
  %v1557 = vunpack.c.h.b16 %v1490
  %v1558 = vunpack.c.l.b16 %v1491
  %v1559 = vunpack.c.h.b16 %v1491
  %v1560 = vunpack.c.l.b16 %v1492
  %v1561 = vunpack.c.h.b16 %v1492
  %v1562 = vunpack.c.l.b16 %v1493
  %v1563 = vunpack.c.h.b16 %v1493
  %v1564 = vunpack.c.l.b16 %v1494
  %v1565 = vunpack.c.h.b16 %v1494
  %v1566 = vunpack.c.l.b16 %v1495
  %v1567 = vunpack.c.h.b16 %v1495
  %v1568 = vunpack.c.l.b16 %v1496
  %v1569 = vunpack.c.h.b16 %v1496
  %v1570 = vunpack.c.l.b16 %v1497
  %v1571 = vunpack.c.h.b16 %v1497
  %v1572 = vunpack.c.l.b16 %v1498
  %v1573 = vunpack.c.h.b16 %v1498
  %v1574 = vunpack.c.l.b16 %v1499
  %v1575 = vunpack.c.h.b16 %v1499
  %v1576 = vunpack.c.l.b16 %v1500
  %v1577 = vunpack.c.h.b16 %v1500
  %v1578 = vunpack.c.l.b16 %v1501
  %v1579 = vunpack.c.h.b16 %v1501
  %v1580 = vunpack.c.l.b16 %v1502
  %v1581 = vunpack.c.h.b16 %v1502
  %v1582 = vunpack.c.l.b16 %v1503
  %v1583 = vunpack.c.h.b16 %v1503
  %v1584 = vunpack.c.l.b16 %v1504
  %v1585 = vunpack.c.h.b16 %v1504
  %v1586 = vunpack.c.l.b16 %v1505
  %v1587 = vunpack.c.h.b16 %v1505
  %v1588 = vunpack.c.l.b16 %v1506
  %v1589 = vunpack.c.h.b16 %v1506
  %v1590 = vunpack.c.l.b16 %v1507
  %v1591 = vunpack.c.h.b16 %v1507
  %v1592 = vunpack.c.l.b16 %v1508
  %v1593 = vunpack.c.h.b16 %v1508
  %v1594 = vunpack.c.l.b16 %v1509
  %v1595 = vunpack.c.h.b16 %v1509
  %v1596 = vunpack.c.l.b16 %v1510
  %v1597 = vunpack.c.h.b16 %v1510
  %v1598 = vunpack.c.l.b16 %v1511
  %v1599 = vunpack.c.h.b16 %v1511
  %v1600 = vunpack.c.l.b16 %v1512
  %v1601 = vunpack.c.h.b16 %v1512
  %v1602 = vunpack.c.l.b16 %v1513
  %v1603 = vunpack.c.h.b16 %v1513
  %v1604 = vunpack.c.l.b16 %v1514
  %v1605 = vunpack.c.h.b16 %v1514
  %v1606 = vunpack.c.l.b16 %v1515
  %v1607 = vunpack.c.h.b16 %v1515
  %v1608 = vunpack.c.l.b16 %v1516
  %v1609 = vunpack.c.h.b16 %v1516
  %v1610 = vunpack.c.l.b16 %v1517
  %v1611 = vunpack.c.h.b16 %v1517
  %v1612 = vunpack.c.l.b16 %v1518
  %v1613 = vunpack.c.h.b16 %v1518
  %v1614 = vunpack.c.l.b16 %v1519
  %v1615 = vunpack.c.h.b16 %v1519
  %v1616 = vpack.c.b16 %v1552, %v1552
  %v1617 = vpack.c.b16 %v1553, %v1553
  %v1618 = vpack.c.b16 %v1554, %v1554
  %v1619 = vpack.c.b16 %v1555, %v1555
  %v1620 = vpack.c.b16 %v1556, %v1556
  %v1621 = vpack.c.b16 %v1557, %v1557
  %v1622 = vpack.c.b16 %v1558, %v1558
  %v1623 = vpack.c.b16 %v1559, %v1559
  %v1624 = vpack.c.b16 %v1560, %v1560
  %v1625 = vpack.c.b16 %v1561, %v1561
  %v1626 = vpack.c.b16 %v1562, %v1562
  %v1627 = vpack.c.b16 %v1563, %v1563
  %v1628 = vpack.c.b16 %v1564, %v1564
  %v1629 = vpack.c.b16 %v1565, %v1565
  %v1630 = vpack.c.b16 %v1566, %v1566
  %v1631 = vpack.c.b16 %v1567, %v1567
  %v1632 = vpack.c.b16 %v1568, %v1568
  %v1633 = vpack.c.b16 %v1569, %v1569
  %v1634 = vpack.c.b16 %v1570, %v1570
  %v1635 = vpack.c.b16 %v1571, %v1571
  %v1636 = vpack.c.b16 %v1572, %v1572
  %v1637 = vpack.c.b16 %v1573, %v1573
  %v1638 = vpack.c.b16 %v1574, %v1574
  %v1639 = vpack.c.b16 %v1575, %v1575
  %v1640 = vpack.c.b16 %v1576, %v1576
  %v1641 = vpack.c.b16 %v1577, %v1577
  %v1642 = vpack.c.b16 %v1578, %v1578
  %v1643 = vpack.c.b16 %v1579, %v1579
  %v1644 = vpack.c.b16 %v1580, %v1580
  %v1645 = vpack.c.b16 %v1581, %v1581
  %v1646 = vpack.c.b16 %v1582, %v1582
  %v1647 = vpack.c.b16 %v1583, %v1583
  %v1648 = vpack.c.b16 %v1584, %v1584
  %v1649 = vpack.c.b16 %v1585, %v1585
  %v1650 = vpack.c.b16 %v1586, %v1586
  %v1651 = vpack.c.b16 %v1587, %v1587
  %v1652 = vpack.c.b16 %v1588, %v1588
  %v1653 = vpack.c.b16 %v1589, %v1589
  %v1654 = vpack.c.b16 %v1590, %v1590
  %v1655 = vpack.c.b16 %v1591, %v1591
  %v1656 = vpack.c.b16 %v1592, %v1592
  %v1657 = vpack.c.b16 %v1593, %v1593
  %v1658 = vpack.c.b16 %v1594, %v1594
  %v1659 = vpack.c.b16 %v1595, %v1595
  %v1660 = vpack.c.b16 %v1596, %v1596
  %v1661 = vpack.c.b16 %v1597, %v1597
  %v1662 = vpack.c.b16 %v1598, %v1598
  %v1663 = vpack.c.b16 %v1599, %v1599
  %v1664 = vpack.c.b16 %v1600, %v1600
  %v1665 = vpack.c.b16 %v1601, %v1601
  %v1666 = vpack.c.b16 %v1602, %v1602
  %v1667 = vpack.c.b16 %v1603, %v1603
  %v1668 = vpack.c.b16 %v1604, %v1604
  %v1669 = vpack.c.b16 %v1605, %v1605
  %v1670 = vpack.c.b16 %v1606, %v1606
  %v1671 = vpack.c.b16 %v1607, %v1607
  %v1672 = vpack.c.b16 %v1608, %v1608
  %v1673 = vpack.c.b16 %v1609, %v1609
  %v1674 = vpack.c.b16 %v1610, %v1610
  %v1675 = vpack.c.b16 %v1611, %v1611
  %v1676 = vpack.c.b16 %v1612, %v1612
  %v1677 = vpack.c.b16 %v1613, %v1613
  %v1678 = vpack.c.b16 %v1614, %v1614
  %v1679 = vpack.c.b16 %v1615, %v1615
  %1744 = vst [vmem:[%s6] sm:$0xf] %v1616
  %1745 = vst [vmem:[%s6 + $0x4] sm:$0xf] %v1617
  %1746 = vst [vmem:[%s6 + $0x8] sm:$0xf] %v1618
  %1747 = vst [vmem:[%s6 + $0xc] sm:$0xf] %v1619
  %1748 = vst [vmem:[%s6 + $0x10] sm:$0xf] %v1620
  %1749 = vst [vmem:[%s6 + $0x14] sm:$0xf] %v1621
  %1750 = vst [vmem:[%s6 + $0x18] sm:$0xf] %v1622
  %1751 = vst [vmem:[%s6 + $0x1c] sm:$0xf] %v1623
  %1752 = vst [vmem:[%s6 + $0x20] sm:$0xf] %v1624
  %1753 = vst [vmem:[%s6 + $0x24] sm:$0xf] %v1625
  %1754 = vst [vmem:[%s6 + $0x28] sm:$0xf] %v1626
  %1755 = vst [vmem:[%s6 + $0x2c] sm:$0xf] %v1627
  %1756 = vst [vmem:[%s6 + $0x30] sm:$0xf] %v1628
  %1757 = vst [vmem:[%s6 + $0x34] sm:$0xf] %v1629
  %1758 = vst [vmem:[%s6 + $0x38] sm:$0xf] %v1630
  %1759 = vst [vmem:[%s6 + $0x3c] sm:$0xf] %v1631
  %1760 = vst [vmem:[%s6 + $0x40] sm:$0xf] %v1632
  %1761 = vst [vmem:[%s6 + $0x44] sm:$0xf] %v1633
  %1762 = vst [vmem:[%s6 + $0x48] sm:$0xf] %v1634
  %1763 = vst [vmem:[%s6 + $0x4c] sm:$0xf] %v1635
  %1764 = vst [vmem:[%s6 + $0x50] sm:$0xf] %v1636
  %1765 = vst [vmem:[%s6 + $0x54] sm:$0xf] %v1637
  %1766 = vst [vmem:[%s6 + $0x58] sm:$0xf] %v1638
  %1767 = vst [vmem:[%s6 + $0x5c] sm:$0xf] %v1639
  %1768 = vst [vmem:[%s6 + $0x60] sm:$0xf] %v1640
  %1769 = vst [vmem:[%s6 + $0x64] sm:$0xf] %v1641
  %1770 = vst [vmem:[%s6 + $0x68] sm:$0xf] %v1642
  %1771 = vst [vmem:[%s6 + $0x6c] sm:$0xf] %v1643
  %1772 = vst [vmem:[%s6 + $0x70] sm:$0xf] %v1644
  %1773 = vst [vmem:[%s6 + $0x74] sm:$0xf] %v1645
  %1774 = vst [vmem:[%s6 + $0x78] sm:$0xf] %v1646
  %1775 = vst [vmem:[%s6 + $0x7c] sm:$0xf] %v1647
  %1776 = vst [vmem:[%s6 + $0x80] sm:$0xf] %v1648
  %1777 = vst [vmem:[%s6 + $0x84] sm:$0xf] %v1649
  %1778 = vst [vmem:[%s6 + $0x88] sm:$0xf] %v1650
  %1779 = vst [vmem:[%s6 + $0x8c] sm:$0xf] %v1651
  %1780 = vst [vmem:[%s6 + $0x90] sm:$0xf] %v1652
  %1781 = vst [vmem:[%s6 + $0x94] sm:$0xf] %v1653
  %1782 = vst [vmem:[%s6 + $0x98] sm:$0xf] %v1654
  %1783 = vst [vmem:[%s6 + $0x9c] sm:$0xf] %v1655
  %1784 = vst [vmem:[%s6 + $0xa0] sm:$0xf] %v1656
  %1785 = vst [vmem:[%s6 + $0xa4] sm:$0xf] %v1657
  %1786 = vst [vmem:[%s6 + $0xa8] sm:$0xf] %v1658
  %1787 = vst [vmem:[%s6 + $0xac] sm:$0xf] %v1659
  %1788 = vst [vmem:[%s6 + $0xb0] sm:$0xf] %v1660
  %1789 = vst [vmem:[%s6 + $0xb4] sm:$0xf] %v1661
  %1790 = vst [vmem:[%s6 + $0xb8] sm:$0xf] %v1662
  %1791 = vst [vmem:[%s6 + $0xbc] sm:$0xf] %v1663
  %1792 = vst [vmem:[%s6 + $0xc0] sm:$0xf] %v1664
  %1793 = vst [vmem:[%s6 + $0xc4] sm:$0xf] %v1665
  %1794 = vst [vmem:[%s6 + $0xc8] sm:$0xf] %v1666
  %1795 = vst [vmem:[%s6 + $0xcc] sm:$0xf] %v1667
  %1796 = vst [vmem:[%s6 + $0xd0] sm:$0xf] %v1668
  %1797 = vst [vmem:[%s6 + $0xd4] sm:$0xf] %v1669
  %1798 = vst [vmem:[%s6 + $0xd8] sm:$0xf] %v1670
  %1799 = vst [vmem:[%s6 + $0xdc] sm:$0xf] %v1671
  %1800 = vst [vmem:[%s6 + $0xe0] sm:$0xf] %v1672
  %1801 = vst [vmem:[%s6 + $0xe4] sm:$0xf] %v1673
  %1802 = vst [vmem:[%s6 + $0xe8] sm:$0xf] %v1674
  %1803 = vst [vmem:[%s6 + $0xec] sm:$0xf] %v1675
  %1804 = vst [vmem:[%s6 + $0xf0] sm:$0xf] %v1676
  %1805 = vst [vmem:[%s6 + $0xf4] sm:$0xf] %v1677
  %1806 = vst [vmem:[%s6 + $0xf8] sm:$0xf] %v1678
  %1807 = vst [vmem:[%s6 + $0xfc] sm:$0xf] %v1679
  %v1808 = vpack.c.bf16 %v297, %v296
  %v1809 = vpack.c.bf16 %v299, %v298
  %v1810 = vpack.c.bf16 %v301, %v300
  %v1811 = vpack.c.bf16 %v303, %v302
  %v1812 = vpack.c.bf16 %v305, %v304
  %v1813 = vpack.c.bf16 %v307, %v306
  %v1814 = vpack.c.bf16 %v309, %v308
  %v1815 = vpack.c.bf16 %v311, %v310
  %v1816 = vpack.c.bf16 %v313, %v312
  %v1817 = vpack.c.bf16 %v315, %v314
  %v1818 = vpack.c.bf16 %v317, %v316
  %v1819 = vpack.c.bf16 %v319, %v318
  %v1820 = vpack.c.bf16 %v321, %v320
  %v1821 = vpack.c.bf16 %v323, %v322
  %v1822 = vpack.c.bf16 %v325, %v324
  %v1823 = vpack.c.bf16 %v327, %v326
  %v1824 = vpack.c.bf16 %v329, %v328
  %v1825 = vpack.c.bf16 %v331, %v330
  %v1826 = vpack.c.bf16 %v333, %v332
  %v1827 = vpack.c.bf16 %v335, %v334
  %v1828 = vpack.c.bf16 %v337, %v336
  %v1829 = vpack.c.bf16 %v339, %v338
  %v1830 = vpack.c.bf16 %v341, %v340
  %v1831 = vpack.c.bf16 %v343, %v342
  %v1832 = vpack.c.bf16 %v345, %v344
  %v1833 = vpack.c.bf16 %v347, %v346
  %v1834 = vpack.c.bf16 %v349, %v348
  %v1835 = vpack.c.bf16 %v351, %v350
  %v1836 = vpack.c.bf16 %v353, %v352
  %v1837 = vpack.c.bf16 %v355, %v354
  %v1838 = vpack.c.bf16 %v357, %v356
  %v1839 = vpack.c.bf16 %v359, %v358
  %v1872 = vunpack.c.l.b16 %v1808
  %v1873 = vunpack.c.h.b16 %v1808
  %v1874 = vunpack.c.l.b16 %v1809
  %v1875 = vunpack.c.h.b16 %v1809
  %v1876 = vunpack.c.l.b16 %v1810
  %v1877 = vunpack.c.h.b16 %v1810
  %v1878 = vunpack.c.l.b16 %v1811
  %v1879 = vunpack.c.h.b16 %v1811
  %v1880 = vunpack.c.l.b16 %v1812
  %v1881 = vunpack.c.h.b16 %v1812
  %v1882 = vunpack.c.l.b16 %v1813
  %v1883 = vunpack.c.h.b16 %v1813
  %v1884 = vunpack.c.l.b16 %v1814
  %v1885 = vunpack.c.h.b16 %v1814
  %v1886 = vunpack.c.l.b16 %v1815
  %v1887 = vunpack.c.h.b16 %v1815
  %v1888 = vunpack.c.l.b16 %v1816
  %v1889 = vunpack.c.h.b16 %v1816
  %v1890 = vunpack.c.l.b16 %v1817
  %v1891 = vunpack.c.h.b16 %v1817
  %v1892 = vunpack.c.l.b16 %v1818
  %v1893 = vunpack.c.h.b16 %v1818
  %v1894 = vunpack.c.l.b16 %v1819
  %v1895 = vunpack.c.h.b16 %v1819
  %v1896 = vunpack.c.l.b16 %v1820
  %v1897 = vunpack.c.h.b16 %v1820
  %v1898 = vunpack.c.l.b16 %v1821
  %v1899 = vunpack.c.h.b16 %v1821
  %v1900 = vunpack.c.l.b16 %v1822
  %v1901 = vunpack.c.h.b16 %v1822
  %v1902 = vunpack.c.l.b16 %v1823
  %v1903 = vunpack.c.h.b16 %v1823
  %v1904 = vunpack.c.l.b16 %v1824
  %v1905 = vunpack.c.h.b16 %v1824
  %v1906 = vunpack.c.l.b16 %v1825
  %v1907 = vunpack.c.h.b16 %v1825
  %v1908 = vunpack.c.l.b16 %v1826
  %v1909 = vunpack.c.h.b16 %v1826
  %v1910 = vunpack.c.l.b16 %v1827
  %v1911 = vunpack.c.h.b16 %v1827
  %v1912 = vunpack.c.l.b16 %v1828
  %v1913 = vunpack.c.h.b16 %v1828
  %v1914 = vunpack.c.l.b16 %v1829
  %v1915 = vunpack.c.h.b16 %v1829
  %v1916 = vunpack.c.l.b16 %v1830
  %v1917 = vunpack.c.h.b16 %v1830
  %v1918 = vunpack.c.l.b16 %v1831
  %v1919 = vunpack.c.h.b16 %v1831
  %v1920 = vunpack.c.l.b16 %v1832
  %v1921 = vunpack.c.h.b16 %v1832
  %v1922 = vunpack.c.l.b16 %v1833
  %v1923 = vunpack.c.h.b16 %v1833
  %v1924 = vunpack.c.l.b16 %v1834
  %v1925 = vunpack.c.h.b16 %v1834
  %v1926 = vunpack.c.l.b16 %v1835
  %v1927 = vunpack.c.h.b16 %v1835
  %v1928 = vunpack.c.l.b16 %v1836
  %v1929 = vunpack.c.h.b16 %v1836
  %v1930 = vunpack.c.l.b16 %v1837
  %v1931 = vunpack.c.h.b16 %v1837
  %v1932 = vunpack.c.l.b16 %v1838
  %v1933 = vunpack.c.h.b16 %v1838
  %v1934 = vunpack.c.l.b16 %v1839
  %v1935 = vunpack.c.h.b16 %v1839
  %v1936 = vpack.c.b16 %v1872, %v1872
  %v1937 = vpack.c.b16 %v1873, %v1873
  %v1938 = vpack.c.b16 %v1874, %v1874
  %v1939 = vpack.c.b16 %v1875, %v1875
  %v1940 = vpack.c.b16 %v1876, %v1876
  %v1941 = vpack.c.b16 %v1877, %v1877
  %v1942 = vpack.c.b16 %v1878, %v1878
  %v1943 = vpack.c.b16 %v1879, %v1879
  %v1944 = vpack.c.b16 %v1880, %v1880
  %v1945 = vpack.c.b16 %v1881, %v1881
  %v1946 = vpack.c.b16 %v1882, %v1882
  %v1947 = vpack.c.b16 %v1883, %v1883
  %v1948 = vpack.c.b16 %v1884, %v1884
  %v1949 = vpack.c.b16 %v1885, %v1885
  %v1950 = vpack.c.b16 %v1886, %v1886
  %v1951 = vpack.c.b16 %v1887, %v1887
  %v1952 = vpack.c.b16 %v1888, %v1888
  %v1953 = vpack.c.b16 %v1889, %v1889
  %v1954 = vpack.c.b16 %v1890, %v1890
  %v1955 = vpack.c.b16 %v1891, %v1891
  %v1956 = vpack.c.b16 %v1892, %v1892
  %v1957 = vpack.c.b16 %v1893, %v1893
  %v1958 = vpack.c.b16 %v1894, %v1894
  %v1959 = vpack.c.b16 %v1895, %v1895
  %v1960 = vpack.c.b16 %v1896, %v1896
  %v1961 = vpack.c.b16 %v1897, %v1897
  %v1962 = vpack.c.b16 %v1898, %v1898
  %v1963 = vpack.c.b16 %v1899, %v1899
  %v1964 = vpack.c.b16 %v1900, %v1900
  %v1965 = vpack.c.b16 %v1901, %v1901
  %v1966 = vpack.c.b16 %v1902, %v1902
  %v1967 = vpack.c.b16 %v1903, %v1903
  %v1968 = vpack.c.b16 %v1904, %v1904
  %v1969 = vpack.c.b16 %v1905, %v1905
  %v1970 = vpack.c.b16 %v1906, %v1906
  %v1971 = vpack.c.b16 %v1907, %v1907
  %v1972 = vpack.c.b16 %v1908, %v1908
  %v1973 = vpack.c.b16 %v1909, %v1909
  %v1974 = vpack.c.b16 %v1910, %v1910
  %v1975 = vpack.c.b16 %v1911, %v1911
  %v1976 = vpack.c.b16 %v1912, %v1912
  %v1977 = vpack.c.b16 %v1913, %v1913
  %v1978 = vpack.c.b16 %v1914, %v1914
  %v1979 = vpack.c.b16 %v1915, %v1915
  %v1980 = vpack.c.b16 %v1916, %v1916
  %v1981 = vpack.c.b16 %v1917, %v1917
  %v1982 = vpack.c.b16 %v1918, %v1918
  %v1983 = vpack.c.b16 %v1919, %v1919
  %v1984 = vpack.c.b16 %v1920, %v1920
  %v1985 = vpack.c.b16 %v1921, %v1921
  %v1986 = vpack.c.b16 %v1922, %v1922
  %v1987 = vpack.c.b16 %v1923, %v1923
  %v1988 = vpack.c.b16 %v1924, %v1924
  %v1989 = vpack.c.b16 %v1925, %v1925
  %v1990 = vpack.c.b16 %v1926, %v1926
  %v1991 = vpack.c.b16 %v1927, %v1927
  %v1992 = vpack.c.b16 %v1928, %v1928
  %v1993 = vpack.c.b16 %v1929, %v1929
  %v1994 = vpack.c.b16 %v1930, %v1930
  %v1995 = vpack.c.b16 %v1931, %v1931
  %v1996 = vpack.c.b16 %v1932, %v1932
  %v1997 = vpack.c.b16 %v1933, %v1933
  %v1998 = vpack.c.b16 %v1934, %v1934
  %v1999 = vpack.c.b16 %v1935, %v1935
  %2064 = vst [vmem:[%s7] sm:$0xf] %v1936
  %2065 = vst [vmem:[%s7 + $0x4] sm:$0xf] %v1937
  %2066 = vst [vmem:[%s7 + $0x8] sm:$0xf] %v1938
  %2067 = vst [vmem:[%s7 + $0xc] sm:$0xf] %v1939
  %2068 = vst [vmem:[%s7 + $0x10] sm:$0xf] %v1940
  %2069 = vst [vmem:[%s7 + $0x14] sm:$0xf] %v1941
  %2070 = vst [vmem:[%s7 + $0x18] sm:$0xf] %v1942
  %2071 = vst [vmem:[%s7 + $0x1c] sm:$0xf] %v1943
  %2072 = vst [vmem:[%s7 + $0x20] sm:$0xf] %v1944
  %2073 = vst [vmem:[%s7 + $0x24] sm:$0xf] %v1945
  %2074 = vst [vmem:[%s7 + $0x28] sm:$0xf] %v1946
  %2075 = vst [vmem:[%s7 + $0x2c] sm:$0xf] %v1947
  %2076 = vst [vmem:[%s7 + $0x30] sm:$0xf] %v1948
  %2077 = vst [vmem:[%s7 + $0x34] sm:$0xf] %v1949
  %2078 = vst [vmem:[%s7 + $0x38] sm:$0xf] %v1950
  %2079 = vst [vmem:[%s7 + $0x3c] sm:$0xf] %v1951
  %2080 = vst [vmem:[%s7 + $0x40] sm:$0xf] %v1952
  %2081 = vst [vmem:[%s7 + $0x44] sm:$0xf] %v1953
  %2082 = vst [vmem:[%s7 + $0x48] sm:$0xf] %v1954
  %2083 = vst [vmem:[%s7 + $0x4c] sm:$0xf] %v1955
  %2084 = vst [vmem:[%s7 + $0x50] sm:$0xf] %v1956
  %2085 = vst [vmem:[%s7 + $0x54] sm:$0xf] %v1957
  %2086 = vst [vmem:[%s7 + $0x58] sm:$0xf] %v1958
  %2087 = vst [vmem:[%s7 + $0x5c] sm:$0xf] %v1959
  %2088 = vst [vmem:[%s7 + $0x60] sm:$0xf] %v1960
  %2089 = vst [vmem:[%s7 + $0x64] sm:$0xf] %v1961
  %2090 = vst [vmem:[%s7 + $0x68] sm:$0xf] %v1962
  %2091 = vst [vmem:[%s7 + $0x6c] sm:$0xf] %v1963
  %2092 = vst [vmem:[%s7 + $0x70] sm:$0xf] %v1964
  %2093 = vst [vmem:[%s7 + $0x74] sm:$0xf] %v1965
  %2094 = vst [vmem:[%s7 + $0x78] sm:$0xf] %v1966
  %2095 = vst [vmem:[%s7 + $0x7c] sm:$0xf] %v1967
  %2096 = vst [vmem:[%s7 + $0x80] sm:$0xf] %v1968
  %2097 = vst [vmem:[%s7 + $0x84] sm:$0xf] %v1969
  %2098 = vst [vmem:[%s7 + $0x88] sm:$0xf] %v1970
  %2099 = vst [vmem:[%s7 + $0x8c] sm:$0xf] %v1971
  %2100 = vst [vmem:[%s7 + $0x90] sm:$0xf] %v1972
  %2101 = vst [vmem:[%s7 + $0x94] sm:$0xf] %v1973
  %2102 = vst [vmem:[%s7 + $0x98] sm:$0xf] %v1974
  %2103 = vst [vmem:[%s7 + $0x9c] sm:$0xf] %v1975
  %2104 = vst [vmem:[%s7 + $0xa0] sm:$0xf] %v1976
  %2105 = vst [vmem:[%s7 + $0xa4] sm:$0xf] %v1977
  %2106 = vst [vmem:[%s7 + $0xa8] sm:$0xf] %v1978
  %2107 = vst [vmem:[%s7 + $0xac] sm:$0xf] %v1979
  %2108 = vst [vmem:[%s7 + $0xb0] sm:$0xf] %v1980
  %2109 = vst [vmem:[%s7 + $0xb4] sm:$0xf] %v1981
  %2110 = vst [vmem:[%s7 + $0xb8] sm:$0xf] %v1982
  %2111 = vst [vmem:[%s7 + $0xbc] sm:$0xf] %v1983
  %2112 = vst [vmem:[%s7 + $0xc0] sm:$0xf] %v1984
  %2113 = vst [vmem:[%s7 + $0xc4] sm:$0xf] %v1985
  %2114 = vst [vmem:[%s7 + $0xc8] sm:$0xf] %v1986
  %2115 = vst [vmem:[%s7 + $0xcc] sm:$0xf] %v1987
  %2116 = vst [vmem:[%s7 + $0xd0] sm:$0xf] %v1988
  %2117 = vst [vmem:[%s7 + $0xd4] sm:$0xf] %v1989
  %2118 = vst [vmem:[%s7 + $0xd8] sm:$0xf] %v1990
  %2119 = vst [vmem:[%s7 + $0xdc] sm:$0xf] %v1991
  %2120 = vst [vmem:[%s7 + $0xe0] sm:$0xf] %v1992
  %2121 = vst [vmem:[%s7 + $0xe4] sm:$0xf] %v1993
  %2122 = vst [vmem:[%s7 + $0xe8] sm:$0xf] %v1994
  %2123 = vst [vmem:[%s7 + $0xec] sm:$0xf] %v1995
  %2124 = vst [vmem:[%s7 + $0xf0] sm:$0xf] %v1996
  %2125 = vst [vmem:[%s7 + $0xf4] sm:$0xf] %v1997
  %2126 = vst [vmem:[%s7 + $0xf8] sm:$0xf] %v1998
  %2127 = vst [vmem:[%s7 + $0xfc] sm:$0xf] %v1999
  // Predicated region
  $region26: #{mbe_block_forward.8} parent=0 // pred_check
    _
  $region27: #{mbe_block_forward.8} parent=0 // pred_check_branch
    %2129 = sbr.rel (0) target = $region29
  $region28: #{mbe_block_forward.8} parent=0 // pred_region
    _
  $region29: #{mbe_block_forward.8} parent=0 // pred_fallthru
    _
  // Predicated region
  $region30: #{mbe_block_forward.8} parent=0 // pred_check
    _
  $region31: #{mbe_block_forward.8} parent=0 // pred_check_branch
    %2131 = sbr.rel (0) target = $region33
  $region32: #{mbe_block_forward.8} parent=0 // pred_region
    _
  $region33: #{mbe_block_forward.8} parent=0 // pred_fallthru
    _
  // Predicated region
  $region34: #{mbe_block_forward.8} parent=0 // pred_check
    _
  $region35: #{mbe_block_forward.8} parent=0 // pred_check_branch
    %2133 = sbr.rel (0) target = $region37
  $region36: #{mbe_block_forward.8} parent=0 // pred_region
    _
  $region37: #{mbe_block_forward.8} parent=0 // pred_fallthru
    _
  // Predicated region
  $region38: #{mbe_block_forward.8} parent=0 // pred_check
    _
  $region39: #{mbe_block_forward.8} parent=0 // pred_check_branch
    %2135 = sbr.rel (0) target = $region41
  $region40: #{mbe_block_forward.8} parent=0 // pred_region
    _
  $region41: #{mbe_block_forward.8} parent=0 // pred_fallthru
    _

// kernel: mbe_block_forward.9
$region0: #{mbe_block_forward.9}
  #allocation0 [shape = 'u32[]', space=smem, size = 0x4, offset = 0x4, fixed_abs, tag = 'smem constant byte address 0x4 - core index']
  #allocation1 [shape = 'u32[144,128]{1,0:T(1,128)}', space=vmem, size = 0x12000, scoped, tag = 'internal scratch']
  %s0 = inlined_call_operand.vmem [shape: bf16[512,128], index: 0, kind: input, shape index: {}]
  %s1 = inlined_call_operand.vmem [shape: bf16[128,128], index: 1, kind: input, shape index: {}]
  %s2 = inlined_call_operand.vmem [shape: f32[1,128], index: 2, kind: input, shape index: {}]
  %s3 = inlined_call_operand.vmem [shape: bf16[512,128], index: 3, kind: output, shape index: {0}]
  %s4 = inlined_call_operand.vmem [shape: f32[1,8,128], index: 4, kind: output, shape index: {1}]
  %5 = xla_tuple %s3, %s4
  %s6 = sld [smem:[#allocation0]]
  $region30: #{mbe_block_forward.9} parent=0
    _
  %s8 = ssub.s32 1, %s6
  %s9 = scalar_select 0, %s8, %s6
  // Predicated region
  $region2: #{mbe_block_forward.9} parent=0 // pred_check
    _
  $region3: #{mbe_block_forward.9} parent=0 // pred_check_branch
    %11 = sbr.rel (0) target = $region5
  $region4: #{mbe_block_forward.9} parent=0 // pred_region
    _
  $region5: #{mbe_block_forward.9} parent=0 // pred_fallthru
    _
  // Predicated region
  $region6: #{mbe_block_forward.9} parent=0 // pred_check
    _
  $region7: #{mbe_block_forward.9} parent=0 // pred_check_branch
    %13 = sbr.rel (0) target = $region9
  $region8: #{mbe_block_forward.9} parent=0 // pred_region
    _
  $region9: #{mbe_block_forward.9} parent=0 // pred_fallthru
    _
  // Predicated region
  $region10: #{mbe_block_forward.9} parent=0 // pred_check
    _
  $region11: #{mbe_block_forward.9} parent=0 // pred_check_branch
    %15 = sbr.rel (0) target = $region13
  $region12: #{mbe_block_forward.9} parent=0 // pred_region
    _
  $region13: #{mbe_block_forward.9} parent=0 // pred_fallthru
    _
  %v17 = vld [vmem:[%s0] sm:$0xf]
  %v18 = vld [vmem:[%s0 + $0x4] sm:$0xf]
  %v19 = vld [vmem:[%s0 + $0x8] sm:$0xf]
  %v20 = vld [vmem:[%s0 + $0xc] sm:$0xf]
  %v21 = vld [vmem:[%s0 + $0x10] sm:$0xf]
  %v22 = vld [vmem:[%s0 + $0x14] sm:$0xf]
  %v23 = vld [vmem:[%s0 + $0x18] sm:$0xf]
  %v24 = vld [vmem:[%s0 + $0x1c] sm:$0xf]
  %v25 = vld [vmem:[%s0 + $0x20] sm:$0xf]
  %v26 = vld [vmem:[%s0 + $0x24] sm:$0xf]
  %v27 = vld [vmem:[%s0 + $0x28] sm:$0xf]
  %v28 = vld [vmem:[%s0 + $0x2c] sm:$0xf]
  %v29 = vld [vmem:[%s0 + $0x30] sm:$0xf]
  %v30 = vld [vmem:[%s0 + $0x34] sm:$0xf]
  %v31 = vld [vmem:[%s0 + $0x38] sm:$0xf]
  %v32 = vld [vmem:[%s0 + $0x3c] sm:$0xf]
  %v33 = vld [vmem:[%s0 + $0x40] sm:$0xf]
  %v34 = vld [vmem:[%s0 + $0x44] sm:$0xf]
  %v35 = vld [vmem:[%s0 + $0x48] sm:$0xf]
  %v36 = vld [vmem:[%s0 + $0x4c] sm:$0xf]
  %v37 = vld [vmem:[%s0 + $0x50] sm:$0xf]
  %v38 = vld [vmem:[%s0 + $0x54] sm:$0xf]
  %v39 = vld [vmem:[%s0 + $0x58] sm:$0xf]
  %v40 = vld [vmem:[%s0 + $0x5c] sm:$0xf]
  %v41 = vld [vmem:[%s0 + $0x60] sm:$0xf]
  %v42 = vld [vmem:[%s0 + $0x64] sm:$0xf]
  %v43 = vld [vmem:[%s0 + $0x68] sm:$0xf]
  %v44 = vld [vmem:[%s0 + $0x6c] sm:$0xf]
  %v45 = vld [vmem:[%s0 + $0x70] sm:$0xf]
  %v46 = vld [vmem:[%s0 + $0x74] sm:$0xf]
  %v47 = vld [vmem:[%s0 + $0x78] sm:$0xf]
  %v48 = vld [vmem:[%s0 + $0x7c] sm:$0xf]
  %v49 = vld [vmem:[%s0 + $0x80] sm:$0xf]
  %v50 = vld [vmem:[%s0 + $0x84] sm:$0xf]
  %v51 = vld [vmem:[%s0 + $0x88] sm:$0xf]
  %v52 = vld [vmem:[%s0 + $0x8c] sm:$0xf]
  %v53 = vld [vmem:[%s0 + $0x90] sm:$0xf]
  %v54 = vld [vmem:[%s0 + $0x94] sm:$0xf]
  %v55 = vld [vmem:[%s0 + $0x98] sm:$0xf]
  %v56 = vld [vmem:[%s0 + $0x9c] sm:$0xf]
  %v57 = vld [vmem:[%s0 + $0xa0] sm:$0xf]
  %v58 = vld [vmem:[%s0 + $0xa4] sm:$0xf]
  %v59 = vld [vmem:[%s0 + $0xa8] sm:$0xf]
  %v60 = vld [vmem:[%s0 + $0xac] sm:$0xf]
  %v61 = vld [vmem:[%s0 + $0xb0] sm:$0xf]
  %v62 = vld [vmem:[%s0 + $0xb4] sm:$0xf]
  %v63 = vld [vmem:[%s0 + $0xb8] sm:$0xf]
  %v64 = vld [vmem:[%s0 + $0xbc] sm:$0xf]
  %v65 = vld [vmem:[%s0 + $0xc0] sm:$0xf]
  %v66 = vld [vmem:[%s0 + $0xc4] sm:$0xf]
  %v67 = vld [vmem:[%s0 + $0xc8] sm:$0xf]
  %v68 = vld [vmem:[%s0 + $0xcc] sm:$0xf]
  %v69 = vld [vmem:[%s0 + $0xd0] sm:$0xf]
  %v70 = vld [vmem:[%s0 + $0xd4] sm:$0xf]
  %v71 = vld [vmem:[%s0 + $0xd8] sm:$0xf]
  %v72 = vld [vmem:[%s0 + $0xdc] sm:$0xf]
  %v73 = vld [vmem:[%s0 + $0xe0] sm:$0xf]
  %v74 = vld [vmem:[%s0 + $0xe4] sm:$0xf]
  %v75 = vld [vmem:[%s0 + $0xe8] sm:$0xf]
  %v76 = vld [vmem:[%s0 + $0xec] sm:$0xf]
  %v77 = vld [vmem:[%s0 + $0xf0] sm:$0xf]
  %v78 = vld [vmem:[%s0 + $0xf4] sm:$0xf]
  %v79 = vld [vmem:[%s0 + $0xf8] sm:$0xf]
  %v80 = vld [vmem:[%s0 + $0xfc] sm:$0xf]
  %v81 = vld [vmem:[%s1] sm:$0xf]
  %v82 = vld [vmem:[%s1 + $0x4] sm:$0xf]
  %v83 = vld [vmem:[%s1 + $0x8] sm:$0xf]
  %v84 = vld [vmem:[%s1 + $0xc] sm:$0xf]
  %v85 = vld [vmem:[%s1 + $0x10] sm:$0xf]
  %v86 = vld [vmem:[%s1 + $0x14] sm:$0xf]
  %v87 = vld [vmem:[%s1 + $0x18] sm:$0xf]
  %v88 = vld [vmem:[%s1 + $0x1c] sm:$0xf]
  %v89 = vld [vmem:[%s1 + $0x20] sm:$0xf]
  %v90 = vld [vmem:[%s1 + $0x24] sm:$0xf]
  %v91 = vld [vmem:[%s1 + $0x28] sm:$0xf]
  %v92 = vld [vmem:[%s1 + $0x2c] sm:$0xf]
  %v93 = vld [vmem:[%s1 + $0x30] sm:$0xf]
  %v94 = vld [vmem:[%s1 + $0x34] sm:$0xf]
  %v95 = vld [vmem:[%s1 + $0x38] sm:$0xf]
  %v96 = vld [vmem:[%s1 + $0x3c] sm:$0xf]
  %v97 = vld [vmem:[%s2] sm:$0x1]
  %v99 = vlaneseq
  %v100 = vshrl.u32 %v99, 7
  %v101 = vsub.s32 0, %v100
  %v102 = vrot.slane %v97, %v101
  %v168 = vunpack.c.l.b16 %v17
  %v169 = vunpack.c.l.b16 %v18
  %v170 = vunpack.c.l.b16 %v19
  %v171 = vunpack.c.l.b16 %v20
  %v172 = vunpack.c.l.b16 %v21
  %v173 = vunpack.c.l.b16 %v22
  %v174 = vunpack.c.l.b16 %v23
  %v175 = vunpack.c.l.b16 %v24
  %v176 = vunpack.c.l.b16 %v25
  %v177 = vunpack.c.l.b16 %v26
  %v178 = vunpack.c.l.b16 %v27
  %v179 = vunpack.c.l.b16 %v28
  %v180 = vunpack.c.l.b16 %v29
  %v181 = vunpack.c.l.b16 %v30
  %v182 = vunpack.c.l.b16 %v31
  %v183 = vunpack.c.l.b16 %v32
  %v184 = vunpack.c.l.b16 %v33
  %v185 = vunpack.c.l.b16 %v34
  %v186 = vunpack.c.l.b16 %v35
  %v187 = vunpack.c.l.b16 %v36
  %v188 = vunpack.c.l.b16 %v37
  %v189 = vunpack.c.l.b16 %v38
  %v190 = vunpack.c.l.b16 %v39
  %v191 = vunpack.c.l.b16 %v40
  %v192 = vunpack.c.l.b16 %v41
  %v193 = vunpack.c.l.b16 %v42
  %v194 = vunpack.c.l.b16 %v43
  %v195 = vunpack.c.l.b16 %v44
  %v196 = vunpack.c.l.b16 %v45
  %v197 = vunpack.c.l.b16 %v46
  %v198 = vunpack.c.l.b16 %v47
  %v199 = vunpack.c.l.b16 %v48
  %v200 = vunpack.c.l.b16 %v49
  %v201 = vunpack.c.l.b16 %v50
  %v202 = vunpack.c.l.b16 %v51
  %v203 = vunpack.c.l.b16 %v52
  %v204 = vunpack.c.l.b16 %v53
  %v205 = vunpack.c.l.b16 %v54
  %v206 = vunpack.c.l.b16 %v55
  %v207 = vunpack.c.l.b16 %v56
  %v208 = vunpack.c.l.b16 %v57
  %v209 = vunpack.c.l.b16 %v58
  %v210 = vunpack.c.l.b16 %v59
  %v211 = vunpack.c.l.b16 %v60
  %v212 = vunpack.c.l.b16 %v61
  %v213 = vunpack.c.l.b16 %v62
  %v214 = vunpack.c.l.b16 %v63
  %v215 = vunpack.c.l.b16 %v64
  %v216 = vunpack.c.l.b16 %v65
  %v217 = vunpack.c.l.b16 %v66
  %v218 = vunpack.c.l.b16 %v67
  %v219 = vunpack.c.l.b16 %v68
  %v220 = vunpack.c.l.b16 %v69
  %v221 = vunpack.c.l.b16 %v70
  %v222 = vunpack.c.l.b16 %v71
  %v223 = vunpack.c.l.b16 %v72
  %v224 = vunpack.c.l.b16 %v73
  %v225 = vunpack.c.l.b16 %v74
  %v226 = vunpack.c.l.b16 %v75
  %v227 = vunpack.c.l.b16 %v76
  %v228 = vunpack.c.l.b16 %v77
  %v229 = vunpack.c.l.b16 %v78
  %v230 = vunpack.c.l.b16 %v79
  %v231 = vunpack.c.l.b16 %v80
  %v232 = vpack.c.b16 %v169, %v168
  %v233 = vpack.c.b16 %v171, %v170
  %v234 = vpack.c.b16 %v173, %v172
  %v235 = vpack.c.b16 %v175, %v174
  %v236 = vpack.c.b16 %v177, %v176
  %v237 = vpack.c.b16 %v179, %v178
  %v238 = vpack.c.b16 %v181, %v180
  %v239 = vpack.c.b16 %v183, %v182
  %v240 = vpack.c.b16 %v185, %v184
  %v241 = vpack.c.b16 %v187, %v186
  %v242 = vpack.c.b16 %v189, %v188
  %v243 = vpack.c.b16 %v191, %v190
  %v244 = vpack.c.b16 %v193, %v192
  %v245 = vpack.c.b16 %v195, %v194
  %v246 = vpack.c.b16 %v197, %v196
  %v247 = vpack.c.b16 %v199, %v198
  %v248 = vpack.c.b16 %v201, %v200
  %v249 = vpack.c.b16 %v203, %v202
  %v250 = vpack.c.b16 %v205, %v204
  %v251 = vpack.c.b16 %v207, %v206
  %v252 = vpack.c.b16 %v209, %v208
  %v253 = vpack.c.b16 %v211, %v210
  %v254 = vpack.c.b16 %v213, %v212
  %v255 = vpack.c.b16 %v215, %v214
  %v256 = vpack.c.b16 %v217, %v216
  %v257 = vpack.c.b16 %v219, %v218
  %v258 = vpack.c.b16 %v221, %v220
  %v259 = vpack.c.b16 %v223, %v222
  %v260 = vpack.c.b16 %v225, %v224
  %v261 = vpack.c.b16 %v227, %v226
  %v262 = vpack.c.b16 %v229, %v228
  %v263 = vpack.c.b16 %v231, %v230
  %v312 = vunpack.c.l.b16 %v81
  %v313 = vunpack.c.l.b16 %v82
  %v314 = vunpack.c.l.b16 %v83
  %v315 = vunpack.c.l.b16 %v84
  %v316 = vunpack.c.l.b16 %v85
  %v317 = vunpack.c.l.b16 %v86
  %v318 = vunpack.c.l.b16 %v87
  %v319 = vunpack.c.l.b16 %v88
  %v320 = vunpack.c.l.b16 %v89
  %v321 = vunpack.c.l.b16 %v90
  %v322 = vunpack.c.l.b16 %v91
  %v323 = vunpack.c.l.b16 %v92
  %v324 = vunpack.c.l.b16 %v93
  %v325 = vunpack.c.l.b16 %v94
  %v326 = vunpack.c.l.b16 %v95
  %v327 = vunpack.c.l.b16 %v96
  %v328 = vpack.c.b16 %v313, %v312
  %v329 = vpack.c.b16 %v315, %v314
  %v330 = vpack.c.b16 %v317, %v316
  %v331 = vpack.c.b16 %v319, %v318
  %v332 = vpack.c.b16 %v321, %v320
  %v333 = vpack.c.b16 %v323, %v322
  %v334 = vpack.c.b16 %v325, %v324
  %v335 = vpack.c.b16 %v327, %v326
  %344 = vmatprep.subr.bf16.mxu0 0
  %345 = vmatpush1.bf16.msra.mxu0 %v328
  %346 = vmatprep.subr.bf16.mxu0 0
  %347 = vmatpush1.bf16.msra.mxu0 %v329
  %348 = vmatprep.subr.bf16.mxu0 0
  %349 = vmatpush1.bf16.msra.mxu0 %v330
  %350 = vmatprep.subr.bf16.mxu0 0
  %351 = vmatpush1.bf16.msra.mxu0 %v331
  %352 = vmatprep.subr.bf16.mxu0 0
  %353 = vmatpush1.bf16.msra.mxu0 %v332
  %354 = vmatprep.subr.bf16.mxu0 0
  %355 = vmatpush1.bf16.msra.mxu0 %v333
  %356 = vmatprep.subr.bf16.mxu0 0
  %357 = vmatpush1.bf16.msra.mxu0 %v334
  %358 = vmatprep.subr.bf16.mxu0 0
  %359 = vmatpush1.bf16.msra.mxu0 %v335
  %360 = vmatprep.subr.bf16.mxu0 0
  %361 = vmatpush1.bf16.msra.mxu0 0
  %362 = vmatprep.subr.bf16.mxu0 0
  %363 = vmatpush1.bf16.msra.mxu0 0
  %364 = vmatprep.subr.bf16.mxu0 0
  %365 = vmatpush1.bf16.msra.mxu0 0
  %366 = vmatprep.subr.bf16.mxu0 0
  %367 = vmatpush1.bf16.msra.mxu0 0
  %368 = vmatprep.subr.bf16.mxu0 0
  %369 = vmatpush1.bf16.msra.mxu0 0
  %370 = vmatprep.subr.bf16.mxu0 0
  %371 = vmatpush1.bf16.msra.mxu0 0
  %372 = vmatprep.subr.bf16.mxu0 0
  %373 = vmatpush1.bf16.msra.mxu0 0
  %374 = vmatprep.subr.bf16.mxu0 0
  %375 = vmatpush1.bf16.msra.mxu0 0
  %376 = vmatprep.mubr.bf16.mxu0 0
  %377 = vmatmul.mubr.bf16.gmra.mrb[0].mxu0 %v232
  %v378 = vpop.f32.mrb[0].mxu0
  %v379 = vadd.f32 %v102, %v378
  %v380 = vpop.f32.mrb[0].mxu0
  %v381 = vpop.f32.mrb[0].mxu0
  %v382 = vadd.f32 %v102, %v381
  %v383 = vpop.f32.mrb[0].mxu0
  %384 = vmatprep.mubr.bf16.mxu0 0
  %385 = vmatmul.mubr.bf16.gmra.mrb[0].mxu0 %v233
  %v386 = vpop.f32.mrb[0].mxu0
  %v387 = vadd.f32 %v102, %v386
  %v388 = vpop.f32.mrb[0].mxu0
  %v389 = vpop.f32.mrb[0].mxu0
  %v390 = vadd.f32 %v102, %v389
  %v391 = vpop.f32.mrb[0].mxu0
  %392 = vmatprep.mubr.bf16.mxu0 0
  %393 = vmatmul.mubr.bf16.gmra.mrb[0].mxu0 %v234
  %v394 = vpop.f32.mrb[0].mxu0
  %v395 = vadd.f32 %v102, %v394
  %v396 = vpop.f32.mrb[0].mxu0
  %v397 = vpop.f32.mrb[0].mxu0
  %v398 = vadd.f32 %v102, %v397
  %v399 = vpop.f32.mrb[0].mxu0
  %400 = vmatprep.mubr.bf16.mxu0 0
  %401 = vmatmul.mubr.bf16.gmra.mrb[0].mxu0 %v235
  %v402 = vpop.f32.mrb[0].mxu0
  %v403 = vadd.f32 %v102, %v402
  %v404 = vpop.f32.mrb[0].mxu0
  %v405 = vpop.f32.mrb[0].mxu0
  %v406 = vadd.f32 %v102, %v405
  %v407 = vpop.f32.mrb[0].mxu0
  %408 = vmatprep.mubr.bf16.mxu0 0
  %409 = vmatmul.mubr.bf16.gmra.mrb[0].mxu0 %v236
  %v410 = vpop.f32.mrb[0].mxu0
  %v411 = vadd.f32 %v102, %v410
  %v412 = vpop.f32.mrb[0].mxu0
  %v413 = vpop.f32.mrb[0].mxu0
  %v414 = vadd.f32 %v102, %v413
  %v415 = vpop.f32.mrb[0].mxu0
  %416 = vmatprep.mubr.bf16.mxu0 0
  %417 = vmatmul.mubr.bf16.gmra.mrb[0].mxu0 %v237
  %v418 = vpop.f32.mrb[0].mxu0
  %v419 = vadd.f32 %v102, %v418
  %v420 = vpop.f32.mrb[0].mxu0
  %v421 = vpop.f32.mrb[0].mxu0
  %v422 = vadd.f32 %v102, %v421
  %v423 = vpop.f32.mrb[0].mxu0
  %424 = vmatprep.mubr.bf16.mxu0 0
  %425 = vmatmul.mubr.bf16.gmra.mrb[0].mxu0 %v238
  %v426 = vpop.f32.mrb[0].mxu0
  %v427 = vadd.f32 %v102, %v426
  %v428 = vpop.f32.mrb[0].mxu0
  %v429 = vpop.f32.mrb[0].mxu0
  %v430 = vadd.f32 %v102, %v429
  %v431 = vpop.f32.mrb[0].mxu0
  %432 = vmatprep.mubr.bf16.mxu0 0
  %433 = vmatmul.mubr.bf16.gmra.mrb[0].mxu0 %v239
  %v434 = vpop.f32.mrb[0].mxu0
  %v435 = vadd.f32 %v102, %v434
  %v436 = vpop.f32.mrb[0].mxu0
  %v437 = vpop.f32.mrb[0].mxu0
  %v438 = vadd.f32 %v102, %v437
  %v439 = vpop.f32.mrb[0].mxu0
  %440 = vmatprep.mubr.bf16.mxu0 0
  %441 = vmatmul.mubr.bf16.gmra.mrb[0].mxu0 %v240
  %v442 = vpop.f32.mrb[0].mxu0
  %v443 = vadd.f32 %v102, %v442
  %v444 = vpop.f32.mrb[0].mxu0
  %v445 = vpop.f32.mrb[0].mxu0
  %v446 = vadd.f32 %v102, %v445
  %v447 = vpop.f32.mrb[0].mxu0
  %448 = vmatprep.mubr.bf16.mxu0 0
  %449 = vmatmul.mubr.bf16.gmra.mrb[0].mxu0 %v241
  %v450 = vpop.f32.mrb[0].mxu0
  %v451 = vadd.f32 %v102, %v450
  %v452 = vpop.f32.mrb[0].mxu0
  %v453 = vpop.f32.mrb[0].mxu0
  %v454 = vadd.f32 %v102, %v453
  %v455 = vpop.f32.mrb[0].mxu0
  %456 = vmatprep.mubr.bf16.mxu0 0
  %457 = vmatmul.mubr.bf16.gmra.mrb[0].mxu0 %v242
  %v458 = vpop.f32.mrb[0].mxu0
  %v459 = vadd.f32 %v102, %v458
  %v460 = vpop.f32.mrb[0].mxu0
  %v461 = vpop.f32.mrb[0].mxu0
  %v462 = vadd.f32 %v102, %v461
  %v463 = vpop.f32.mrb[0].mxu0
  %464 = vmatprep.mubr.bf16.mxu0 0
  %465 = vmatmul.mubr.bf16.gmra.mrb[0].mxu0 %v243
  %v466 = vpop.f32.mrb[0].mxu0
  %v467 = vadd.f32 %v102, %v466
  %v468 = vpop.f32.mrb[0].mxu0
  %v469 = vpop.f32.mrb[0].mxu0
  %v470 = vadd.f32 %v102, %v469
  %v471 = vpop.f32.mrb[0].mxu0
  %472 = vmatprep.mubr.bf16.mxu0 0
  %473 = vmatmul.mubr.bf16.gmra.mrb[0].mxu0 %v244
  %v474 = vpop.f32.mrb[0].mxu0
  %v475 = vadd.f32 %v102, %v474
  %v476 = vpop.f32.mrb[0].mxu0
  %v477 = vpop.f32.mrb[0].mxu0
  %v478 = vadd.f32 %v102, %v477
  %v479 = vpop.f32.mrb[0].mxu0
  %480 = vmatprep.mubr.bf16.mxu0 0
  %481 = vmatmul.mubr.bf16.gmra.mrb[0].mxu0 %v245
  %v482 = vpop.f32.mrb[0].mxu0
  %v483 = vadd.f32 %v102, %v482
  %v484 = vpop.f32.mrb[0].mxu0
  %v485 = vpop.f32.mrb[0].mxu0
  %v486 = vadd.f32 %v102, %v485
  %v487 = vpop.f32.mrb[0].mxu0
  %488 = vmatprep.mubr.bf16.mxu0 0
  %489 = vmatmul.mubr.bf16.gmra.mrb[0].mxu0 %v246
  %v490 = vpop.f32.mrb[0].mxu0
  %v491 = vadd.f32 %v102, %v490
  %v492 = vpop.f32.mrb[0].mxu0
  %v493 = vpop.f32.mrb[0].mxu0
  %v494 = vadd.f32 %v102, %v493
  %v495 = vpop.f32.mrb[0].mxu0
  %496 = vmatprep.mubr.bf16.mxu0 0
  %497 = vmatmul.mubr.bf16.gmra.mrb[0].mxu0 %v247
  %v498 = vpop.f32.mrb[0].mxu0
  %v499 = vadd.f32 %v102, %v498
  %v500 = vpop.f32.mrb[0].mxu0
  %v501 = vpop.f32.mrb[0].mxu0
  %v502 = vadd.f32 %v102, %v501
  %v503 = vpop.f32.mrb[0].mxu0
  %504 = vmatprep.mubr.bf16.mxu0 0
  %505 = vmatmul.mubr.bf16.gmra.mrb[0].mxu0 %v248
  %v506 = vpop.f32.mrb[0].mxu0
  %v507 = vadd.f32 %v102, %v506
  %v508 = vpop.f32.mrb[0].mxu0
  %v509 = vpop.f32.mrb[0].mxu0
  %v510 = vadd.f32 %v102, %v509
  %v511 = vpop.f32.mrb[0].mxu0
  %512 = vmatprep.mubr.bf16.mxu0 0
  %513 = vmatmul.mubr.bf16.gmra.mrb[0].mxu0 %v249
  %v514 = vpop.f32.mrb[0].mxu0
  %v515 = vadd.f32 %v102, %v514
  %v516 = vpop.f32.mrb[0].mxu0
  %v517 = vpop.f32.mrb[0].mxu0
  %v518 = vadd.f32 %v102, %v517
  %v519 = vpop.f32.mrb[0].mxu0
  %520 = vmatprep.mubr.bf16.mxu0 0
  %521 = vmatmul.mubr.bf16.gmra.mrb[0].mxu0 %v250
  %v522 = vpop.f32.mrb[0].mxu0
  %v523 = vadd.f32 %v102, %v522
  %v524 = vpop.f32.mrb[0].mxu0
  %v525 = vpop.f32.mrb[0].mxu0
  %v526 = vadd.f32 %v102, %v525
  %v527 = vpop.f32.mrb[0].mxu0
  %528 = vmatprep.mubr.bf16.mxu0 0
  %529 = vmatmul.mubr.bf16.gmra.mrb[0].mxu0 %v251
  %v530 = vpop.f32.mrb[0].mxu0
  %v531 = vadd.f32 %v102, %v530
  %v532 = vpop.f32.mrb[0].mxu0
  %v533 = vpop.f32.mrb[0].mxu0
  %v534 = vadd.f32 %v102, %v533
  %v535 = vpop.f32.mrb[0].mxu0
  %536 = vmatprep.mubr.bf16.mxu0 0
  %537 = vmatmul.mubr.bf16.gmra.mrb[0].mxu0 %v252
  %v538 = vpop.f32.mrb[0].mxu0
  %v539 = vadd.f32 %v102, %v538
  %v540 = vpop.f32.mrb[0].mxu0
  %v541 = vpop.f32.mrb[0].mxu0
  %v542 = vadd.f32 %v102, %v541
  %v543 = vpop.f32.mrb[0].mxu0
  %544 = vmatprep.mubr.bf16.mxu0 0
  %545 = vmatmul.mubr.bf16.gmra.mrb[0].mxu0 %v253
  %v546 = vpop.f32.mrb[0].mxu0
  %v547 = vadd.f32 %v102, %v546
  %v548 = vpop.f32.mrb[0].mxu0
  %v549 = vpop.f32.mrb[0].mxu0
  %v550 = vadd.f32 %v102, %v549
  %v551 = vpop.f32.mrb[0].mxu0
  %552 = vmatprep.mubr.bf16.mxu0 0
  %553 = vmatmul.mubr.bf16.gmra.mrb[0].mxu0 %v254
  %v554 = vpop.f32.mrb[0].mxu0
  %v555 = vadd.f32 %v102, %v554
  %v556 = vpop.f32.mrb[0].mxu0
  %v557 = vpop.f32.mrb[0].mxu0
  %v558 = vadd.f32 %v102, %v557
  %v559 = vpop.f32.mrb[0].mxu0
  %560 = vmatprep.mubr.bf16.mxu0 0
  %561 = vmatmul.mubr.bf16.gmra.mrb[0].mxu0 %v255
  %v562 = vpop.f32.mrb[0].mxu0
  %v563 = vadd.f32 %v102, %v562
  %v564 = vpop.f32.mrb[0].mxu0
  %v565 = vpop.f32.mrb[0].mxu0
  %v566 = vadd.f32 %v102, %v565
  %v567 = vpop.f32.mrb[0].mxu0
  %568 = vmatprep.mubr.bf16.mxu0 0
  %569 = vmatmul.mubr.bf16.gmra.mrb[0].mxu0 %v256
  %v570 = vpop.f32.mrb[0].mxu0
  %v571 = vadd.f32 %v102, %v570
  %v572 = vpop.f32.mrb[0].mxu0
  %v573 = vpop.f32.mrb[0].mxu0
  %v574 = vadd.f32 %v102, %v573
  %v575 = vpop.f32.mrb[0].mxu0
  %576 = vmatprep.mubr.bf16.mxu0 0
  %577 = vmatmul.mubr.bf16.gmra.mrb[0].mxu0 %v257
  %v578 = vpop.f32.mrb[0].mxu0
  %v579 = vadd.f32 %v102, %v578
  %v580 = vpop.f32.mrb[0].mxu0
  %v581 = vpop.f32.mrb[0].mxu0
  %v582 = vadd.f32 %v102, %v581
  %v583 = vpop.f32.mrb[0].mxu0
  %584 = vmatprep.mubr.bf16.mxu0 0
  %585 = vmatmul.mubr.bf16.gmra.mrb[0].mxu0 %v258
  %v586 = vpop.f32.mrb[0].mxu0
  %v587 = vadd.f32 %v102, %v586
  %v588 = vpop.f32.mrb[0].mxu0
  %v589 = vpop.f32.mrb[0].mxu0
  %v590 = vadd.f32 %v102, %v589
  %v591 = vpop.f32.mrb[0].mxu0
  %592 = vmatprep.mubr.bf16.mxu0 0
  %593 = vmatmul.mubr.bf16.gmra.mrb[0].mxu0 %v259
  %v594 = vpop.f32.mrb[0].mxu0
  %v595 = vadd.f32 %v102, %v594
  %v596 = vpop.f32.mrb[0].mxu0
  %v597 = vpop.f32.mrb[0].mxu0
  %v598 = vadd.f32 %v102, %v597
  %v599 = vpop.f32.mrb[0].mxu0
  %600 = vmatprep.mubr.bf16.mxu0 0
  %601 = vmatmul.mubr.bf16.gmra.mrb[0].mxu0 %v260
  %v602 = vpop.f32.mrb[0].mxu0
  %v603 = vadd.f32 %v102, %v602
  %v604 = vpop.f32.mrb[0].mxu0
  %v605 = vpop.f32.mrb[0].mxu0
  %v606 = vadd.f32 %v102, %v605
  %v607 = vpop.f32.mrb[0].mxu0
  %608 = vmatprep.mubr.bf16.mxu0 0
  %609 = vmatmul.mubr.bf16.gmra.mrb[0].mxu0 %v261
  %v610 = vpop.f32.mrb[0].mxu0
  %v611 = vadd.f32 %v102, %v610
  %v612 = vpop.f32.mrb[0].mxu0
  %v613 = vpop.f32.mrb[0].mxu0
  %v614 = vadd.f32 %v102, %v613
  %v615 = vpop.f32.mrb[0].mxu0
  %616 = vmatprep.mubr.bf16.mxu0 0
  %617 = vmatmul.mubr.bf16.gmra.mrb[0].mxu0 %v262
  %v618 = vpop.f32.mrb[0].mxu0
  %v619 = vadd.f32 %v102, %v618
  %v620 = vpop.f32.mrb[0].mxu0
  %v621 = vpop.f32.mrb[0].mxu0
  %v622 = vadd.f32 %v102, %v621
  %v623 = vpop.f32.mrb[0].mxu0
  %624 = vmatprep.mubr.bf16.mxu0 0
  %625 = vmatmul.mubr.bf16.gmra.mrb[0].mxu0 %v263
  %v626 = vpop.f32.mrb[0].mxu0
  %v627 = vadd.f32 %v102, %v626
  %v628 = vpop.f32.mrb[0].mxu0
  %v629 = vpop.f32.mrb[0].mxu0
  %v630 = vadd.f32 %v102, %v629
  %v631 = vpop.f32.mrb[0].mxu0
  %632 = vdwg.mxu0
  %v633 = vadd.f32 %v379, %v382
  %v634 = vadd.f32 %v633, %v387
  %v635 = vadd.f32 %v634, %v390
  %v636 = vadd.f32 %v635, %v395
  %v637 = vadd.f32 %v636, %v398
  %v638 = vadd.f32 %v637, %v403
  %v639 = vadd.f32 %v638, %v406
  %v640 = vadd.f32 %v639, %v411
  %v641 = vadd.f32 %v640, %v414
  %v642 = vadd.f32 %v641, %v419
  %v643 = vadd.f32 %v642, %v422
  %v644 = vadd.f32 %v643, %v427
  %v645 = vadd.f32 %v644, %v430
  %v646 = vadd.f32 %v645, %v435
  %v647 = vadd.f32 %v646, %v438
  %v648 = vadd.f32 %v647, %v443
  %v649 = vadd.f32 %v648, %v446
  %v650 = vadd.f32 %v649, %v451
  %v651 = vadd.f32 %v650, %v454
  %v652 = vadd.f32 %v651, %v459
  %v653 = vadd.f32 %v652, %v462
  %v654 = vadd.f32 %v653, %v467
  %v655 = vadd.f32 %v654, %v470
  %v656 = vadd.f32 %v655, %v475
  %v657 = vadd.f32 %v656, %v478
  %v658 = vadd.f32 %v657, %v483
  %v659 = vadd.f32 %v658, %v486
  %v660 = vadd.f32 %v659, %v491
  %v661 = vadd.f32 %v660, %v494
  %v662 = vadd.f32 %v661, %v499
  %v663 = vadd.f32 %v662, %v502
  %v664 = vadd.f32 %v663, %v507
  %v665 = vadd.f32 %v664, %v510
  %v666 = vadd.f32 %v665, %v515
  %v667 = vadd.f32 %v666, %v518
  %v668 = vadd.f32 %v667, %v523
  %v669 = vadd.f32 %v668, %v526
  %v670 = vadd.f32 %v669, %v531
  %v671 = vadd.f32 %v670, %v534
  %v672 = vadd.f32 %v671, %v539
  %v673 = vadd.f32 %v672, %v542
  %v674 = vadd.f32 %v673, %v547
  %v675 = vadd.f32 %v674, %v550
  %v676 = vadd.f32 %v675, %v555
  %v677 = vadd.f32 %v676, %v558
  %v678 = vadd.f32 %v677, %v563
  %v679 = vadd.f32 %v678, %v566
  %v680 = vadd.f32 %v679, %v571
  %v681 = vadd.f32 %v680, %v574
  %v682 = vadd.f32 %v681, %v579
  %v683 = vadd.f32 %v682, %v582
  %v684 = vadd.f32 %v683, %v587
  %v685 = vadd.f32 %v684, %v590
  %v686 = vadd.f32 %v685, %v595
  %v687 = vadd.f32 %v686, %v598
  %v688 = vadd.f32 %v687, %v603
  %v689 = vadd.f32 %v688, %v606
  %v690 = vadd.f32 %v689, %v611
  %v691 = vadd.f32 %v690, %v614
  %v692 = vadd.f32 %v691, %v619
  %v693 = vadd.f32 %v692, %v622
  %v694 = vadd.f32 %v693, %v627
  %v695 = vadd.f32 %v694, %v630
  %v696 = vrot.slane %v695, 4
  %v697 = vadd.f32 %v695, %v696
  %v698 = vrot.slane %v697, 2
  %v699 = vadd.f32 %v697, %v698
  %v700 = vrot.slane %v699, 1
  %v701 = vadd.f32 %v699, %v700
  %v702 = vmul.f32 %v379, %v379
  %v703 = vmul.f32 %v382, %v382
  %v704 = vmul.f32 %v387, %v387
  %v705 = vmul.f32 %v390, %v390
  %v706 = vmul.f32 %v395, %v395
  %v707 = vmul.f32 %v398, %v398
  %v708 = vmul.f32 %v403, %v403
  %v709 = vmul.f32 %v406, %v406
  %v710 = vmul.f32 %v411, %v411
  %v711 = vmul.f32 %v414, %v414
  %v712 = vmul.f32 %v419, %v419
  %v713 = vmul.f32 %v422, %v422
  %v714 = vmul.f32 %v427, %v427
  %v715 = vmul.f32 %v430, %v430
  %v716 = vmul.f32 %v435, %v435
  %v717 = vmul.f32 %v438, %v438
  %v718 = vmul.f32 %v443, %v443
  %v719 = vmul.f32 %v446, %v446
  %v720 = vmul.f32 %v451, %v451
  %v721 = vmul.f32 %v454, %v454
  %v722 = vmul.f32 %v459, %v459
  %v723 = vmul.f32 %v462, %v462
  %v724 = vmul.f32 %v467, %v467
  %v725 = vmul.f32 %v470, %v470
  %v726 = vmul.f32 %v475, %v475
  %v727 = vmul.f32 %v478, %v478
  %v728 = vmul.f32 %v483, %v483
  %v729 = vmul.f32 %v486, %v486
  %v730 = vmul.f32 %v491, %v491
  %v731 = vmul.f32 %v494, %v494
  %v732 = vmul.f32 %v499, %v499
  %v733 = vmul.f32 %v502, %v502
  %v734 = vmul.f32 %v507, %v507
  %v735 = vmul.f32 %v510, %v510
  %v736 = vmul.f32 %v515, %v515
  %v737 = vmul.f32 %v518, %v518
  %v738 = vmul.f32 %v523, %v523
  %v739 = vmul.f32 %v526, %v526
  %v740 = vmul.f32 %v531, %v531
  %v741 = vmul.f32 %v534, %v534
  %v742 = vmul.f32 %v539, %v539
  %v743 = vmul.f32 %v542, %v542
  %v744 = vmul.f32 %v547, %v547
  %v745 = vmul.f32 %v550, %v550
  %v746 = vmul.f32 %v555, %v555
  %v747 = vmul.f32 %v558, %v558
  %v748 = vmul.f32 %v563, %v563
  %v749 = vmul.f32 %v566, %v566
  %v750 = vmul.f32 %v571, %v571
  %v751 = vmul.f32 %v574, %v574
  %v752 = vmul.f32 %v579, %v579
  %v753 = vmul.f32 %v582, %v582
  %v754 = vmul.f32 %v587, %v587
  %v755 = vmul.f32 %v590, %v590
  %v756 = vmul.f32 %v595, %v595
  %v757 = vmul.f32 %v598, %v598
  %v758 = vmul.f32 %v603, %v603
  %v759 = vmul.f32 %v606, %v606
  %v760 = vmul.f32 %v611, %v611
  %v761 = vmul.f32 %v614, %v614
  %v762 = vmul.f32 %v619, %v619
  %v763 = vmul.f32 %v622, %v622
  %v764 = vmul.f32 %v627, %v627
  %v765 = vmul.f32 %v630, %v630
  %v766 = vadd.f32 %v702, %v703
  %v767 = vadd.f32 %v766, %v704
  %v768 = vadd.f32 %v767, %v705
  %v769 = vadd.f32 %v768, %v706
  %v770 = vadd.f32 %v769, %v707
  %v771 = vadd.f32 %v770, %v708
  %v772 = vadd.f32 %v771, %v709
  %v773 = vadd.f32 %v772, %v710
  %v774 = vadd.f32 %v773, %v711
  %v775 = vadd.f32 %v774, %v712
  %v776 = vadd.f32 %v775, %v713
  %v777 = vadd.f32 %v776, %v714
  %v778 = vadd.f32 %v777, %v715
  %v779 = vadd.f32 %v778, %v716
  %v780 = vadd.f32 %v779, %v717
  %v781 = vadd.f32 %v780, %v718
  %v782 = vadd.f32 %v781, %v719
  %v783 = vadd.f32 %v782, %v720
  %v784 = vadd.f32 %v783, %v721
  %v785 = vadd.f32 %v784, %v722
  %v786 = vadd.f32 %v785, %v723
  %v787 = vadd.f32 %v786, %v724
  %v788 = vadd.f32 %v787, %v725
  %v789 = vadd.f32 %v788, %v726
  %v790 = vadd.f32 %v789, %v727
  %v791 = vadd.f32 %v790, %v728
  %v792 = vadd.f32 %v791, %v729
  %v793 = vadd.f32 %v792, %v730
  %v794 = vadd.f32 %v793, %v731
  %v795 = vadd.f32 %v794, %v732
  %v796 = vadd.f32 %v795, %v733
  %v797 = vadd.f32 %v796, %v734
  %v798 = vadd.f32 %v797, %v735
  %v799 = vadd.f32 %v798, %v736
  %v800 = vadd.f32 %v799, %v737
  %v801 = vadd.f32 %v800, %v738
  %v802 = vadd.f32 %v801, %v739
  %v803 = vadd.f32 %v802, %v740
  %v804 = vadd.f32 %v803, %v741
  %v805 = vadd.f32 %v804, %v742
  %v806 = vadd.f32 %v805, %v743
  %v807 = vadd.f32 %v806, %v744
  %v808 = vadd.f32 %v807, %v745
  %v809 = vadd.f32 %v808, %v746
  %v810 = vadd.f32 %v809, %v747
  %v811 = vadd.f32 %v810, %v748
  %v812 = vadd.f32 %v811, %v749
  %v813 = vadd.f32 %v812, %v750
  %v814 = vadd.f32 %v813, %v751
  %v815 = vadd.f32 %v814, %v752
  %v816 = vadd.f32 %v815, %v753
  %v817 = vadd.f32 %v816, %v754
  %v818 = vadd.f32 %v817, %v755
  %v819 = vadd.f32 %v818, %v756
  %v820 = vadd.f32 %v819, %v757
  %v821 = vadd.f32 %v820, %v758
  %v822 = vadd.f32 %v821, %v759
  %v823 = vadd.f32 %v822, %v760
  %v824 = vadd.f32 %v823, %v761
  %v825 = vadd.f32 %v824, %v762
  %v826 = vadd.f32 %v825, %v763
  %v827 = vadd.f32 %v826, %v764
  %v828 = vadd.f32 %v827, %v765
  %v829 = vrot.slane %v828, 4
  %v830 = vadd.f32 %v828, %v829
  %v831 = vrot.slane %v830, 2
  %v832 = vadd.f32 %v830, %v831
  %v833 = vrot.slane %v832, 1
  %v834 = vadd.f32 %v832, %v833
  %vm835 = vcmask 1040384
  %v836 = vsel %vm835, %v701, %v834
  %vm837 = vcmask 1041408
  %v838 = vsel %vm837, %v836, 0.0
  %839 = vst [vmem:[%s4] sm:$0xff] %v838
  %v840 = vpack.c.bf16 %v382, %v379
  %v841 = vpack.c.bf16 %v390, %v387
  %v842 = vpack.c.bf16 %v398, %v395
  %v843 = vpack.c.bf16 %v406, %v403
  %v844 = vpack.c.bf16 %v414, %v411
  %v845 = vpack.c.bf16 %v422, %v419
  %v846 = vpack.c.bf16 %v430, %v427
  %v847 = vpack.c.bf16 %v438, %v435
  %v848 = vpack.c.bf16 %v446, %v443
  %v849 = vpack.c.bf16 %v454, %v451
  %v850 = vpack.c.bf16 %v462, %v459
  %v851 = vpack.c.bf16 %v470, %v467
  %v852 = vpack.c.bf16 %v478, %v475
  %v853 = vpack.c.bf16 %v486, %v483
  %v854 = vpack.c.bf16 %v494, %v491
  %v855 = vpack.c.bf16 %v502, %v499
  %v856 = vpack.c.bf16 %v510, %v507
  %v857 = vpack.c.bf16 %v518, %v515
  %v858 = vpack.c.bf16 %v526, %v523
  %v859 = vpack.c.bf16 %v534, %v531
  %v860 = vpack.c.bf16 %v542, %v539
  %v861 = vpack.c.bf16 %v550, %v547
  %v862 = vpack.c.bf16 %v558, %v555
  %v863 = vpack.c.bf16 %v566, %v563
  %v864 = vpack.c.bf16 %v574, %v571
  %v865 = vpack.c.bf16 %v582, %v579
  %v866 = vpack.c.bf16 %v590, %v587
  %v867 = vpack.c.bf16 %v598, %v595
  %v868 = vpack.c.bf16 %v606, %v603
  %v869 = vpack.c.bf16 %v614, %v611
  %v870 = vpack.c.bf16 %v622, %v619
  %v871 = vpack.c.bf16 %v630, %v627
  %v904 = vunpack.c.l.b16 %v840
  %v905 = vunpack.c.h.b16 %v840
  %v906 = vunpack.c.l.b16 %v841
  %v907 = vunpack.c.h.b16 %v841
  %v908 = vunpack.c.l.b16 %v842
  %v909 = vunpack.c.h.b16 %v842
  %v910 = vunpack.c.l.b16 %v843
  %v911 = vunpack.c.h.b16 %v843
  %v912 = vunpack.c.l.b16 %v844
  %v913 = vunpack.c.h.b16 %v844
  %v914 = vunpack.c.l.b16 %v845
  %v915 = vunpack.c.h.b16 %v845
  %v916 = vunpack.c.l.b16 %v846
  %v917 = vunpack.c.h.b16 %v846
  %v918 = vunpack.c.l.b16 %v847
  %v919 = vunpack.c.h.b16 %v847
  %v920 = vunpack.c.l.b16 %v848
  %v921 = vunpack.c.h.b16 %v848
  %v922 = vunpack.c.l.b16 %v849
  %v923 = vunpack.c.h.b16 %v849
  %v924 = vunpack.c.l.b16 %v850
  %v925 = vunpack.c.h.b16 %v850
  %v926 = vunpack.c.l.b16 %v851
  %v927 = vunpack.c.h.b16 %v851
  %v928 = vunpack.c.l.b16 %v852
  %v929 = vunpack.c.h.b16 %v852
  %v930 = vunpack.c.l.b16 %v853
  %v931 = vunpack.c.h.b16 %v853
  %v932 = vunpack.c.l.b16 %v854
  %v933 = vunpack.c.h.b16 %v854
  %v934 = vunpack.c.l.b16 %v855
  %v935 = vunpack.c.h.b16 %v855
  %v936 = vunpack.c.l.b16 %v856
  %v937 = vunpack.c.h.b16 %v856
  %v938 = vunpack.c.l.b16 %v857
  %v939 = vunpack.c.h.b16 %v857
  %v940 = vunpack.c.l.b16 %v858
  %v941 = vunpack.c.h.b16 %v858
  %v942 = vunpack.c.l.b16 %v859
  %v943 = vunpack.c.h.b16 %v859
  %v944 = vunpack.c.l.b16 %v860
  %v945 = vunpack.c.h.b16 %v860
  %v946 = vunpack.c.l.b16 %v861
  %v947 = vunpack.c.h.b16 %v861
  %v948 = vunpack.c.l.b16 %v862
  %v949 = vunpack.c.h.b16 %v862
  %v950 = vunpack.c.l.b16 %v863
  %v951 = vunpack.c.h.b16 %v863
  %v952 = vunpack.c.l.b16 %v864
  %v953 = vunpack.c.h.b16 %v864
  %v954 = vunpack.c.l.b16 %v865
  %v955 = vunpack.c.h.b16 %v865
  %v956 = vunpack.c.l.b16 %v866
  %v957 = vunpack.c.h.b16 %v866
  %v958 = vunpack.c.l.b16 %v867
  %v959 = vunpack.c.h.b16 %v867
  %v960 = vunpack.c.l.b16 %v868
  %v961 = vunpack.c.h.b16 %v868
  %v962 = vunpack.c.l.b16 %v869
  %v963 = vunpack.c.h.b16 %v869
  %v964 = vunpack.c.l.b16 %v870
  %v965 = vunpack.c.h.b16 %v870
  %v966 = vunpack.c.l.b16 %v871
  %v967 = vunpack.c.h.b16 %v871
  %v968 = vpack.c.b16 %v904, %v904
  %v969 = vpack.c.b16 %v905, %v905
  %v970 = vpack.c.b16 %v906, %v906
  %v971 = vpack.c.b16 %v907, %v907
  %v972 = vpack.c.b16 %v908, %v908
  %v973 = vpack.c.b16 %v909, %v909
  %v974 = vpack.c.b16 %v910, %v910
  %v975 = vpack.c.b16 %v911, %v911
  %v976 = vpack.c.b16 %v912, %v912
  %v977 = vpack.c.b16 %v913, %v913
  %v978 = vpack.c.b16 %v914, %v914
  %v979 = vpack.c.b16 %v915, %v915
  %v980 = vpack.c.b16 %v916, %v916
  %v981 = vpack.c.b16 %v917, %v917
  %v982 = vpack.c.b16 %v918, %v918
  %v983 = vpack.c.b16 %v919, %v919
  %v984 = vpack.c.b16 %v920, %v920
  %v985 = vpack.c.b16 %v921, %v921
  %v986 = vpack.c.b16 %v922, %v922
  %v987 = vpack.c.b16 %v923, %v923
  %v988 = vpack.c.b16 %v924, %v924
  %v989 = vpack.c.b16 %v925, %v925
  %v990 = vpack.c.b16 %v926, %v926
  %v991 = vpack.c.b16 %v927, %v927
  %v992 = vpack.c.b16 %v928, %v928
  %v993 = vpack.c.b16 %v929, %v929
  %v994 = vpack.c.b16 %v930, %v930
  %v995 = vpack.c.b16 %v931, %v931
  %v996 = vpack.c.b16 %v932, %v932
  %v997 = vpack.c.b16 %v933, %v933
  %v998 = vpack.c.b16 %v934, %v934
  %v999 = vpack.c.b16 %v935, %v935
  %v1000 = vpack.c.b16 %v936, %v936
  %v1001 = vpack.c.b16 %v937, %v937
  %v1002 = vpack.c.b16 %v938, %v938
  %v1003 = vpack.c.b16 %v939, %v939
  %v1004 = vpack.c.b16 %v940, %v940
  %v1005 = vpack.c.b16 %v941, %v941
  %v1006 = vpack.c.b16 %v942, %v942
  %v1007 = vpack.c.b16 %v943, %v943
  %v1008 = vpack.c.b16 %v944, %v944
  %v1009 = vpack.c.b16 %v945, %v945
  %v1010 = vpack.c.b16 %v946, %v946
  %v1011 = vpack.c.b16 %v947, %v947
  %v1012 = vpack.c.b16 %v948, %v948
  %v1013 = vpack.c.b16 %v949, %v949
  %v1014 = vpack.c.b16 %v950, %v950
  %v1015 = vpack.c.b16 %v951, %v951
  %v1016 = vpack.c.b16 %v952, %v952
  %v1017 = vpack.c.b16 %v953, %v953
  %v1018 = vpack.c.b16 %v954, %v954
  %v1019 = vpack.c.b16 %v955, %v955
  %v1020 = vpack.c.b16 %v956, %v956
  %v1021 = vpack.c.b16 %v957, %v957
  %v1022 = vpack.c.b16 %v958, %v958
  %v1023 = vpack.c.b16 %v959, %v959
  %v1024 = vpack.c.b16 %v960, %v960
  %v1025 = vpack.c.b16 %v961, %v961
  %v1026 = vpack.c.b16 %v962, %v962
  %v1027 = vpack.c.b16 %v963, %v963
  %v1028 = vpack.c.b16 %v964, %v964
  %v1029 = vpack.c.b16 %v965, %v965
  %v1030 = vpack.c.b16 %v966, %v966
  %v1031 = vpack.c.b16 %v967, %v967
  %1096 = vst [vmem:[%s3] sm:$0xf] %v968
  %1097 = vst [vmem:[%s3 + $0x4] sm:$0xf] %v969
  %1098 = vst [vmem:[%s3 + $0x8] sm:$0xf] %v970
  %1099 = vst [vmem:[%s3 + $0xc] sm:$0xf] %v971
  %1100 = vst [vmem:[%s3 + $0x10] sm:$0xf] %v972
  %1101 = vst [vmem:[%s3 + $0x14] sm:$0xf] %v973
  %1102 = vst [vmem:[%s3 + $0x18] sm:$0xf] %v974
  %1103 = vst [vmem:[%s3 + $0x1c] sm:$0xf] %v975
  %1104 = vst [vmem:[%s3 + $0x20] sm:$0xf] %v976
  %1105 = vst [vmem:[%s3 + $0x24] sm:$0xf] %v977
  %1106 = vst [vmem:[%s3 + $0x28] sm:$0xf] %v978
  %1107 = vst [vmem:[%s3 + $0x2c] sm:$0xf] %v979
  %1108 = vst [vmem:[%s3 + $0x30] sm:$0xf] %v980
  %1109 = vst [vmem:[%s3 + $0x34] sm:$0xf] %v981
  %1110 = vst [vmem:[%s3 + $0x38] sm:$0xf] %v982
  %1111 = vst [vmem:[%s3 + $0x3c] sm:$0xf] %v983
  %1112 = vst [vmem:[%s3 + $0x40] sm:$0xf] %v984
  %1113 = vst [vmem:[%s3 + $0x44] sm:$0xf] %v985
  %1114 = vst [vmem:[%s3 + $0x48] sm:$0xf] %v986
  %1115 = vst [vmem:[%s3 + $0x4c] sm:$0xf] %v987
  %1116 = vst [vmem:[%s3 + $0x50] sm:$0xf] %v988
  %1117 = vst [vmem:[%s3 + $0x54] sm:$0xf] %v989
  %1118 = vst [vmem:[%s3 + $0x58] sm:$0xf] %v990
  %1119 = vst [vmem:[%s3 + $0x5c] sm:$0xf] %v991
  %1120 = vst [vmem:[%s3 + $0x60] sm:$0xf] %v992
  %1121 = vst [vmem:[%s3 + $0x64] sm:$0xf] %v993
  %1122 = vst [vmem:[%s3 + $0x68] sm:$0xf] %v994
  %1123 = vst [vmem:[%s3 + $0x6c] sm:$0xf] %v995
  %1124 = vst [vmem:[%s3 + $0x70] sm:$0xf] %v996
  %1125 = vst [vmem:[%s3 + $0x74] sm:$0xf] %v997
  %1126 = vst [vmem:[%s3 + $0x78] sm:$0xf] %v998
  %1127 = vst [vmem:[%s3 + $0x7c] sm:$0xf] %v999
  %1128 = vst [vmem:[%s3 + $0x80] sm:$0xf] %v1000
  %1129 = vst [vmem:[%s3 + $0x84] sm:$0xf] %v1001
  %1130 = vst [vmem:[%s3 + $0x88] sm:$0xf] %v1002
  %1131 = vst [vmem:[%s3 + $0x8c] sm:$0xf] %v1003
  %1132 = vst [vmem:[%s3 + $0x90] sm:$0xf] %v1004
  %1133 = vst [vmem:[%s3 + $0x94] sm:$0xf] %v1005
  %1134 = vst [vmem:[%s3 + $0x98] sm:$0xf] %v1006
  %1135 = vst [vmem:[%s3 + $0x9c] sm:$0xf] %v1007
  %1136 = vst [vmem:[%s3 + $0xa0] sm:$0xf] %v1008
  %1137 = vst [vmem:[%s3 + $0xa4] sm:$0xf] %v1009
  %1138 = vst [vmem:[%s3 + $0xa8] sm:$0xf] %v1010
  %1139 = vst [vmem:[%s3 + $0xac] sm:$0xf] %v1011
  %1140 = vst [vmem:[%s3 + $0xb0] sm:$0xf] %v1012
  %1141 = vst [vmem:[%s3 + $0xb4] sm:$0xf] %v1013
  %1142 = vst [vmem:[%s3 + $0xb8] sm:$0xf] %v1014
  %1143 = vst [vmem:[%s3 + $0xbc] sm:$0xf] %v1015
  %1144 = vst [vmem:[%s3 + $0xc0] sm:$0xf] %v1016
  %1145 = vst [vmem:[%s3 + $0xc4] sm:$0xf] %v1017
  %1146 = vst [vmem:[%s3 + $0xc8] sm:$0xf] %v1018
  %1147 = vst [vmem:[%s3 + $0xcc] sm:$0xf] %v1019
  %1148 = vst [vmem:[%s3 + $0xd0] sm:$0xf] %v1020
  %1149 = vst [vmem:[%s3 + $0xd4] sm:$0xf] %v1021
  %1150 = vst [vmem:[%s3 + $0xd8] sm:$0xf] %v1022
  %1151 = vst [vmem:[%s3 + $0xdc] sm:$0xf] %v1023
  %1152 = vst [vmem:[%s3 + $0xe0] sm:$0xf] %v1024
  %1153 = vst [vmem:[%s3 + $0xe4] sm:$0xf] %v1025
  %1154 = vst [vmem:[%s3 + $0xe8] sm:$0xf] %v1026
  %1155 = vst [vmem:[%s3 + $0xec] sm:$0xf] %v1027
  %1156 = vst [vmem:[%s3 + $0xf0] sm:$0xf] %v1028
  %1157 = vst [vmem:[%s3 + $0xf4] sm:$0xf] %v1029
  %1158 = vst [vmem:[%s3 + $0xf8] sm:$0xf] %v1030
  %1159 = vst [vmem:[%s3 + $0xfc] sm:$0xf] %v1031
  // Predicated region
  $region14: #{mbe_block_forward.9} parent=0 // pred_check
    _
  $region15: #{mbe_block_forward.9} parent=0 // pred_check_branch
    %1161 = sbr.rel (0) target = $region17
  $region16: #{mbe_block_forward.9} parent=0 // pred_region
    _
  $region17: #{mbe_block_forward.9} parent=0 // pred_fallthru
    _
  // Predicated region
  $region18: #{mbe_block_forward.9} parent=0 // pred_check
    _
  $region19: #{mbe_block_forward.9} parent=0 // pred_check_branch
    %1163 = sbr.rel (0) target = $region21
  $region20: #{mbe_block_forward.9} parent=0 // pred_region
    _
  $region21: #{mbe_block_forward.9} parent=0 // pred_fallthru
    _
  // Predicated region
  $region22: #{mbe_block_forward.9} parent=0 // pred_check
    _
  $region23: #{mbe_block_forward.9} parent=0 // pred_check_branch
    %1165 = sbr.rel (0) target = $region25
  $region24: #{mbe_block_forward.9} parent=0 // pred_region
    _
  $region25: #{mbe_block_forward.9} parent=0 // pred_fallthru
    _
  // Predicated region
  $region26: #{mbe_block_forward.9} parent=0 // pred_check
    _
  $region27: #{mbe_block_forward.9} parent=0 // pred_check_branch
    %1167 = sbr.rel (0) target = $region29
  $region28: #{mbe_block_forward.9} parent=0 // pred_region
    _
  $region29: #{mbe_block_forward.9} parent=0 // pred_fallthru
    _

</llo_original>
